<compile_context>
chip_gen: v5e
topology: v5e:2x2
jax: 0.10.0
libtpu: 0.0.40
codegen_flags: <defaults>
</compile_context>

<pallas_src>
import functools

import jax
import jax.numpy as jnp
from jax import lax
from jax.experimental import pallas as pl
from jax.experimental.pallas import tpu as pltpu


def _round_up(x, m):
    return (x + m - 1) // m * m


def _flash_sa_kernel(xq_ref, xk_ref, mqk_ref, uk_ref, wvt_ref, bv_ref,
                     gamma_ref, o_ref, m_scr, l_scr, acc_scr, xqm_scr,
                     *, block_n, n_valid, n_padded):
    """One grid step = one (batch, query-tile, kv-tile) triple.

    xq_ref:    (1, block_n, Cp) f32  query-side x tile (channels-last, padded)
    xk_ref:    (1, block_n, Cp) f32  key/value-side x tile
    mqk_ref:   (Cp, Cp)        bf16  Wq^T @ Wk   (folded Q/K projection)
    uk_ref:    (1, Cp)         f32   Wk^T @ bq   (key-side bias term)
    wvt_ref:   (Cp, Cp)        bf16  Wv^T        (value proj, applied at finalize)
    bv_ref:    (1, Cp)         f32
    gamma_ref: (1, 1)          f32
    o_ref:     (1, block_n, Cp) f32
    scratch:   m/l (block_n, 1) f32, acc (block_n, Cp) f32, xqm (block_n, Cp) bf16
    """
    ki = pl.program_id(2)
    last_k = pl.num_programs(2) - 1

    @pl.when(ki == 0)
    def _init():
        m_scr[...] = jnp.full(m_scr.shape, -jnp.inf, jnp.float32)
        l_scr[...] = jnp.zeros(l_scr.shape, jnp.float32)
        acc_scr[...] = jnp.zeros(acc_scr.shape, jnp.float32)
        # Query-side projection once per query tile.  The key-side bias row is
        # added here so the per-step energy matmul needs no extra term:
        #   s[i, j] = sum_c (x_i^T M + uk)[c] * x_j[c] = x_i^T M x_j + uk . x_j
        xq_b = xq_ref[0].astype(jnp.bfloat16)
        xqm = jnp.dot(xq_b, mqk_ref[...], preferred_element_type=jnp.float32)
        xqm_scr[...] = (xqm + uk_ref[...]).astype(jnp.bfloat16)

    xk_b = xk_ref[0].astype(jnp.bfloat16)                      # (block_n, Cp)

    # Energy tile (block_n, block_n): contraction over channels on the MXU,
    # RHS transposed natively via dot_general (no materialized .T).
    s = lax.dot_general(xqm_scr[...], xk_b,
                        dimension_numbers=(((1,), (1,)), ((), ())),
                        preferred_element_type=jnp.float32)

    if n_valid != n_padded:
        # Mask zero-padded key positions (branch only emitted when padding exists).
        key_idx = ki * block_n + lax.broadcasted_iota(jnp.int32, (1, block_n), 1)
        s = jnp.where(key_idx < n_valid, s, -1e30)

    # Online softmax, all stats in f32.
    m_prev = m_scr[...]
    m_new = jnp.maximum(m_prev, jnp.max(s, axis=-1, keepdims=True))
    alpha = jnp.exp(m_prev - m_new)
    p = jnp.exp(s - m_new)
    l_scr[...] = alpha * l_scr[...] + jnp.sum(p, axis=-1, keepdims=True)
    acc_scr[...] = alpha * acc_scr[...] + jnp.dot(
        p.astype(jnp.bfloat16), xk_b, preferred_element_type=jnp.float32)
    m_scr[...] = m_new

    @pl.when(ki == last_k)
    def _finalize():
        inv_l = pl.reciprocal(l_scr[...], approx=True)         # EUP slot
        ctx = (acc_scr[...] * inv_l).astype(jnp.bfloat16)      # attn-weighted avg of x
        # Value 1x1x1 conv applied once per query tile (moved out of kv loop).
        vout = jnp.dot(ctx, wvt_ref[...],
                       preferred_element_type=jnp.float32) + bv_ref[...]
        o_ref[0] = gamma_ref[...] * vout + xq_ref[0]


def self_attention_3d(x, wq, bq, wk, bk, wv, bv, gamma, *, block_n=256):
    """x: (B, C, D, H, W) f32.  Weights in PyTorch Conv3d convention:
    wq/wk: (Ci, C, 1, 1, 1), wv: (C, C, 1, 1, 1), biases (Ci,)/(C,), gamma (1,).

    Note: bk only contributes per-query-row constants to the energy
    (bk^T Wq x_i + bq^T bk); softmax over the key axis ignores those, so bk is
    accepted for API parity but not used."""
    B, C, D, H, W = x.shape
    N = D * H * W
    Ci = wq.shape[0]

    Cp = _round_up(C, 128)                        # lane-dense channel axis
    block_n = min(block_n, _round_up(N, 128))     # clamp tile to (padded) N
    n_pad = _round_up(N, block_n)
    n_tiles = n_pad // block_n

    # NCDHW -> (B, N, C) channels-last, zero-pad spatial + channel axes.
    x_nc = jnp.transpose(x, (0, 2, 3, 4, 1)).reshape(B, N, C).astype(jnp.float32)
    x_p = jnp.pad(x_nc, ((0, 0), (0, n_pad - N), (0, Cp - C)))

    wq2 = wq.reshape(Ci, C).astype(jnp.float32)
    wk2 = wk.reshape(Ci, C).astype(jnp.float32)
    wv2 = wv.reshape(C, C).astype(jnp.float32)

    # Folded Q.K:  energy[i,j] = x_i^T (Wq^T Wk) x_j + (Wk^T bq) . x_j
    mqk = jnp.pad(wq2.T @ wk2, ((0, Cp - C), (0, Cp - C))).astype(jnp.bfloat16)
    uk = jnp.pad((wk2.T @ bq.astype(jnp.float32))[None, :],
                 ((0, 0), (0, Cp - C))).astype(jnp.float32)
    wvt = jnp.pad(wv2.T, ((0, Cp - C), (0, Cp - C))).astype(jnp.bfloat16)
    bvp = jnp.pad(bv[None, :].astype(jnp.float32), ((0, 0), (0, Cp - C)))
    gamma_r = gamma.reshape(1, 1).astype(jnp.float32)

    kernel = functools.partial(_flash_sa_kernel, block_n=block_n,
                               n_valid=N, n_padded=n_pad)

    grid_spec = pltpu.PrefetchScalarGridSpec(
        num_scalar_prefetch=0,
        grid=(B, n_tiles, n_tiles),
        in_specs=[
            pl.BlockSpec((1, block_n, Cp), lambda b, qi, ki: (b, qi, 0)),  # x (q side)
            pl.BlockSpec((1, block_n, Cp), lambda b, qi, ki: (b, ki, 0)),  # x (k/v side)
            pl.BlockSpec((Cp, Cp), lambda b, qi, ki: (0, 0)),              # mqk
            pl.BlockSpec((1, Cp), lambda b, qi, ki: (0, 0)),               # uk
            pl.BlockSpec((Cp, Cp), lambda b, qi, ki: (0, 0)),              # wvt
            pl.BlockSpec((1, Cp), lambda b, qi, ki: (0, 0)),               # bv
            pl.BlockSpec((1, 1), lambda b, qi, ki: (0, 0)),                # gamma
        ],
        out_specs=pl.BlockSpec((1, block_n, Cp), lambda b, qi, ki: (b, qi, 0)),
        scratch_shapes=[
            pltpu.VMEM((block_n, 1), jnp.float32),      # running max m
            pltpu.VMEM((block_n, 1), jnp.float32),      # running denom l
            pltpu.VMEM((block_n, Cp), jnp.float32),     # acc (weighted avg of x)
            pltpu.VMEM((block_n, Cp), jnp.bfloat16),    # projected query tile
        ],
    )

    out_p = pl.pallas_call(
        kernel,
        out_shape=jax.ShapeDtypeStruct((B, n_pad, Cp), jnp.float32),
        grid_spec=grid_spec,
        compiler_params=pltpu.CompilerParams(
            dimension_semantics=("parallel", "parallel", "arbitrary"),
            vmem_limit_bytes=32 * 1024 * 1024),
    )(x_p, x_p, mqk, uk, wvt, bvp, gamma_r)

    out = out_p[:, :N, :C].reshape(B, D, H, W, C)
    return jnp.transpose(out, (0, 4, 1, 2, 3)).astype(x.dtype)


def _reference(x, wq, bq, wk, bk, wv, bv, gamma):
    """Pure-JAX f32 reference mirroring the PyTorch forward exactly."""
    B, C, D, H, W = x.shape
    N = D * H * W
    Ci = wq.shape[0]
    xf = x.reshape(B, C, N)                                   # (B, C, N)
    q = jnp.einsum("oc,bcn->bon", wq.reshape(Ci, C), xf) + bq[None, :, None]
    k = jnp.einsum("oc,bcn->bon", wk.reshape(Ci, C), xf) + bk[None, :, None]
    v = jnp.einsum("oc,bcn->bon", wv.reshape(C, C), xf) + bv[None, :, None]
    energy = jnp.einsum("bci,bcj->bij", q, k)                 # (B, N, N)
    attn = jax.nn.softmax(energy, axis=-1)
    out = jnp.einsum("bcj,bij->bci", v, attn)                 # (B, C, N)
    out = out.reshape(B, C, D, H, W)
    return gamma.reshape(()) * out + x


if __name__ == "__main__":
    key = jax.random.PRNGKey(0)
    # N = 6*8*8 = 384 is deliberately not a multiple of the 256 tile so the
    # padded-key masking and multi-tile online softmax are both exercised.
    B, C, D, H, W = 2, 16, 6, 8, 8
    Ci = max(1, C // 8)

    k_x, k_wq, k_bq, k_wk, k_bk, k_wv, k_bv = jax.random.split(key, 7)
    x = jax.random.normal(k_x, (B, C, D, H, W), jnp.float32)

    wq = jax.random.normal(k_wq, (Ci, C, 1, 1, 1), jnp.float32) * 0.1
    bq = jax.random.normal(k_bq, (Ci,), jnp.float32) * 0.1
    wk = jax.random.normal(k_wk, (Ci, C, 1, 1, 1), jnp.float32) * 0.1
    bk = jax.random.normal(k_bk, (Ci,), jnp.float32) * 0.1
    wv = jax.random.normal(k_wv, (C, C, 1, 1, 1), jnp.float32) * 0.1
    bv = jax.random.normal(k_bv, (C,), jnp.float32) * 0.1
    # nn.Parameter(torch.zeros(1)) would make the attention branch invisible;
    # use a nonzero gamma so the kernel path is actually exercised.
    gamma = jnp.array([0.5], jnp.float32)

    out = self_attention_3d(x, wq, bq, wk, bk, wv, bv, gamma)
    out = jax.block_until_ready(out)

    ref = _reference(x, wq, bq, wk, bk, wv, bv, gamma)
    assert out.shape == (B, C, D, H, W)
    # bf16 MXU inputs + approx reciprocal -> compare at a correspondingly
    # looser tolerance than the pure-f32 reference.
    max_err = float(jnp.max(jnp.abs(out - ref)))
    assert jnp.allclose(out, ref, atol=2e-2, rtol=2e-2), max_err
    print("KERNEL_OK")
</pallas_src>

<mosaic_0001>
module attributes {stable_mosaic.version = 11 : i64} {
  func.func @_flash_sa_kernel(%arg0: i32, %arg1: i32, %arg2: i32, %arg3: memref<1x256x128xf32, #tpu.memory_space<vmem>>, %arg4: memref<1x256x128xf32, #tpu.memory_space<vmem>>, %arg5: memref<128x128xbf16, #tpu.memory_space<vmem>>, %arg6: memref<1x128xf32, #tpu.memory_space<vmem>>, %arg7: memref<128x128xbf16, #tpu.memory_space<vmem>>, %arg8: memref<1x128xf32, #tpu.memory_space<vmem>>, %arg9: memref<1x1xf32, #tpu.memory_space<vmem>>, %arg10: memref<1x256x128xf32, #tpu.memory_space<vmem>>, %arg11: memref<256x1xf32, #tpu.memory_space<vmem>>, %arg12: memref<256x1xf32, #tpu.memory_space<vmem>>, %arg13: memref<256x128xf32, #tpu.memory_space<vmem>>, %arg14: memref<256x128xbf16, #tpu.memory_space<vmem>>) attributes {dimension_semantics = [#tpu.dimension_semantics<parallel>, #tpu.dimension_semantics<parallel>, #tpu.dimension_semantics<arbitrary>], iteration_bounds = array<i64: 2, 2, 2>, scalar_prefetch = 0 : i64, scratch_operands = 4 : i64, tpu.core_type = #tpu.core_type<tc>, window_params = [{transform_indices = @transform_0, window_bounds = array<i64: 1, 256, 128>}, {transform_indices = @transform_1, window_bounds = array<i64: 1, 256, 128>}, {pipeline_mode = #tpu.pipeline_mode<synchronous>, transform_indices = @transform_2, window_bounds = array<i64: 128, 128>}, {pipeline_mode = #tpu.pipeline_mode<synchronous>, transform_indices = @transform_3, window_bounds = array<i64: 1, 128>}, {pipeline_mode = #tpu.pipeline_mode<synchronous>, transform_indices = @transform_4, window_bounds = array<i64: 128, 128>}, {pipeline_mode = #tpu.pipeline_mode<synchronous>, transform_indices = @transform_5, window_bounds = array<i64: 1, 128>}, {pipeline_mode = #tpu.pipeline_mode<synchronous>, transform_indices = @transform_6, window_bounds = array<i64: 1, 1>}, {transform_indices = @transform_7, window_bounds = array<i64: 1, 256, 128>}]} {
    %c0_i32 = arith.constant 0 : i32
    %0 = arith.cmpi eq, %arg2, %c0_i32 : i32
    %1 = arith.extui %0 : i1 to i32
    %c0_i32_0 = arith.constant 0 : i32
    %2 = arith.cmpi ne, %1, %c0_i32_0 : i32
    scf.if %2 {
      %cst_22 = arith.constant 0xFF800000 : f32
      %44 = vector.broadcast %cst_22 : f32 to vector<256x1xf32>
      %c0_23 = arith.constant 0 : index
      %c0_24 = arith.constant 0 : index
      %45 = vector.load %arg11[%c0_23, %c0_24] : memref<256x1xf32, #tpu.memory_space<vmem>>, vector<256x1xf32>
      tpu.vector_store %arg11[%c0_23, %c0_24], %44 {strides = array<i32>} : memref<256x1xf32, #tpu.memory_space<vmem>>, vector<256x1xf32>,
      %cst_25 = arith.constant 0.000000e+00 : f32
      %46 = vector.broadcast %cst_25 : f32 to vector<256x1xf32>
      %c0_26 = arith.constant 0 : index
      %c0_27 = arith.constant 0 : index
      %47 = vector.load %arg12[%c0_26, %c0_27] : memref<256x1xf32, #tpu.memory_space<vmem>>, vector<256x1xf32>
      tpu.vector_store %arg12[%c0_26, %c0_27], %46 {strides = array<i32>} : memref<256x1xf32, #tpu.memory_space<vmem>>, vector<256x1xf32>,
      %cst_28 = arith.constant 0.000000e+00 : f32
      %48 = vector.broadcast %cst_28 : f32 to vector<256x128xf32>
      %c0_29 = arith.constant 0 : index
      %c0_30 = arith.constant 0 : index
      %49 = vector.load %arg13[%c0_29, %c0_30] : memref<256x128xf32, #tpu.memory_space<vmem>>, vector<256x128xf32>
      tpu.vector_store %arg13[%c0_29, %c0_30], %48 {strides = array<i32>} : memref<256x128xf32, #tpu.memory_space<vmem>>, vector<256x128xf32>,
      %c0_31 = arith.constant 0 : index
      %c0_32 = arith.constant 0 : index
      %c0_33 = arith.constant 0 : index
      %50 = vector.load %arg3[%c0_31, %c0_32, %c0_33] : memref<1x256x128xf32, #tpu.memory_space<vmem>>, vector<1x256x128xf32>
      %51 = vector.shape_cast %50 : vector<1x256x128xf32> to vector<256x128xf32>
      %52 = arith.truncf %51 : vector<256x128xf32> to vector<256x128xbf16>
      %c0_34 = arith.constant 0 : index
      %c0_35 = arith.constant 0 : index
      %53 = vector.load %arg5[%c0_34, %c0_35] : memref<128x128xbf16, #tpu.memory_space<vmem>>, vector<128x128xbf16>
      %cst_36 = arith.constant dense<0.000000e+00> : vector<256x128xf32>
      %54 = tpu.matmul %52, %53, %cst_36 {dimension_numbers = #tpu.dot_dimension_numbers<[1], [0], [0], [1], [0, 0, 1, 1], [], []>} : vector<256x128xbf16>, vector<128x128xbf16>, vector<256x128xf32> -> vector<256x128xf32>
      %c0_37 = arith.constant 0 : index
      %c0_38 = arith.constant 0 : index
      %55 = vector.load %arg6[%c0_37, %c0_38] : memref<1x128xf32, #tpu.memory_space<vmem>>, vector<1x128xf32>
      %56 = vector.broadcast %55 : vector<1x128xf32> to vector<256x128xf32>
      %57 = arith.addf %54, %56 : vector<256x128xf32>
      %58 = arith.truncf %57 : vector<256x128xf32> to vector<256x128xbf16>
      %c0_39 = arith.constant 0 : index
      %c0_40 = arith.constant 0 : index
      %59 = vector.load %arg14[%c0_39, %c0_40] : memref<256x128xbf16, #tpu.memory_space<vmem>>, vector<256x128xbf16>
      tpu.vector_store %arg14[%c0_39, %c0_40], %58 {strides = array<i32>} : memref<256x128xbf16, #tpu.memory_space<vmem>>, vector<256x128xbf16>,
    } else {
    }
    %c0 = arith.constant 0 : index
    %c0_1 = arith.constant 0 : index
    %c0_2 = arith.constant 0 : index
    %3 = vector.load %arg4[%c0, %c0_1, %c0_2] : memref<1x256x128xf32, #tpu.memory_space<vmem>>, vector<1x256x128xf32>
    %4 = vector.shape_cast %3 : vector<1x256x128xf32> to vector<256x128xf32>
    %5 = arith.truncf %4 : vector<256x128xf32> to vector<256x128xbf16>
    %c0_3 = arith.constant 0 : index
    %c0_4 = arith.constant 0 : index
    %6 = vector.load %arg14[%c0_3, %c0_4] : memref<256x128xbf16, #tpu.memory_space<vmem>>, vector<256x128xbf16>
    %cst = arith.constant dense<0.000000e+00> : vector<256x256xf32>
    %7 = tpu.matmul %6, %5, %cst {dimension_numbers = #tpu.dot_dimension_numbers<[1], [1], [0], [0], [0, 0, 1, 0], [], []>} : vector<256x128xbf16>, vector<256x128xbf16>, vector<256x256xf32> -> vector<256x256xf32>
    %c256_i32 = arith.constant 256 : i32
    %8 = arith.muli %arg2, %c256_i32 : i32
    %9 = tpu.iota {dimensions = array<i32: 1>} : vector<1x256xi32>
    %10 = vector.broadcast %8 : i32 to vector<1x256xi32>
    %11 = arith.addi %10, %9 : vector<1x256xi32>
    %c384_i32 = arith.constant 384 : i32
    %12 = vector.broadcast %c384_i32 : i32 to vector<1x256xi32>
    %13 = arith.cmpi slt, %11, %12 : vector<1x256xi32>
    %cst_5 = arith.constant -1.000000e+30 : f32
    %14 = vector.shape_cast %13 : vector<1x256xi1> to vector<1x256xi1>
    %15 = vector.broadcast %14 : vector<1x256xi1> to vector<256x256xi1>
    %16 = vector.broadcast %cst_5 : f32 to vector<256x256xf32>
    %17 = arith.select %15, %7, %16 : vector<256x256xi1>, vector<256x256xf32>
    %c0_6 = arith.constant 0 : index
    %c0_7 = arith.constant 0 : index
    %18 = vector.load %arg11[%c0_6, %c0_7] : memref<256x1xf32, #tpu.memory_space<vmem>>, vector<256x1xf32>
    %cst_8 = arith.constant dense<0xFF800000> : vector<256xf32>
    %19 = vector.multi_reduction <maximumf>, %17, %cst_8 [1] : vector<256x256xf32> to vector<256xf32>
    %20 = vector.shape_cast %19 : vector<256xf32> to vector<256x1xf32>
    %21 = arith.maximumf %18, %20 : vector<256x1xf32>
    %22 = arith.subf %18, %21 : vector<256x1xf32>
    %23 = math.exp %22 : vector<256x1xf32>
    %24 = vector.broadcast %21 : vector<256x1xf32> to vector<256x256xf32>
    %25 = arith.subf %17, %24 : vector<256x256xf32>
    %26 = math.exp %25 : vector<256x256xf32>
    %c0_9 = arith.constant 0 : index
    %c0_10 = arith.constant 0 : index
    %27 = vector.load %arg12[%c0_9, %c0_10] : memref<256x1xf32, #tpu.memory_space<vmem>>, vector<256x1xf32>
    %28 = arith.mulf %23, %27 : vector<256x1xf32>
    %cst_11 = arith.constant dense<0.000000e+00> : vector<256xf32>
    %29 = vector.multi_reduction <add>, %26, %cst_11 [1] : vector<256x256xf32> to vector<256xf32>
    %30 = vector.shape_cast %29 : vector<256xf32> to vector<256x1xf32>
    %31 = arith.addf %28, %30 : vector<256x1xf32>
    %c0_12 = arith.constant 0 : index
    %c0_13 = arith.constant 0 : index
    %32 = vector.load %arg12[%c0_12, %c0_13] : memref<256x1xf32, #tpu.memory_space<vmem>>, vector<256x1xf32>
    tpu.vector_store %arg12[%c0_12, %c0_13], %31 {strides = array<i32>} : memref<256x1xf32, #tpu.memory_space<vmem>>, vector<256x1xf32>,
    %c0_14 = arith.constant 0 : index
    %c0_15 = arith.constant 0 : index
    %33 = vector.load %arg13[%c0_14, %c0_15] : memref<256x128xf32, #tpu.memory_space<vmem>>, vector<256x128xf32>
    %34 = vector.broadcast %23 : vector<256x1xf32> to vector<256x128xf32>
    %35 = arith.mulf %34, %33 : vector<256x128xf32>
    %36 = arith.truncf %26 : vector<256x256xf32> to vector<256x256xbf16>
    %cst_16 = arith.constant dense<0.000000e+00> : vector<256x128xf32>
    %37 = tpu.matmul %36, %5, %cst_16 {dimension_numbers = #tpu.dot_dimension_numbers<[1], [0], [0], [1], [0, 0, 1, 1], [], []>} : vector<256x256xbf16>, vector<256x128xbf16>, vector<256x128xf32> -> vector<256x128xf32>
    %38 = arith.addf %35, %37 : vector<256x128xf32>
    %c0_17 = arith.constant 0 : index
    %c0_18 = arith.constant 0 : index
    %39 = vector.load %arg13[%c0_17, %c0_18] : memref<256x128xf32, #tpu.memory_space<vmem>>, vector<256x128xf32>
    tpu.vector_store %arg13[%c0_17, %c0_18], %38 {strides = array<i32>} : memref<256x128xf32, #tpu.memory_space<vmem>>, vector<256x128xf32>,
    %c0_19 = arith.constant 0 : index
    %c0_20 = arith.constant 0 : index
    %40 = vector.load %arg11[%c0_19, %c0_20] : memref<256x1xf32, #tpu.memory_space<vmem>>, vector<256x1xf32>
    tpu.vector_store %arg11[%c0_19, %c0_20], %21 {strides = array<i32>} : memref<256x1xf32, #tpu.memory_space<vmem>>, vector<256x1xf32>,
    %c1_i32 = arith.constant 1 : i32
    %41 = arith.cmpi eq, %arg2, %c1_i32 : i32
    %42 = arith.extui %41 : i1 to i32
    %c0_i32_21 = arith.constant 0 : i32
    %43 = arith.cmpi ne, %42, %c0_i32_21 : i32
    scf.if %43 {
      %c0_22 = arith.constant 0 : index
      %c0_23 = arith.constant 0 : index
      %44 = vector.load %arg12[%c0_22, %c0_23] : memref<256x1xf32, #tpu.memory_space<vmem>>, vector<256x1xf32>
      %45 = tpu.reciprocal %44 {approx = true} : vector<256x1xf32> -> vector<256x1xf32>
      %c0_24 = arith.constant 0 : index
      %c0_25 = arith.constant 0 : index
      %46 = vector.load %arg13[%c0_24, %c0_25] : memref<256x128xf32, #tpu.memory_space<vmem>>, vector<256x128xf32>
      %47 = vector.broadcast %45 : vector<256x1xf32> to vector<256x128xf32>
      %48 = arith.mulf %46, %47 : vector<256x128xf32>
      %49 = arith.truncf %48 : vector<256x128xf32> to vector<256x128xbf16>
      %c0_26 = arith.constant 0 : index
      %c0_27 = arith.constant 0 : index
      %50 = vector.load %arg7[%c0_26, %c0_27] : memref<128x128xbf16, #tpu.memory_space<vmem>>, vector<128x128xbf16>
      %cst_28 = arith.constant dense<0.000000e+00> : vector<256x128xf32>
      %51 = tpu.matmul %49, %50, %cst_28 {dimension_numbers = #tpu.dot_dimension_numbers<[1], [0], [0], [1], [0, 0, 1, 1], [], []>} : vector<256x128xbf16>, vector<128x128xbf16>, vector<256x128xf32> -> vector<256x128xf32>
      %c0_29 = arith.constant 0 : index
      %c0_30 = arith.constant 0 : index
      %52 = vector.load %arg8[%c0_29, %c0_30] : memref<1x128xf32, #tpu.memory_space<vmem>>, vector<1x128xf32>
      %53 = vector.broadcast %52 : vector<1x128xf32> to vector<256x128xf32>
      %54 = arith.addf %51, %53 : vector<256x128xf32>
      %c0_31 = arith.constant 0 : index
      %c0_32 = arith.constant 0 : index
      %55 = vector.load %arg9[%c0_31, %c0_32] : memref<1x1xf32, #tpu.memory_space<vmem>>, vector<1x1xf32>
      %56 = vector.broadcast %55 : vector<1x1xf32> to vector<256x128xf32>
      %57 = arith.mulf %56, %54 : vector<256x128xf32>
      %c0_33 = arith.constant 0 : index
      %c0_34 = arith.constant 0 : index
      %c0_35 = arith.constant 0 : index
      %58 = vector.load %arg3[%c0_33, %c0_34, %c0_35] : memref<1x256x128xf32, #tpu.memory_space<vmem>>, vector<1x256x128xf32>
      %59 = vector.shape_cast %58 : vector<1x256x128xf32> to vector<256x128xf32>
      %60 = arith.addf %57, %59 : vector<256x128xf32>
      %c0_36 = arith.constant 0 : index
      %c0_37 = arith.constant 0 : index
      %c0_38 = arith.constant 0 : index
      %61 = vector.load %arg10[%c0_36, %c0_37, %c0_38] : memref<1x256x128xf32, #tpu.memory_space<vmem>>, vector<1x256x128xf32>
      %62 = vector.shape_cast %61 : vector<1x256x128xf32> to vector<256x128xf32>
      %63 = vector.shape_cast %60 : vector<256x128xf32> to vector<1x256x128xf32>
      tpu.vector_store %arg10[%c0_36, %c0_37, %c0_38], %63 {strides = array<i32>} : memref<1x256x128xf32, #tpu.memory_space<vmem>>, vector<1x256x128xf32>,
    } else {
    }
    return
  }
  func.func @transform_0(%arg0: i32, %arg1: i32, %arg2: i32) -> (i32, i32, i32) {
    %c0_i32 = arith.constant 0 : i32
    %c0_i32_0 = arith.constant 0 : i32
    return %arg0, %arg1, %c0_i32 : i32, i32, i32
  }
  func.func @transform_1(%arg0: i32, %arg1: i32, %arg2: i32) -> (i32, i32, i32) {
    %c0_i32 = arith.constant 0 : i32
    %c0_i32_0 = arith.constant 0 : i32
    return %arg0, %arg2, %c0_i32 : i32, i32, i32
  }
  func.func @transform_2(%arg0: i32, %arg1: i32, %arg2: i32) -> (i32, i32) {
    %c0_i32 = arith.constant 0 : i32
    %c0_i32_0 = arith.constant 0 : i32
    %c0_i32_1 = arith.constant 0 : i32
    return %c0_i32, %c0_i32_0 : i32, i32
  }
  func.func @transform_3(%arg0: i32, %arg1: i32, %arg2: i32) -> (i32, i32) {
    %c0_i32 = arith.constant 0 : i32
    %c0_i32_0 = arith.constant 0 : i32
    %c0_i32_1 = arith.constant 0 : i32
    return %c0_i32, %c0_i32_0 : i32, i32
  }
  func.func @transform_4(%arg0: i32, %arg1: i32, %arg2: i32) -> (i32, i32) {
    %c0_i32 = arith.constant 0 : i32
    %c0_i32_0 = arith.constant 0 : i32
    %c0_i32_1 = arith.constant 0 : i32
    return %c0_i32, %c0_i32_0 : i32, i32
  }
  func.func @transform_5(%arg0: i32, %arg1: i32, %arg2: i32) -> (i32, i32) {
    %c0_i32 = arith.constant 0 : i32
    %c0_i32_0 = arith.constant 0 : i32
    %c0_i32_1 = arith.constant 0 : i32
    return %c0_i32, %c0_i32_0 : i32, i32
  }
  func.func @transform_6(%arg0: i32, %arg1: i32, %arg2: i32) -> (i32, i32) {
    %c0_i32 = arith.constant 0 : i32
    %c0_i32_0 = arith.constant 0 : i32
    %c0_i32_1 = arith.constant 0 : i32
    return %c0_i32, %c0_i32_0 : i32, i32
  }
  func.func @transform_7(%arg0: i32, %arg1: i32, %arg2: i32) -> (i32, i32, i32) {
    %c0_i32 = arith.constant 0 : i32
    %c0_i32_0 = arith.constant 0 : i32
    return %arg0, %arg1, %c0_i32 : i32, i32, i32
  }
}

</mosaic_0001>

<llo_original>
// kernel: tpu_custom_call.1
$region0: #{tpu_custom_call.1}
  #allocation0 [shape = 'u32[]', space=smem, size = 0x4, offset = 0x4, fixed_abs, tag = 'smem constant byte address 0x4 - core index']
  #allocation1 [shape = 'u32[72,128]{1,0:T(1,128)}', space=vmem, size = 0x9000, scoped, tag = 'internal scratch']
  #allocation2 [shape = 'f32[256,1]{1,0:T(8,128)}', space=vmem, size = 0x20000, scoped, tag = 'scratch operand']
  #allocation3 [shape = 'f32[256,1]{1,0:T(8,128)}', space=vmem, size = 0x20000, scoped, tag = 'scratch operand']
  #allocation4 [shape = 'f32[256,128]{1,0:T(8,128)}', space=vmem, size = 0x20000, scoped, tag = 'scratch operand']
  #allocation5 [shape = 'bf16[256,128]{1,0:T(8,128)(2,1)}', space=vmem, size = 0x10000, scoped, tag = 'scratch operand']
  #allocation6 [shape = 'f32[1,1]{1,0:T(1,128)S(1)}', space=vmem, size = 0x200, scoped, tag = 'scoped memory for tpu_custom_call.1']
  %s0 = inlined_call_operand.hbm [shape: f32[2,512,128], index: 0, kind: input, shape index: {}]
  %s1 = inlined_call_operand.hbm [shape: f32[2,512,128], index: 1, kind: input, shape index: {}]
  %s2 = inlined_call_operand.hbm [shape: bf16[128,128], index: 2, kind: input, shape index: {}]
  %s3 = inlined_call_operand.vmem [shape: f32[1,128], index: 3, kind: input, shape index: {}]
  %s4 = inlined_call_operand.hbm [shape: bf16[128,128], index: 4, kind: input, shape index: {}]
  %s5 = inlined_call_operand.vmem [shape: f32[1,128], index: 5, kind: input, shape index: {}]
  %s6 = inlined_call_operand.<no memory space> [shape: f32[1,1], index: 6, kind: input, shape index: {}]
  %s7 = inlined_call_operand.hbm [shape: f32[2,512,128], index: 7, kind: output, shape index: {}]
  %s8 = sld [smem:[#allocation0]]
  $region85: #{tpu_custom_call.1} parent=0
    _
  %s10 = ssub.s32 1, %s8
  %s11 = scalar_select 0, %s10, %s8
  %v12 = vstv %s6
  %13 = vst [vmem:[#allocation6] sm:$0x1] %v12
  $region1: #{tpu_custom_call.1} parent=0
    #allocation7 [shape = 'u8[262144]{0}', space=vmem, size = 0x40000, scoped, tag = 'input window, operand 0']
    #allocation8 [shape = 's32[2]{0}', space=sflag, size = 0x8, scoped, tag = 'scoped memory for tpu_custom_call.1']
    #allocation9 [shape = 's32[2]{0}', space=sflag, size = 0x8, scoped, tag = 'scoped memory for tpu_custom_call.1']
    #allocation10 [shape = 'u8[262144]{0}', space=vmem, size = 0x40000, scoped, tag = 'input window, operand 1']
    #allocation11 [shape = 's32[2]{0}', space=sflag, size = 0x8, scoped, tag = 'scoped memory for tpu_custom_call.1']
    #allocation12 [shape = 'u8[32768]{0}', space=vmem, size = 0x8000, scoped, tag = 'input window, operand 2, single buffered']
    #allocation13 [shape = 'u8[32768]{0}', space=vmem, size = 0x8000, scoped, tag = 'input window, operand 4, single buffered']
    #allocation14 [shape = 's32[1]{0}', space=sflag, size = 0x4, scoped, tag = 'scoped memory for tpu_custom_call.1']
    #allocation15 [shape = 'u8[262144]{0}', space=vmem, size = 0x40000, scoped, tag = 'output window, operand 0']
    %14 = vsyncpa [#allocation8], 0
    %s15 = scalar_lea.sflag [#allocation8], 1
    %16 = vsyncpa %s15, 0
    %17 = vsyncpa [#allocation11], 0
    %s18 = scalar_lea.sflag [#allocation11], 1
    %19 = vsyncpa %s18, 0
    %20 = vsyncpa [#allocation14], 0
    %21 = vsyncpa [#allocation9], 0
    %s22 = scalar_lea.sflag [#allocation9], 1
    %23 = vsyncpa %s22, 0
    loop: start=0, step=1, limit=10
    $region2: #{tpu_custom_call.1} parent=1 // loop_pre_header
      _
    $region3: #{tpu_custom_call.1} parent=1 // loop_header
      %s25 = sphi 0, %s29
      %p26 = scmp.ge.s32.totalorder %s25, 10
      %s32 = sphi 0, %s51
      %s33 = sphi 0, %s47
      %s34 = sphi 0, %s43
      %s35 = sphi 0, %s32
      %s36 = sphi 0, %s33
      %s37 = sphi 0, %s34
      %s38 = sphi 0, %s35
      %s39 = sphi 0, %s36
      %s40 = sphi 0, %s37
      %s56 = sphi 0, %s58
      %s59 = sphi 0, %s56
      %s60 = sphi 0, %s59
      %s76 = sphi 0, %s60
      %s84 = sphi 0, %s86
      %s87 = sphi 0, %s84
      %s88 = sphi 0, %s87
      %s104 = sphi 0, %s88
      %s108 = sphi 0, %s108
      %s110 = sphi 0, %s108
      %s111 = sphi 0, %s110
      %s125 = sphi 0, %s111
      %s129 = sphi 0, %s129
      %s131 = sphi 0, %s129
      %s132 = sphi 0, %s131
      %s146 = sphi 0, %s132
      %s150 = sphi 0, %s150
      %s152 = sphi 0, %s150
      %s153 = sphi 0, %s152
      %s167 = sphi 0, %s153
      %s171 = sphi 0, %s171
      %s173 = sphi 0, %s171
      %s174 = sphi 0, %s173
      %s188 = sphi 0, %s174
      %s192 = sphi 0, %s192
      %s194 = sphi 0, %s192
      %s195 = sphi 0, %s194
      %s209 = sphi 0, %s195
      %s217 = sphi 0, %s219
      %s220 = sphi 0, %s217
      %s221 = sphi 0, %s220
      %s237 = sphi 0, %s221
    $region4: #{tpu_custom_call.1} parent=1 // loop_header_branch
      %28 = sbr.rel (%p26) target = $region8
    $region5: #{tpu_custom_call.1} parent=1 // loop_body
      %s30 = ssub.s32 %s25, 1
      %s31 = ssub.s32 %s25, 2
      %s41 = sadd.s32 1, %s34
      %p42 = scmp.ge.s32.totalorder %s41, 2
      %s43 = scalar_select %p42, 0, %s41
      %s44 = sadd.s32 1, %s33
      %s45 = scalar_select %p42, %s44, %s33
      %p46 = scmp.ge.s32.totalorder %s45, 2
      %s47 = scalar_select %p46, 0, %s45
      %s48 = sadd.s32 1, %s32
      %s49 = scalar_select %p46, %s48, %s32
      %p50 = scmp.ge.s32.totalorder %s49, 2
      %s51 = scalar_select %p50, 0, %s49
      %s52 = ssub.s32 %s32, %s51
      %s53 = ssub.s32 %s33, %s47
      %s54 = sor.u32 %s52, %s53
      %p55 = scmp.eq.s32.totalorder %s54, 0
      %s57 = sadd.s32 %s56, 1
      %s58 = scalar_select %p55, %s56, %s57
      %p61 = pneg %p55
      %p62 = scmp.eq.s32.totalorder %s25, 7
      %p63 = por %p61, %p62
      %p64 = scmp.ne.s32.totalorder %s56, %s59
      %p65 = scmp.eq.s32.totalorder %s25, 0
      %p66 = por %p64, %p65
      %p67 = scmp.ne.s32.totalorder %s56, %s59
      %p68 = scmp.eq.s32.totalorder %s30, 7
      %p69 = por %p67, %p68
      %p70 = scmp.ne.s32.totalorder %s59, %s60
      %p71 = scmp.eq.s32.totalorder %s30, 0
      %p72 = por %p70, %p71
      %p73 = scmp.ne.s32.totalorder %s59, %s60
      %p74 = scmp.eq.s32.totalorder %s31, 7
      %p75 = por %p73, %p74
      %p77 = scmp.ne.s32.totalorder %s60, %s76
      %p78 = scmp.eq.s32.totalorder %s31, 0
      %p79 = por %p77, %p78
      %s80 = ssub.s32 %s32, %s51
      %s81 = ssub.s32 %s34, %s43
      %s82 = sor.u32 %s80, %s81
      %p83 = scmp.eq.s32.totalorder %s82, 0
      %s85 = sadd.s32 %s84, 1
      %s86 = scalar_select %p83, %s84, %s85
      %p89 = pneg %p83
      %p90 = scmp.eq.s32.totalorder %s25, 7
      %p91 = por %p89, %p90
      %p92 = scmp.ne.s32.totalorder %s84, %s87
      %p93 = scmp.eq.s32.totalorder %s25, 0
      %p94 = por %p92, %p93
      %p95 = scmp.ne.s32.totalorder %s84, %s87
      %p96 = scmp.eq.s32.totalorder %s30, 7
      %p97 = por %p95, %p96
      %p98 = scmp.ne.s32.totalorder %s87, %s88
      %p99 = scmp.eq.s32.totalorder %s30, 0
      %p100 = por %p98, %p99
      %p101 = scmp.ne.s32.totalorder %s87, %s88
      %p102 = scmp.eq.s32.totalorder %s31, 7
      %p103 = por %p101, %p102
      %p105 = scmp.ne.s32.totalorder %s88, %s104
      %p106 = scmp.eq.s32.totalorder %s31, 0
      %p107 = por %p105, %p106
      %s109 = sadd.s32 %s108, 1
      %p112 = scmp.eq.s32.totalorder %s25, 7
      %p113 = scmp.ne.s32.totalorder %s108, %s110
      %p114 = scmp.eq.s32.totalorder %s25, 0
      %p115 = por %p113, %p114
      %p116 = scmp.ne.s32.totalorder %s108, %s110
      %p117 = scmp.eq.s32.totalorder %s30, 7
      %p118 = por %p116, %p117
      %p119 = scmp.ne.s32.totalorder %s110, %s111
      %p120 = scmp.eq.s32.totalorder %s30, 0
      %p121 = por %p119, %p120
      %p122 = scmp.ne.s32.totalorder %s110, %s111
      %p123 = scmp.eq.s32.totalorder %s31, 7
      %p124 = por %p122, %p123
      %p126 = scmp.ne.s32.totalorder %s111, %s125
      %p127 = scmp.eq.s32.totalorder %s31, 0
      %p128 = por %p126, %p127
      %s130 = sadd.s32 %s129, 1
      %p133 = scmp.eq.s32.totalorder %s25, 7
      %p134 = scmp.ne.s32.totalorder %s129, %s131
      %p135 = scmp.eq.s32.totalorder %s25, 0
      %p136 = por %p134, %p135
      %p137 = scmp.ne.s32.totalorder %s129, %s131
      %p138 = scmp.eq.s32.totalorder %s30, 7
      %p139 = por %p137, %p138
      %p140 = scmp.ne.s32.totalorder %s131, %s132
      %p141 = scmp.eq.s32.totalorder %s30, 0
      %p142 = por %p140, %p141
      %p143 = scmp.ne.s32.totalorder %s131, %s132
      %p144 = scmp.eq.s32.totalorder %s31, 7
      %p145 = por %p143, %p144
      %p147 = scmp.ne.s32.totalorder %s132, %s146
      %p148 = scmp.eq.s32.totalorder %s31, 0
      %p149 = por %p147, %p148
      %s151 = sadd.s32 %s150, 1
      %p154 = scmp.eq.s32.totalorder %s25, 7
      %p155 = scmp.ne.s32.totalorder %s150, %s152
      %p156 = scmp.eq.s32.totalorder %s25, 0
      %p157 = por %p155, %p156
      %p158 = scmp.ne.s32.totalorder %s150, %s152
      %p159 = scmp.eq.s32.totalorder %s30, 7
      %p160 = por %p158, %p159
      %p161 = scmp.ne.s32.totalorder %s152, %s153
      %p162 = scmp.eq.s32.totalorder %s30, 0
      %p163 = por %p161, %p162
      %p164 = scmp.ne.s32.totalorder %s152, %s153
      %p165 = scmp.eq.s32.totalorder %s31, 7
      %p166 = por %p164, %p165
      %p168 = scmp.ne.s32.totalorder %s153, %s167
      %p169 = scmp.eq.s32.totalorder %s31, 0
      %p170 = por %p168, %p169
      %s172 = sadd.s32 %s171, 1
      %p175 = scmp.eq.s32.totalorder %s25, 7
      %p176 = scmp.ne.s32.totalorder %s171, %s173
      %p177 = scmp.eq.s32.totalorder %s25, 0
      %p178 = por %p176, %p177
      %p179 = scmp.ne.s32.totalorder %s171, %s173
      %p180 = scmp.eq.s32.totalorder %s30, 7
      %p181 = por %p179, %p180
      %p182 = scmp.ne.s32.totalorder %s173, %s174
      %p183 = scmp.eq.s32.totalorder %s30, 0
      %p184 = por %p182, %p183
      %p185 = scmp.ne.s32.totalorder %s173, %s174
      %p186 = scmp.eq.s32.totalorder %s31, 7
      %p187 = por %p185, %p186
      %p189 = scmp.ne.s32.totalorder %s174, %s188
      %p190 = scmp.eq.s32.totalorder %s31, 0
      %p191 = por %p189, %p190
      %s193 = sadd.s32 %s192, 1
      %p196 = scmp.eq.s32.totalorder %s25, 7
      %p197 = scmp.ne.s32.totalorder %s192, %s194
      %p198 = scmp.eq.s32.totalorder %s25, 0
      %p199 = por %p197, %p198
      %p200 = scmp.ne.s32.totalorder %s192, %s194
      %p201 = scmp.eq.s32.totalorder %s30, 7
      %p202 = por %p200, %p201
      %p203 = scmp.ne.s32.totalorder %s194, %s195
      %p204 = scmp.eq.s32.totalorder %s30, 0
      %p205 = por %p203, %p204
      %p206 = scmp.ne.s32.totalorder %s194, %s195
      %p207 = scmp.eq.s32.totalorder %s31, 7
      %p208 = por %p206, %p207
      %p210 = scmp.ne.s32.totalorder %s195, %s209
      %p211 = scmp.eq.s32.totalorder %s31, 0
      %p212 = por %p210, %p211
      %s213 = ssub.s32 %s32, %s51
      %s214 = ssub.s32 %s33, %s47
      %s215 = sor.u32 %s213, %s214
      %p216 = scmp.eq.s32.totalorder %s215, 0
      %s218 = sadd.s32 %s217, 1
      %s219 = scalar_select %p216, %s217, %s218
      %p222 = pneg %p216
      %p223 = scmp.eq.s32.totalorder %s25, 7
      %p224 = por %p222, %p223
      %p225 = scmp.ne.s32.totalorder %s217, %s220
      %p226 = scmp.eq.s32.totalorder %s25, 0
      %p227 = por %p225, %p226
      %p228 = scmp.ne.s32.totalorder %s217, %s220
      %p229 = scmp.eq.s32.totalorder %s30, 7
      %p230 = por %p228, %p229
      %p231 = scmp.ne.s32.totalorder %s220, %s221
      %p232 = scmp.eq.s32.totalorder %s30, 0
      %p233 = por %p231, %p232
      %p234 = scmp.ne.s32.totalorder %s220, %s221
      %p235 = scmp.eq.s32.totalorder %s31, 7
      %p236 = por %p234, %p235
      %p238 = scmp.ne.s32.totalorder %s221, %s237
      %p239 = scmp.eq.s32.totalorder %s31, 0
      %p240 = por %p238, %p239
      %p241 = scmp.le.s32.totalorder 1, %s25
      %p242 = scmp.lt.s32.totalorder %s25, 9
      %p243 = pnand %p241, %p242
      %p244 = pneg %p243
      // Predicated region
      $region9: #{tpu_custom_call.1} parent=5 // pred_check
        _
      $region10: #{tpu_custom_call.1} parent=5 // pred_check_branch
        %246 = sbr.rel (%p243) target = $region12
      $region11: #{tpu_custom_call.1} parent=5 // pred_region
        %s247 = ssub.s32 %s25, 1
        // Predicated region
        $region13: #{tpu_custom_call.1} parent=11 // pred_check
          %p248 = pneg %p121
        $region14: #{tpu_custom_call.1} parent=11 // pred_check_branch
          %250 = sbr.rel (%p248) target = $region16
        $region15: #{tpu_custom_call.1} parent=11 // pred_region
          %252 = vsyncadd [#allocation11], 0
          %s253 = sshll.u32 %s2, 4
          %s254 = int_to_ptr.hbm [resolvable:$true] %s253
          %s255 = sshll.u32 [#allocation12], 4
          %s256 = int_to_ptr.vmem [resolvable:$true] %s255
          %261 = dma.hbm_to_vmem [thread:$0]  %s254, 1024, %s256, [#allocation11], 64, 64, 4
        $region16: #{tpu_custom_call.1} parent=11 // pred_fallthru
          _
        // Predicated region
        $region17: #{tpu_custom_call.1} parent=11 // pred_check
          %p262 = pneg %p142
        $region18: #{tpu_custom_call.1} parent=11 // pred_check_branch
          %264 = sbr.rel (%p262) target = $region20
        $region19: #{tpu_custom_call.1} parent=11 // pred_region
          _
        $region20: #{tpu_custom_call.1} parent=11 // pred_fallthru
          _
        // Predicated region
        $region21: #{tpu_custom_call.1} parent=11 // pred_check
          %p265 = pneg %p163
        $region22: #{tpu_custom_call.1} parent=11 // pred_check_branch
          %267 = sbr.rel (%p265) target = $region24
        $region23: #{tpu_custom_call.1} parent=11 // pred_region
          %269 = vsyncadd [#allocation14], 0
          %s270 = sshll.u32 %s4, 4
          %s271 = int_to_ptr.hbm [resolvable:$true] %s270
          %s272 = sshll.u32 [#allocation13], 4
          %s273 = int_to_ptr.vmem [resolvable:$true] %s272
          %278 = dma.hbm_to_vmem [thread:$0]  %s271, 1024, %s273, [#allocation14], 64, 64, 4
        $region24: #{tpu_custom_call.1} parent=11 // pred_fallthru
          _
        // Predicated region
        $region25: #{tpu_custom_call.1} parent=11 // pred_check
          %p279 = pneg %p184
        $region26: #{tpu_custom_call.1} parent=11 // pred_check_branch
          %281 = sbr.rel (%p279) target = $region28
        $region27: #{tpu_custom_call.1} parent=11 // pred_region
          _
        $region28: #{tpu_custom_call.1} parent=11 // pred_fallthru
          _
        // Predicated region
        $region29: #{tpu_custom_call.1} parent=11 // pred_check
          %p282 = pneg %p205
        $region30: #{tpu_custom_call.1} parent=11 // pred_check_branch
          %284 = sbr.rel (%p282) target = $region32
        $region31: #{tpu_custom_call.1} parent=11 // pred_region
          _
        $region32: #{tpu_custom_call.1} parent=11 // pred_fallthru
          _
      $region12: #{tpu_custom_call.1} parent=5 // pred_fallthru
        _
      %p285 = scmp.lt.s32.totalorder %s25, 8
      // Predicated region
      $region33: #{tpu_custom_call.1} parent=5 // pred_check
        %p286 = pneg %p285
      $region34: #{tpu_custom_call.1} parent=5 // pred_check_branch
        %288 = sbr.rel (%p286) target = $region36
      $region35: #{tpu_custom_call.1} parent=5 // pred_region
        // Predicated region
        $region37: #{tpu_custom_call.1} parent=35 // pred_check
          %p289 = pneg %p66
        $region38: #{tpu_custom_call.1} parent=35 // pred_check_branch
          %291 = sbr.rel (%p289) target = $region40
        $region39: #{tpu_custom_call.1} parent=35 // pred_region
          %s292 = sand.u32 %s56, 1
          %s293 = scalar_lea.sflag [#allocation8], %s292
          %s294 = sand.u32 %s56, 1
          %s295 = smul.addr %s294, 256
          %s296 = scalar_lea.vmem [#allocation7], %s295
          %s297 = smul.u32 32, %s33
          %299 = vsyncadd %s293, 0
          %s300 = smul.addr %s32, 64
          %s301 = sadd.s32 %s297, %s300
          %s302 = smul.addr %s301, 8
          %s303 = scalar_lea.hbm %s0, %s302
          %s304 = sshll.u32 %s303, 4
          %s305 = int_to_ptr.hbm [resolvable:$true] %s304
          %s306 = sshll.u32 %s296, 4
          %s307 = int_to_ptr.vmem [resolvable:$true] %s306
          %312 = dma.hbm_to_vmem [thread:$0]  %s305, 4096, %s307, %s293, 128, 128, 8
        $region40: #{tpu_custom_call.1} parent=35 // pred_fallthru
          _
        // Predicated region
        $region41: #{tpu_custom_call.1} parent=35 // pred_check
          %p313 = pneg %p94
        $region42: #{tpu_custom_call.1} parent=35 // pred_check_branch
          %315 = sbr.rel (%p313) target = $region44
        $region43: #{tpu_custom_call.1} parent=35 // pred_region
          %s316 = sand.u32 %s25, 1
          %s317 = scalar_lea.sflag [#allocation11], %s316
          %s318 = sand.u32 %s84, 1
          %s319 = smul.addr %s318, 256
          %s320 = scalar_lea.vmem [#allocation10], %s319
          %s321 = smul.u32 32, %s34
          %323 = vsyncadd %s317, 0
          %s324 = smul.addr %s32, 64
          %s325 = sadd.s32 %s321, %s324
          %s326 = smul.addr %s325, 8
          %s327 = scalar_lea.hbm %s1, %s326
          %s328 = sshll.u32 %s327, 4
          %s329 = int_to_ptr.hbm [resolvable:$true] %s328
          %s330 = sshll.u32 %s320, 4
          %s331 = int_to_ptr.vmem [resolvable:$true] %s330
          %336 = dma.hbm_to_vmem [thread:$0]  %s329, 4096, %s331, %s317, 128, 128, 8
        $region44: #{tpu_custom_call.1} parent=35 // pred_fallthru
          _
      $region36: #{tpu_custom_call.1} parent=5 // pred_fallthru
        _
      %p337 = scmp.le.s32.totalorder 1, %s25
      %p338 = scmp.lt.s32.totalorder %s25, 9
      %p339 = pnand %p337, %p338
      %p340 = pneg %p339
      // Predicated region
      $region45: #{tpu_custom_call.1} parent=5 // pred_check
        _
      $region46: #{tpu_custom_call.1} parent=5 // pred_check_branch
        %342 = sbr.rel (%p339) target = $region48
      $region47: #{tpu_custom_call.1} parent=5 // pred_region
        %s343 = ssub.s32 %s25, 1
        %s344 = sand.u32 %s59, 1
        %s345 = scalar_lea.sflag [#allocation8], %s344
        %s346 = sand.u32 %s59, 1
        %s347 = smul.addr %s346, 256
        %s348 = scalar_lea.vmem [#allocation7], %s347
        // Predicated region
        $region49: #{tpu_custom_call.1} parent=47 // pred_check
          %p349 = pneg %p72
        $region50: #{tpu_custom_call.1} parent=47 // pred_check_branch
          %351 = sbr.rel (%p349) target = $region52
        $region51: #{tpu_custom_call.1} parent=47 // pred_region
          %353 = dma.done %s345, 4096
        $region52: #{tpu_custom_call.1} parent=47 // pred_fallthru
          _
        %s354 = sand.u32 %s30, 1
        %s355 = scalar_lea.sflag [#allocation11], %s354
        %s356 = sand.u32 %s87, 1
        %s357 = smul.addr %s356, 256
        %s358 = scalar_lea.vmem [#allocation10], %s357
        // Predicated region
        $region53: #{tpu_custom_call.1} parent=47 // pred_check
          %p359 = pneg %p100
        $region54: #{tpu_custom_call.1} parent=47 // pred_check_branch
          %361 = sbr.rel (%p359) target = $region56
        $region55: #{tpu_custom_call.1} parent=47 // pred_region
          %363 = dma.done %s355, 4096
        $region56: #{tpu_custom_call.1} parent=47 // pred_fallthru
          _
        // Predicated region
        $region57: #{tpu_custom_call.1} parent=47 // pred_check
          %p364 = pneg %p121
        $region58: #{tpu_custom_call.1} parent=47 // pred_check_branch
          %366 = sbr.rel (%p364) target = $region60
        $region59: #{tpu_custom_call.1} parent=47 // pred_region
          %368 = dma.done [#allocation11], 1024
        $region60: #{tpu_custom_call.1} parent=47 // pred_fallthru
          _
        // Predicated region
        $region61: #{tpu_custom_call.1} parent=47 // pred_check
          %p369 = pneg %p163
        $region62: #{tpu_custom_call.1} parent=47 // pred_check_branch
          %371 = sbr.rel (%p369) target = $region64
        $region63: #{tpu_custom_call.1} parent=47 // pred_region
          %373 = dma.done [#allocation14], 1024
        $region64: #{tpu_custom_call.1} parent=47 // pred_fallthru
          _
        %s374 = sand.u32 %s59, 1
        %s375 = scalar_lea.sflag [#allocation8], %s374
        %s376 = sand.u32 %s59, 1
        %s377 = smul.addr %s376, 256
        %s378 = scalar_lea.vmem [#allocation7], %s377
        %p379 = pneg %p72
        %p380 = pneg %p69
        %s381 = sand.u32 %s30, 1
        %s382 = scalar_lea.sflag [#allocation11], %s381
        %s383 = sand.u32 %s87, 1
        %s384 = smul.addr %s383, 256
        %s385 = scalar_lea.vmem [#allocation10], %s384
        %p386 = pneg %p100
        %p387 = pneg %p97
        %p388 = pneg %p121
        %p389 = pneg %p118
        %p390 = pneg %p142
        %p391 = pneg %p139
        %p392 = pneg %p163
        %p393 = pneg %p160
        %p394 = pneg %p184
        %p395 = pneg %p181
        %p396 = pneg %p205
        %p397 = pneg %p202
        %p398 = pneg %p233
        %p399 = pneg %p230
        %s400 = sand.u32 %s220, 1
        %s401 = scalar_lea.sflag [#allocation9], %s400
        %s402 = sand.u32 %s220, 1
        %s403 = smul.addr %s402, 256
        %s404 = scalar_lea.vmem [#allocation15], %s403
        %s405 = smul.u32 32, %s36
        %s406 = smul.u32 32, %s37
        %s407 = smul.u32 32, %s36
        %p408 = scmp.eq.s32.totalorder %s37, 0
        // Predicated region
        $region65: #{tpu_custom_call.1} parent=47 // pred_check
          %p409 = pneg %p408
        $region66: #{tpu_custom_call.1} parent=47 // pred_check_branch
          %411 = sbr.rel (%p409) target = $region68
        $region67: #{tpu_custom_call.1} parent=47 // pred_region
          %vm412 = vcmask 7168
          %413 = vst.msk [vmem:[#allocation2] sm:$0xff] %vm412, -inf
          %414 = vst.msk [vmem:[#allocation2 + $0x8] sm:$0xff] %vm412, -inf
          %415 = vst.msk [vmem:[#allocation2 + $0x10] sm:$0xff] %vm412, -inf
          %416 = vst.msk [vmem:[#allocation2 + $0x18] sm:$0xff] %vm412, -inf
          %417 = vst.msk [vmem:[#allocation2 + $0x20] sm:$0xff] %vm412, -inf
          %418 = vst.msk [vmem:[#allocation2 + $0x28] sm:$0xff] %vm412, -inf
          %419 = vst.msk [vmem:[#allocation2 + $0x30] sm:$0xff] %vm412, -inf
          %420 = vst.msk [vmem:[#allocation2 + $0x38] sm:$0xff] %vm412, -inf
          %421 = vst.msk [vmem:[#allocation2 + $0x40] sm:$0xff] %vm412, -inf
          %422 = vst.msk [vmem:[#allocation2 + $0x48] sm:$0xff] %vm412, -inf
          %423 = vst.msk [vmem:[#allocation2 + $0x50] sm:$0xff] %vm412, -inf
          %424 = vst.msk [vmem:[#allocation2 + $0x58] sm:$0xff] %vm412, -inf
          %425 = vst.msk [vmem:[#allocation2 + $0x60] sm:$0xff] %vm412, -inf
          %426 = vst.msk [vmem:[#allocation2 + $0x68] sm:$0xff] %vm412, -inf
          %427 = vst.msk [vmem:[#allocation2 + $0x70] sm:$0xff] %vm412, -inf
          %428 = vst.msk [vmem:[#allocation2 + $0x78] sm:$0xff] %vm412, -inf
          %429 = vst.msk [vmem:[#allocation2 + $0x80] sm:$0xff] %vm412, -inf
          %430 = vst.msk [vmem:[#allocation2 + $0x88] sm:$0xff] %vm412, -inf
          %431 = vst.msk [vmem:[#allocation2 + $0x90] sm:$0xff] %vm412, -inf
          %432 = vst.msk [vmem:[#allocation2 + $0x98] sm:$0xff] %vm412, -inf
          %433 = vst.msk [vmem:[#allocation2 + $0xa0] sm:$0xff] %vm412, -inf
          %434 = vst.msk [vmem:[#allocation2 + $0xa8] sm:$0xff] %vm412, -inf
          %435 = vst.msk [vmem:[#allocation2 + $0xb0] sm:$0xff] %vm412, -inf
          %436 = vst.msk [vmem:[#allocation2 + $0xb8] sm:$0xff] %vm412, -inf
          %437 = vst.msk [vmem:[#allocation2 + $0xc0] sm:$0xff] %vm412, -inf
          %438 = vst.msk [vmem:[#allocation2 + $0xc8] sm:$0xff] %vm412, -inf
          %439 = vst.msk [vmem:[#allocation2 + $0xd0] sm:$0xff] %vm412, -inf
          %440 = vst.msk [vmem:[#allocation2 + $0xd8] sm:$0xff] %vm412, -inf
          %441 = vst.msk [vmem:[#allocation2 + $0xe0] sm:$0xff] %vm412, -inf
          %442 = vst.msk [vmem:[#allocation2 + $0xe8] sm:$0xff] %vm412, -inf
          %443 = vst.msk [vmem:[#allocation2 + $0xf0] sm:$0xff] %vm412, -inf
          %444 = vst.msk [vmem:[#allocation2 + $0xf8] sm:$0xff] %vm412, -inf
          %445 = vst.msk [vmem:[#allocation3] sm:$0xff] %vm412, 0.0
          %446 = vst.msk [vmem:[#allocation3 + $0x8] sm:$0xff] %vm412, 0.0
          %447 = vst.msk [vmem:[#allocation3 + $0x10] sm:$0xff] %vm412, 0.0
          %448 = vst.msk [vmem:[#allocation3 + $0x18] sm:$0xff] %vm412, 0.0
          %449 = vst.msk [vmem:[#allocation3 + $0x20] sm:$0xff] %vm412, 0.0
          %450 = vst.msk [vmem:[#allocation3 + $0x28] sm:$0xff] %vm412, 0.0
          %451 = vst.msk [vmem:[#allocation3 + $0x30] sm:$0xff] %vm412, 0.0
          %452 = vst.msk [vmem:[#allocation3 + $0x38] sm:$0xff] %vm412, 0.0
          %453 = vst.msk [vmem:[#allocation3 + $0x40] sm:$0xff] %vm412, 0.0
          %454 = vst.msk [vmem:[#allocation3 + $0x48] sm:$0xff] %vm412, 0.0
          %455 = vst.msk [vmem:[#allocation3 + $0x50] sm:$0xff] %vm412, 0.0
          %456 = vst.msk [vmem:[#allocation3 + $0x58] sm:$0xff] %vm412, 0.0
          %457 = vst.msk [vmem:[#allocation3 + $0x60] sm:$0xff] %vm412, 0.0
          %458 = vst.msk [vmem:[#allocation3 + $0x68] sm:$0xff] %vm412, 0.0
          %459 = vst.msk [vmem:[#allocation3 + $0x70] sm:$0xff] %vm412, 0.0
          %460 = vst.msk [vmem:[#allocation3 + $0x78] sm:$0xff] %vm412, 0.0
          %461 = vst.msk [vmem:[#allocation3 + $0x80] sm:$0xff] %vm412, 0.0
          %462 = vst.msk [vmem:[#allocation3 + $0x88] sm:$0xff] %vm412, 0.0
          %463 = vst.msk [vmem:[#allocation3 + $0x90] sm:$0xff] %vm412, 0.0
          %464 = vst.msk [vmem:[#allocation3 + $0x98] sm:$0xff] %vm412, 0.0
          %465 = vst.msk [vmem:[#allocation3 + $0xa0] sm:$0xff] %vm412, 0.0
          %466 = vst.msk [vmem:[#allocation3 + $0xa8] sm:$0xff] %vm412, 0.0
          %467 = vst.msk [vmem:[#allocation3 + $0xb0] sm:$0xff] %vm412, 0.0
          %468 = vst.msk [vmem:[#allocation3 + $0xb8] sm:$0xff] %vm412, 0.0
          %469 = vst.msk [vmem:[#allocation3 + $0xc0] sm:$0xff] %vm412, 0.0
          %470 = vst.msk [vmem:[#allocation3 + $0xc8] sm:$0xff] %vm412, 0.0
          %471 = vst.msk [vmem:[#allocation3 + $0xd0] sm:$0xff] %vm412, 0.0
          %472 = vst.msk [vmem:[#allocation3 + $0xd8] sm:$0xff] %vm412, 0.0
          %473 = vst.msk [vmem:[#allocation3 + $0xe0] sm:$0xff] %vm412, 0.0
          %474 = vst.msk [vmem:[#allocation3 + $0xe8] sm:$0xff] %vm412, 0.0
          %475 = vst.msk [vmem:[#allocation3 + $0xf0] sm:$0xff] %vm412, 0.0
          %476 = vst.msk [vmem:[#allocation3 + $0xf8] sm:$0xff] %vm412, 0.0
          %477 = vst [vmem:[#allocation4] sm:$0xff] 0.0
          %478 = vst [vmem:[#allocation4 + $0x8] sm:$0xff] 0.0
          %479 = vst [vmem:[#allocation4 + $0x10] sm:$0xff] 0.0
          %480 = vst [vmem:[#allocation4 + $0x18] sm:$0xff] 0.0
          %481 = vst [vmem:[#allocation4 + $0x20] sm:$0xff] 0.0
          %482 = vst [vmem:[#allocation4 + $0x28] sm:$0xff] 0.0
          %483 = vst [vmem:[#allocation4 + $0x30] sm:$0xff] 0.0
          %484 = vst [vmem:[#allocation4 + $0x38] sm:$0xff] 0.0
          %485 = vst [vmem:[#allocation4 + $0x40] sm:$0xff] 0.0
          %486 = vst [vmem:[#allocation4 + $0x48] sm:$0xff] 0.0
          %487 = vst [vmem:[#allocation4 + $0x50] sm:$0xff] 0.0
          %488 = vst [vmem:[#allocation4 + $0x58] sm:$0xff] 0.0
          %489 = vst [vmem:[#allocation4 + $0x60] sm:$0xff] 0.0
          %490 = vst [vmem:[#allocation4 + $0x68] sm:$0xff] 0.0
          %491 = vst [vmem:[#allocation4 + $0x70] sm:$0xff] 0.0
          %492 = vst [vmem:[#allocation4 + $0x78] sm:$0xff] 0.0
          %493 = vst [vmem:[#allocation4 + $0x80] sm:$0xff] 0.0
          %494 = vst [vmem:[#allocation4 + $0x88] sm:$0xff] 0.0
          %495 = vst [vmem:[#allocation4 + $0x90] sm:$0xff] 0.0
          %496 = vst [vmem:[#allocation4 + $0x98] sm:$0xff] 0.0
          %497 = vst [vmem:[#allocation4 + $0xa0] sm:$0xff] 0.0
          %498 = vst [vmem:[#allocation4 + $0xa8] sm:$0xff] 0.0
          %499 = vst [vmem:[#allocation4 + $0xb0] sm:$0xff] 0.0
          %500 = vst [vmem:[#allocation4 + $0xb8] sm:$0xff] 0.0
          %501 = vst [vmem:[#allocation4 + $0xc0] sm:$0xff] 0.0
          %502 = vst [vmem:[#allocation4 + $0xc8] sm:$0xff] 0.0
          %503 = vst [vmem:[#allocation4 + $0xd0] sm:$0xff] 0.0
          %504 = vst [vmem:[#allocation4 + $0xd8] sm:$0xff] 0.0
          %505 = vst [vmem:[#allocation4 + $0xe0] sm:$0xff] 0.0
          %506 = vst [vmem:[#allocation4 + $0xe8] sm:$0xff] 0.0
          %507 = vst [vmem:[#allocation4 + $0xf0] sm:$0xff] 0.0
          %508 = vst [vmem:[#allocation4 + $0xf8] sm:$0xff] 0.0
          %v509 = vld [vmem:[%s348] sm:$0xff]
          %v510 = vld [vmem:[%s348 + $0x8] sm:$0xff]
          %v511 = vld [vmem:[%s348 + $0x10] sm:$0xff]
          %v512 = vld [vmem:[%s348 + $0x18] sm:$0xff]
          %v513 = vld [vmem:[%s348 + $0x20] sm:$0xff]
          %v514 = vld [vmem:[%s348 + $0x28] sm:$0xff]
          %v515 = vld [vmem:[%s348 + $0x30] sm:$0xff]
          %v516 = vld [vmem:[%s348 + $0x38] sm:$0xff]
          %v517 = vld [vmem:[%s348 + $0x40] sm:$0xff]
          %v518 = vld [vmem:[%s348 + $0x48] sm:$0xff]
          %v519 = vld [vmem:[%s348 + $0x50] sm:$0xff]
          %v520 = vld [vmem:[%s348 + $0x58] sm:$0xff]
          %v521 = vld [vmem:[%s348 + $0x60] sm:$0xff]
          %v522 = vld [vmem:[%s348 + $0x68] sm:$0xff]
          %v523 = vld [vmem:[%s348 + $0x70] sm:$0xff]
          %v524 = vld [vmem:[%s348 + $0x78] sm:$0xff]
          %v525 = vld [vmem:[%s348 + $0x80] sm:$0xff]
          %v526 = vld [vmem:[%s348 + $0x88] sm:$0xff]
          %v527 = vld [vmem:[%s348 + $0x90] sm:$0xff]
          %v528 = vld [vmem:[%s348 + $0x98] sm:$0xff]
          %v529 = vld [vmem:[%s348 + $0xa0] sm:$0xff]
          %v530 = vld [vmem:[%s348 + $0xa8] sm:$0xff]
          %v531 = vld [vmem:[%s348 + $0xb0] sm:$0xff]
          %v532 = vld [vmem:[%s348 + $0xb8] sm:$0xff]
          %v533 = vld [vmem:[%s348 + $0xc0] sm:$0xff]
          %v534 = vld [vmem:[%s348 + $0xc8] sm:$0xff]
          %v535 = vld [vmem:[%s348 + $0xd0] sm:$0xff]
          %v536 = vld [vmem:[%s348 + $0xd8] sm:$0xff]
          %v537 = vld [vmem:[%s348 + $0xe0] sm:$0xff]
          %v538 = vld [vmem:[%s348 + $0xe8] sm:$0xff]
          %v539 = vld [vmem:[%s348 + $0xf0] sm:$0xff]
          %v540 = vld [vmem:[%s348 + $0xf8] sm:$0xff]
          %v541 = vpack.c.bf16 %v510, %v509
          %v542 = vpack.c.bf16 %v512, %v511
          %v543 = vpack.c.bf16 %v514, %v513
          %v544 = vpack.c.bf16 %v516, %v515
          %v545 = vpack.c.bf16 %v518, %v517
          %v546 = vpack.c.bf16 %v520, %v519
          %v547 = vpack.c.bf16 %v522, %v521
          %v548 = vpack.c.bf16 %v524, %v523
          %v549 = vpack.c.bf16 %v526, %v525
          %v550 = vpack.c.bf16 %v528, %v527
          %v551 = vpack.c.bf16 %v530, %v529
          %v552 = vpack.c.bf16 %v532, %v531
          %v553 = vpack.c.bf16 %v534, %v533
          %v554 = vpack.c.bf16 %v536, %v535
          %v555 = vpack.c.bf16 %v538, %v537
          %v556 = vpack.c.bf16 %v540, %v539
          %v557 = vld [vmem:[#allocation12] sm:$0xf]
          %v558 = vld [vmem:[#allocation12 + $0x4] sm:$0xf]
          %v559 = vld [vmem:[#allocation12 + $0x8] sm:$0xf]
          %v560 = vld [vmem:[#allocation12 + $0xc] sm:$0xf]
          %v561 = vld [vmem:[#allocation12 + $0x10] sm:$0xf]
          %v562 = vld [vmem:[#allocation12 + $0x14] sm:$0xf]
          %v563 = vld [vmem:[#allocation12 + $0x18] sm:$0xf]
          %v564 = vld [vmem:[#allocation12 + $0x1c] sm:$0xf]
          %v565 = vld [vmem:[#allocation12 + $0x20] sm:$0xf]
          %v566 = vld [vmem:[#allocation12 + $0x24] sm:$0xf]
          %v567 = vld [vmem:[#allocation12 + $0x28] sm:$0xf]
          %v568 = vld [vmem:[#allocation12 + $0x2c] sm:$0xf]
          %v569 = vld [vmem:[#allocation12 + $0x30] sm:$0xf]
          %v570 = vld [vmem:[#allocation12 + $0x34] sm:$0xf]
          %v571 = vld [vmem:[#allocation12 + $0x38] sm:$0xf]
          %v572 = vld [vmem:[#allocation12 + $0x3c] sm:$0xf]
          %v573 = vld [vmem:[%s3] sm:$0x1]
          %v575 = vperm.slane %v573, 0
          %v593 = vunpack.c.l.b16 %v557
          %v594 = vunpack.c.l.b16 %v558
          %v595 = vunpack.c.l.b16 %v559
          %v596 = vunpack.c.l.b16 %v560
          %v597 = vunpack.c.l.b16 %v561
          %v598 = vunpack.c.l.b16 %v562
          %v599 = vunpack.c.l.b16 %v563
          %v600 = vunpack.c.l.b16 %v564
          %v601 = vunpack.c.l.b16 %v565
          %v602 = vunpack.c.l.b16 %v566
          %v603 = vunpack.c.l.b16 %v567
          %v604 = vunpack.c.l.b16 %v568
          %v605 = vunpack.c.l.b16 %v569
          %v606 = vunpack.c.l.b16 %v570
          %v607 = vunpack.c.l.b16 %v571
          %v608 = vunpack.c.l.b16 %v572
          %v609 = vpack.c.b16 %v594, %v593
          %v610 = vpack.c.b16 %v596, %v595
          %v611 = vpack.c.b16 %v598, %v597
          %v612 = vpack.c.b16 %v600, %v599
          %v613 = vpack.c.b16 %v602, %v601
          %v614 = vpack.c.b16 %v604, %v603
          %v615 = vpack.c.b16 %v606, %v605
          %v616 = vpack.c.b16 %v608, %v607
          %625 = vmatpush.bf16.msra.mxu0 %v616
          %626 = vmatpush.bf16.msra.mxu0 %v615
          %627 = vmatpush.bf16.msra.mxu0 %v614
          %628 = vmatpush.bf16.msra.mxu0 %v613
          %629 = vmatpush.bf16.msra.mxu0 %v612
          %630 = vmatpush.bf16.msra.mxu0 %v611
          %631 = vmatpush.bf16.msra.mxu0 %v610
          %632 = vmatpush.bf16.msra.mxu0 %v609
          %633 = vmatmul.bf16.gmra.mxu0 %v541
          %v634 = vpop.f32.mrf.mxu0
          %v635 = vadd.f32 %v575, %v634
          %v636 = vpop.f32.mrf.mxu0
          %v637 = vadd.f32 %v575, %v636
          %638 = vmatmul.bf16.gmra.mxu0 %v542
          %v639 = vpop.f32.mrf.mxu0
          %v640 = vadd.f32 %v575, %v639
          %v641 = vpop.f32.mrf.mxu0
          %v642 = vadd.f32 %v575, %v641
          %643 = vmatmul.bf16.gmra.mxu0 %v543
          %v644 = vpop.f32.mrf.mxu0
          %v645 = vadd.f32 %v575, %v644
          %v646 = vpop.f32.mrf.mxu0
          %v647 = vadd.f32 %v575, %v646
          %648 = vmatmul.bf16.gmra.mxu0 %v544
          %v649 = vpop.f32.mrf.mxu0
          %v650 = vadd.f32 %v575, %v649
          %v651 = vpop.f32.mrf.mxu0
          %v652 = vadd.f32 %v575, %v651
          %653 = vmatmul.bf16.gmra.mxu0 %v545
          %v654 = vpop.f32.mrf.mxu0
          %v655 = vadd.f32 %v575, %v654
          %v656 = vpop.f32.mrf.mxu0
          %v657 = vadd.f32 %v575, %v656
          %658 = vmatmul.bf16.gmra.mxu0 %v546
          %v659 = vpop.f32.mrf.mxu0
          %v660 = vadd.f32 %v575, %v659
          %v661 = vpop.f32.mrf.mxu0
          %v662 = vadd.f32 %v575, %v661
          %663 = vmatmul.bf16.gmra.mxu0 %v547
          %v664 = vpop.f32.mrf.mxu0
          %v665 = vadd.f32 %v575, %v664
          %v666 = vpop.f32.mrf.mxu0
          %v667 = vadd.f32 %v575, %v666
          %668 = vmatmul.bf16.gmra.mxu0 %v548
          %v669 = vpop.f32.mrf.mxu0
          %v670 = vadd.f32 %v575, %v669
          %v671 = vpop.f32.mrf.mxu0
          %v672 = vadd.f32 %v575, %v671
          %673 = vmatmul.bf16.gmra.mxu0 %v549
          %v674 = vpop.f32.mrf.mxu0
          %v675 = vadd.f32 %v575, %v674
          %v676 = vpop.f32.mrf.mxu0
          %v677 = vadd.f32 %v575, %v676
          %678 = vmatmul.bf16.gmra.mxu0 %v550
          %v679 = vpop.f32.mrf.mxu0
          %v680 = vadd.f32 %v575, %v679
          %v681 = vpop.f32.mrf.mxu0
          %v682 = vadd.f32 %v575, %v681
          %683 = vmatmul.bf16.gmra.mxu0 %v551
          %v684 = vpop.f32.mrf.mxu0
          %v685 = vadd.f32 %v575, %v684
          %v686 = vpop.f32.mrf.mxu0
          %v687 = vadd.f32 %v575, %v686
          %688 = vmatmul.bf16.gmra.mxu0 %v552
          %v689 = vpop.f32.mrf.mxu0
          %v690 = vadd.f32 %v575, %v689
          %v691 = vpop.f32.mrf.mxu0
          %v692 = vadd.f32 %v575, %v691
          %693 = vmatmul.bf16.gmra.mxu0 %v553
          %v694 = vpop.f32.mrf.mxu0
          %v695 = vadd.f32 %v575, %v694
          %v696 = vpop.f32.mrf.mxu0
          %v697 = vadd.f32 %v575, %v696
          %698 = vmatmul.bf16.gmra.mxu0 %v554
          %v699 = vpop.f32.mrf.mxu0
          %v700 = vadd.f32 %v575, %v699
          %v701 = vpop.f32.mrf.mxu0
          %v702 = vadd.f32 %v575, %v701
          %703 = vmatmul.bf16.gmra.mxu0 %v555
          %v704 = vpop.f32.mrf.mxu0
          %v705 = vadd.f32 %v575, %v704
          %v706 = vpop.f32.mrf.mxu0
          %v707 = vadd.f32 %v575, %v706
          %708 = vmatmul.bf16.gmra.mxu0 %v556
          %v709 = vpop.f32.mrf.mxu0
          %v710 = vadd.f32 %v575, %v709
          %v711 = vpop.f32.mrf.mxu0
          %v712 = vadd.f32 %v575, %v711
          %713 = vdwg.mxu0
          %v714 = vpack.c.bf16 %v635, %v635
          %v715 = vpack.c.bf16 %v637, %v637
          %v716 = vpack.c.bf16 %v640, %v640
          %v717 = vpack.c.bf16 %v642, %v642
          %v718 = vpack.c.bf16 %v645, %v645
          %v719 = vpack.c.bf16 %v647, %v647
          %v720 = vpack.c.bf16 %v650, %v650
          %v721 = vpack.c.bf16 %v652, %v652
          %v722 = vpack.c.bf16 %v655, %v655
          %v723 = vpack.c.bf16 %v657, %v657
          %v724 = vpack.c.bf16 %v660, %v660
          %v725 = vpack.c.bf16 %v662, %v662
          %v726 = vpack.c.bf16 %v665, %v665
          %v727 = vpack.c.bf16 %v667, %v667
          %v728 = vpack.c.bf16 %v670, %v670
          %v729 = vpack.c.bf16 %v672, %v672
          %v730 = vpack.c.bf16 %v675, %v675
          %v731 = vpack.c.bf16 %v677, %v677
          %v732 = vpack.c.bf16 %v680, %v680
          %v733 = vpack.c.bf16 %v682, %v682
          %v734 = vpack.c.bf16 %v685, %v685
          %v735 = vpack.c.bf16 %v687, %v687
          %v736 = vpack.c.bf16 %v690, %v690
          %v737 = vpack.c.bf16 %v692, %v692
          %v738 = vpack.c.bf16 %v695, %v695
          %v739 = vpack.c.bf16 %v697, %v697
          %v740 = vpack.c.bf16 %v700, %v700
          %v741 = vpack.c.bf16 %v702, %v702
          %v742 = vpack.c.bf16 %v705, %v705
          %v743 = vpack.c.bf16 %v707, %v707
          %v744 = vpack.c.bf16 %v710, %v710
          %v745 = vpack.c.bf16 %v712, %v712
          %746 = vst [vmem:[#allocation5] sm:$0xf] %v714
          %747 = vst [vmem:[#allocation5 + $0x4] sm:$0xf] %v715
          %748 = vst [vmem:[#allocation5 + $0x8] sm:$0xf] %v716
          %749 = vst [vmem:[#allocation5 + $0xc] sm:$0xf] %v717
          %750 = vst [vmem:[#allocation5 + $0x10] sm:$0xf] %v718
          %751 = vst [vmem:[#allocation5 + $0x14] sm:$0xf] %v719
          %752 = vst [vmem:[#allocation5 + $0x18] sm:$0xf] %v720
          %753 = vst [vmem:[#allocation5 + $0x1c] sm:$0xf] %v721
          %754 = vst [vmem:[#allocation5 + $0x20] sm:$0xf] %v722
          %755 = vst [vmem:[#allocation5 + $0x24] sm:$0xf] %v723
          %756 = vst [vmem:[#allocation5 + $0x28] sm:$0xf] %v724
          %757 = vst [vmem:[#allocation5 + $0x2c] sm:$0xf] %v725
          %758 = vst [vmem:[#allocation5 + $0x30] sm:$0xf] %v726
          %759 = vst [vmem:[#allocation5 + $0x34] sm:$0xf] %v727
          %760 = vst [vmem:[#allocation5 + $0x38] sm:$0xf] %v728
          %761 = vst [vmem:[#allocation5 + $0x3c] sm:$0xf] %v729
          %762 = vst [vmem:[#allocation5 + $0x40] sm:$0xf] %v730
          %763 = vst [vmem:[#allocation5 + $0x44] sm:$0xf] %v731
          %764 = vst [vmem:[#allocation5 + $0x48] sm:$0xf] %v732
          %765 = vst [vmem:[#allocation5 + $0x4c] sm:$0xf] %v733
          %766 = vst [vmem:[#allocation5 + $0x50] sm:$0xf] %v734
          %767 = vst [vmem:[#allocation5 + $0x54] sm:$0xf] %v735
          %768 = vst [vmem:[#allocation5 + $0x58] sm:$0xf] %v736
          %769 = vst [vmem:[#allocation5 + $0x5c] sm:$0xf] %v737
          %770 = vst [vmem:[#allocation5 + $0x60] sm:$0xf] %v738
          %771 = vst [vmem:[#allocation5 + $0x64] sm:$0xf] %v739
          %772 = vst [vmem:[#allocation5 + $0x68] sm:$0xf] %v740
          %773 = vst [vmem:[#allocation5 + $0x6c] sm:$0xf] %v741
          %774 = vst [vmem:[#allocation5 + $0x70] sm:$0xf] %v742
          %775 = vst [vmem:[#allocation5 + $0x74] sm:$0xf] %v743
          %776 = vst [vmem:[#allocation5 + $0x78] sm:$0xf] %v744
          %777 = vst [vmem:[#allocation5 + $0x7c] sm:$0xf] %v745
        $region68: #{tpu_custom_call.1} parent=47 // pred_fallthru
          _
        %v778 = vld [vmem:[%s358] sm:$0xff]
        %v779 = vld [vmem:[%s358 + $0x8] sm:$0xff]
        %v780 = vld [vmem:[%s358 + $0x10] sm:$0xff]
        %v781 = vld [vmem:[%s358 + $0x18] sm:$0xff]
        %v782 = vld [vmem:[%s358 + $0x20] sm:$0xff]
        %v783 = vld [vmem:[%s358 + $0x28] sm:$0xff]
        %v784 = vld [vmem:[%s358 + $0x30] sm:$0xff]
        %v785 = vld [vmem:[%s358 + $0x38] sm:$0xff]
        %v786 = vld [vmem:[%s358 + $0x40] sm:$0xff]
        %v787 = vld [vmem:[%s358 + $0x48] sm:$0xff]
        %v788 = vld [vmem:[%s358 + $0x50] sm:$0xff]
        %v789 = vld [vmem:[%s358 + $0x58] sm:$0xff]
        %v790 = vld [vmem:[%s358 + $0x60] sm:$0xff]
        %v791 = vld [vmem:[%s358 + $0x68] sm:$0xff]
        %v792 = vld [vmem:[%s358 + $0x70] sm:$0xff]
        %v793 = vld [vmem:[%s358 + $0x78] sm:$0xff]
        %v794 = vld [vmem:[%s358 + $0x80] sm:$0xff]
        %v795 = vld [vmem:[%s358 + $0x88] sm:$0xff]
        %v796 = vld [vmem:[%s358 + $0x90] sm:$0xff]
        %v797 = vld [vmem:[%s358 + $0x98] sm:$0xff]
        %v798 = vld [vmem:[%s358 + $0xa0] sm:$0xff]
        %v799 = vld [vmem:[%s358 + $0xa8] sm:$0xff]
        %v800 = vld [vmem:[%s358 + $0xb0] sm:$0xff]
        %v801 = vld [vmem:[%s358 + $0xb8] sm:$0xff]
        %v802 = vld [vmem:[%s358 + $0xc0] sm:$0xff]
        %v803 = vld [vmem:[%s358 + $0xc8] sm:$0xff]
        %v804 = vld [vmem:[%s358 + $0xd0] sm:$0xff]
        %v805 = vld [vmem:[%s358 + $0xd8] sm:$0xff]
        %v806 = vld [vmem:[%s358 + $0xe0] sm:$0xff]
        %v807 = vld [vmem:[%s358 + $0xe8] sm:$0xff]
        %v808 = vld [vmem:[%s358 + $0xf0] sm:$0xff]
        %v809 = vld [vmem:[%s358 + $0xf8] sm:$0xff]
        %v810 = vpack.c.bf16 %v779, %v778
        %v811 = vpack.c.bf16 %v781, %v780
        %v812 = vpack.c.bf16 %v783, %v782
        %v813 = vpack.c.bf16 %v785, %v784
        %v814 = vpack.c.bf16 %v787, %v786
        %v815 = vpack.c.bf16 %v789, %v788
        %v816 = vpack.c.bf16 %v791, %v790
        %v817 = vpack.c.bf16 %v793, %v792
        %v818 = vpack.c.bf16 %v795, %v794
        %v819 = vpack.c.bf16 %v797, %v796
        %v820 = vpack.c.bf16 %v799, %v798
        %v821 = vpack.c.bf16 %v801, %v800
        %v822 = vpack.c.bf16 %v803, %v802
        %v823 = vpack.c.bf16 %v805, %v804
        %v824 = vpack.c.bf16 %v807, %v806
        %v825 = vpack.c.bf16 %v809, %v808
        %v826 = vld [vmem:[#allocation5] sm:$0xf]
        %v827 = vld [vmem:[#allocation5 + $0x4] sm:$0xf]
        %v828 = vld [vmem:[#allocation5 + $0x8] sm:$0xf]
        %v829 = vld [vmem:[#allocation5 + $0xc] sm:$0xf]
        %v830 = vld [vmem:[#allocation5 + $0x10] sm:$0xf]
        %v831 = vld [vmem:[#allocation5 + $0x14] sm:$0xf]
        %v832 = vld [vmem:[#allocation5 + $0x18] sm:$0xf]
        %v833 = vld [vmem:[#allocation5 + $0x1c] sm:$0xf]
        %v834 = vld [vmem:[#allocation5 + $0x20] sm:$0xf]
        %v835 = vld [vmem:[#allocation5 + $0x24] sm:$0xf]
        %v836 = vld [vmem:[#allocation5 + $0x28] sm:$0xf]
        %v837 = vld [vmem:[#allocation5 + $0x2c] sm:$0xf]
        %v838 = vld [vmem:[#allocation5 + $0x30] sm:$0xf]
        %v839 = vld [vmem:[#allocation5 + $0x34] sm:$0xf]
        %v840 = vld [vmem:[#allocation5 + $0x38] sm:$0xf]
        %v841 = vld [vmem:[#allocation5 + $0x3c] sm:$0xf]
        %v842 = vld [vmem:[#allocation5 + $0x40] sm:$0xf]
        %v843 = vld [vmem:[#allocation5 + $0x44] sm:$0xf]
        %v844 = vld [vmem:[#allocation5 + $0x48] sm:$0xf]
        %v845 = vld [vmem:[#allocation5 + $0x4c] sm:$0xf]
        %v846 = vld [vmem:[#allocation5 + $0x50] sm:$0xf]
        %v847 = vld [vmem:[#allocation5 + $0x54] sm:$0xf]
        %v848 = vld [vmem:[#allocation5 + $0x58] sm:$0xf]
        %v849 = vld [vmem:[#allocation5 + $0x5c] sm:$0xf]
        %v850 = vld [vmem:[#allocation5 + $0x60] sm:$0xf]
        %v851 = vld [vmem:[#allocation5 + $0x64] sm:$0xf]
        %v852 = vld [vmem:[#allocation5 + $0x68] sm:$0xf]
        %v853 = vld [vmem:[#allocation5 + $0x6c] sm:$0xf]
        %v854 = vld [vmem:[#allocation5 + $0x70] sm:$0xf]
        %v855 = vld [vmem:[#allocation5 + $0x74] sm:$0xf]
        %v856 = vld [vmem:[#allocation5 + $0x78] sm:$0xf]
        %v857 = vld [vmem:[#allocation5 + $0x7c] sm:$0xf]
        %v890 = vunpack.c.l.b16 %v826
        %v891 = vunpack.c.l.b16 %v827
        %v892 = vunpack.c.l.b16 %v828
        %v893 = vunpack.c.l.b16 %v829
        %v894 = vunpack.c.l.b16 %v830
        %v895 = vunpack.c.l.b16 %v831
        %v896 = vunpack.c.l.b16 %v832
        %v897 = vunpack.c.l.b16 %v833
        %v898 = vunpack.c.l.b16 %v834
        %v899 = vunpack.c.l.b16 %v835
        %v900 = vunpack.c.l.b16 %v836
        %v901 = vunpack.c.l.b16 %v837
        %v902 = vunpack.c.l.b16 %v838
        %v903 = vunpack.c.l.b16 %v839
        %v904 = vunpack.c.l.b16 %v840
        %v905 = vunpack.c.l.b16 %v841
        %v906 = vunpack.c.l.b16 %v842
        %v907 = vunpack.c.l.b16 %v843
        %v908 = vunpack.c.l.b16 %v844
        %v909 = vunpack.c.l.b16 %v845
        %v910 = vunpack.c.l.b16 %v846
        %v911 = vunpack.c.l.b16 %v847
        %v912 = vunpack.c.l.b16 %v848
        %v913 = vunpack.c.l.b16 %v849
        %v914 = vunpack.c.l.b16 %v850
        %v915 = vunpack.c.l.b16 %v851
        %v916 = vunpack.c.l.b16 %v852
        %v917 = vunpack.c.l.b16 %v853
        %v918 = vunpack.c.l.b16 %v854
        %v919 = vunpack.c.l.b16 %v855
        %v920 = vunpack.c.l.b16 %v856
        %v921 = vunpack.c.l.b16 %v857
        %v922 = vpack.c.b16 %v891, %v890
        %v923 = vpack.c.b16 %v893, %v892
        %v924 = vpack.c.b16 %v895, %v894
        %v925 = vpack.c.b16 %v897, %v896
        %v926 = vpack.c.b16 %v899, %v898
        %v927 = vpack.c.b16 %v901, %v900
        %v928 = vpack.c.b16 %v903, %v902
        %v929 = vpack.c.b16 %v905, %v904
        %v930 = vpack.c.b16 %v907, %v906
        %v931 = vpack.c.b16 %v909, %v908
        %v932 = vpack.c.b16 %v911, %v910
        %v933 = vpack.c.b16 %v913, %v912
        %v934 = vpack.c.b16 %v915, %v914
        %v935 = vpack.c.b16 %v917, %v916
        %v936 = vpack.c.b16 %v919, %v918
        %v937 = vpack.c.b16 %v921, %v920
        %954 = vmatpush.bf16.xpose.msra.mxu0 %v817
        %955 = vmatpush.bf16.xpose.msra.mxu0 %v816
        %956 = vmatpush.bf16.xpose.msra.mxu0 %v815
        %957 = vmatpush.bf16.xpose.msra.mxu0 %v814
        %958 = vmatpush.bf16.xpose.msra.mxu0 %v813
        %959 = vmatpush.bf16.xpose.msra.mxu0 %v812
        %960 = vmatpush.bf16.xpose.msra.mxu0 %v811
        %961 = vmatpush.bf16.xpose.msra.mxu0 %v810
        %962 = vmatmul.bf16.gmra.mxu0 %v922
        %v963 = vpop.f32.mrf.mxu0
        %v964 = vadd.f32 0.0, %v963
        %v965 = vpop.f32.mrf.mxu0
        %v966 = vadd.f32 0.0, %v965
        %967 = vmatmul.bf16.gmra.mxu0 %v923
        %v968 = vpop.f32.mrf.mxu0
        %v969 = vadd.f32 0.0, %v968
        %v970 = vpop.f32.mrf.mxu0
        %v971 = vadd.f32 0.0, %v970
        %972 = vmatmul.bf16.gmra.mxu0 %v924
        %v973 = vpop.f32.mrf.mxu0
        %v974 = vadd.f32 0.0, %v973
        %v975 = vpop.f32.mrf.mxu0
        %v976 = vadd.f32 0.0, %v975
        %977 = vmatmul.bf16.gmra.mxu0 %v925
        %v978 = vpop.f32.mrf.mxu0
        %v979 = vadd.f32 0.0, %v978
        %v980 = vpop.f32.mrf.mxu0
        %v981 = vadd.f32 0.0, %v980
        %982 = vmatmul.bf16.gmra.mxu0 %v926
        %v983 = vpop.f32.mrf.mxu0
        %v984 = vadd.f32 0.0, %v983
        %v985 = vpop.f32.mrf.mxu0
        %v986 = vadd.f32 0.0, %v985
        %987 = vmatmul.bf16.gmra.mxu0 %v927
        %v988 = vpop.f32.mrf.mxu0
        %v989 = vadd.f32 0.0, %v988
        %v990 = vpop.f32.mrf.mxu0
        %v991 = vadd.f32 0.0, %v990
        %992 = vmatmul.bf16.gmra.mxu0 %v928
        %v993 = vpop.f32.mrf.mxu0
        %v994 = vadd.f32 0.0, %v993
        %v995 = vpop.f32.mrf.mxu0
        %v996 = vadd.f32 0.0, %v995
        %997 = vmatmul.bf16.gmra.mxu0 %v929
        %v998 = vpop.f32.mrf.mxu0
        %v999 = vadd.f32 0.0, %v998
        %v1000 = vpop.f32.mrf.mxu0
        %v1001 = vadd.f32 0.0, %v1000
        %1002 = vmatmul.bf16.gmra.mxu0 %v930
        %v1003 = vpop.f32.mrf.mxu0
        %v1004 = vadd.f32 0.0, %v1003
        %v1005 = vpop.f32.mrf.mxu0
        %v1006 = vadd.f32 0.0, %v1005
        %1007 = vmatmul.bf16.gmra.mxu0 %v931
        %v1008 = vpop.f32.mrf.mxu0
        %v1009 = vadd.f32 0.0, %v1008
        %v1010 = vpop.f32.mrf.mxu0
        %v1011 = vadd.f32 0.0, %v1010
        %1012 = vmatmul.bf16.gmra.mxu0 %v932
        %v1013 = vpop.f32.mrf.mxu0
        %v1014 = vadd.f32 0.0, %v1013
        %v1015 = vpop.f32.mrf.mxu0
        %v1016 = vadd.f32 0.0, %v1015
        %1017 = vmatmul.bf16.gmra.mxu0 %v933
        %v1018 = vpop.f32.mrf.mxu0
        %v1019 = vadd.f32 0.0, %v1018
        %v1020 = vpop.f32.mrf.mxu0
        %v1021 = vadd.f32 0.0, %v1020
        %1022 = vmatmul.bf16.gmra.mxu0 %v934
        %v1023 = vpop.f32.mrf.mxu0
        %v1024 = vadd.f32 0.0, %v1023
        %v1025 = vpop.f32.mrf.mxu0
        %v1026 = vadd.f32 0.0, %v1025
        %1027 = vmatmul.bf16.gmra.mxu0 %v935
        %v1028 = vpop.f32.mrf.mxu0
        %v1029 = vadd.f32 0.0, %v1028
        %v1030 = vpop.f32.mrf.mxu0
        %v1031 = vadd.f32 0.0, %v1030
        %1032 = vmatmul.bf16.gmra.mxu0 %v936
        %v1033 = vpop.f32.mrf.mxu0
        %v1034 = vadd.f32 0.0, %v1033
        %v1035 = vpop.f32.mrf.mxu0
        %v1036 = vadd.f32 0.0, %v1035
        %1037 = vmatmul.bf16.gmra.mxu0 %v937
        %v1038 = vpop.f32.mrf.mxu0
        %v1039 = vadd.f32 0.0, %v1038
        %v1040 = vpop.f32.mrf.mxu0
        %v1041 = vadd.f32 0.0, %v1040
        %1042 = vdwg.mxu0
        %1043 = vmatpush.bf16.xpose.msra.mxu0 %v825
        %1044 = vmatpush.bf16.xpose.msra.mxu0 %v824
        %1045 = vmatpush.bf16.xpose.msra.mxu0 %v823
        %1046 = vmatpush.bf16.xpose.msra.mxu0 %v822
        %1047 = vmatpush.bf16.xpose.msra.mxu0 %v821
        %1048 = vmatpush.bf16.xpose.msra.mxu0 %v820
        %1049 = vmatpush.bf16.xpose.msra.mxu0 %v819
        %1050 = vmatpush.bf16.xpose.msra.mxu0 %v818
        %1051 = vmatmul.bf16.gmra.mxu0 %v922
        %v1052 = vpop.f32.mrf.mxu0
        %v1053 = vadd.f32 0.0, %v1052
        %v1054 = vpop.f32.mrf.mxu0
        %v1055 = vadd.f32 0.0, %v1054
        %1056 = vmatmul.bf16.gmra.mxu0 %v923
        %v1057 = vpop.f32.mrf.mxu0
        %v1058 = vadd.f32 0.0, %v1057
        %v1059 = vpop.f32.mrf.mxu0
        %v1060 = vadd.f32 0.0, %v1059
        %1061 = vmatmul.bf16.gmra.mxu0 %v924
        %v1062 = vpop.f32.mrf.mxu0
        %v1063 = vadd.f32 0.0, %v1062
        %v1064 = vpop.f32.mrf.mxu0
        %v1065 = vadd.f32 0.0, %v1064
        %1066 = vmatmul.bf16.gmra.mxu0 %v925
        %v1067 = vpop.f32.mrf.mxu0
        %v1068 = vadd.f32 0.0, %v1067
        %v1069 = vpop.f32.mrf.mxu0
        %v1070 = vadd.f32 0.0, %v1069
        %1071 = vmatmul.bf16.gmra.mxu0 %v926
        %v1072 = vpop.f32.mrf.mxu0
        %v1073 = vadd.f32 0.0, %v1072
        %v1074 = vpop.f32.mrf.mxu0
        %v1075 = vadd.f32 0.0, %v1074
        %1076 = vmatmul.bf16.gmra.mxu0 %v927
        %v1077 = vpop.f32.mrf.mxu0
        %v1078 = vadd.f32 0.0, %v1077
        %v1079 = vpop.f32.mrf.mxu0
        %v1080 = vadd.f32 0.0, %v1079
        %1081 = vmatmul.bf16.gmra.mxu0 %v928
        %v1082 = vpop.f32.mrf.mxu0
        %v1083 = vadd.f32 0.0, %v1082
        %v1084 = vpop.f32.mrf.mxu0
        %v1085 = vadd.f32 0.0, %v1084
        %1086 = vmatmul.bf16.gmra.mxu0 %v929
        %v1087 = vpop.f32.mrf.mxu0
        %v1088 = vadd.f32 0.0, %v1087
        %v1089 = vpop.f32.mrf.mxu0
        %v1090 = vadd.f32 0.0, %v1089
        %1091 = vmatmul.bf16.gmra.mxu0 %v930
        %v1092 = vpop.f32.mrf.mxu0
        %v1093 = vadd.f32 0.0, %v1092
        %v1094 = vpop.f32.mrf.mxu0
        %v1095 = vadd.f32 0.0, %v1094
        %1096 = vmatmul.bf16.gmra.mxu0 %v931
        %v1097 = vpop.f32.mrf.mxu0
        %v1098 = vadd.f32 0.0, %v1097
        %v1099 = vpop.f32.mrf.mxu0
        %v1100 = vadd.f32 0.0, %v1099
        %1101 = vmatmul.bf16.gmra.mxu0 %v932
        %v1102 = vpop.f32.mrf.mxu0
        %v1103 = vadd.f32 0.0, %v1102
        %v1104 = vpop.f32.mrf.mxu0
        %v1105 = vadd.f32 0.0, %v1104
        %1106 = vmatmul.bf16.gmra.mxu0 %v933
        %v1107 = vpop.f32.mrf.mxu0
        %v1108 = vadd.f32 0.0, %v1107
        %v1109 = vpop.f32.mrf.mxu0
        %v1110 = vadd.f32 0.0, %v1109
        %1111 = vmatmul.bf16.gmra.mxu0 %v934
        %v1112 = vpop.f32.mrf.mxu0
        %v1113 = vadd.f32 0.0, %v1112
        %v1114 = vpop.f32.mrf.mxu0
        %v1115 = vadd.f32 0.0, %v1114
        %1116 = vmatmul.bf16.gmra.mxu0 %v935
        %v1117 = vpop.f32.mrf.mxu0
        %v1118 = vadd.f32 0.0, %v1117
        %v1119 = vpop.f32.mrf.mxu0
        %v1120 = vadd.f32 0.0, %v1119
        %1121 = vmatmul.bf16.gmra.mxu0 %v936
        %v1122 = vpop.f32.mrf.mxu0
        %v1123 = vadd.f32 0.0, %v1122
        %v1124 = vpop.f32.mrf.mxu0
        %v1125 = vadd.f32 0.0, %v1124
        %1126 = vmatmul.bf16.gmra.mxu0 %v937
        %v1127 = vpop.f32.mrf.mxu0
        %v1128 = vadd.f32 0.0, %v1127
        %v1129 = vpop.f32.mrf.mxu0
        %v1130 = vadd.f32 0.0, %v1129
        %1131 = vdwg.mxu0
        %s1132 = smul.u32 %s37, 256
        %v1133 = vlaneseq
        %v1134 = vand.u32 %v1133, 127
        %v1135 = vadd.s32 %v1134, 128
        %v1136 = vstv %s1132
        %v1137 = vadd.s32 %v1136, %v1134
        %v1138 = vadd.s32 %v1136, %v1135
        %vm1139 = vcmp.lt.s32.totalorder %v1137, 384
        %vm1140 = vcmp.lt.s32.totalorder %v1138, 384
        %v1141 = vsel %vm1139, 1, 0
        %v1142 = vsel %vm1140, 1, 0
        %vm1143 = vcmp.eq.s32.totalorder %v1141, 1
        %vm1144 = vcmp.eq.s32.totalorder %v1142, 1
        %v1145 = vsel %vm1143, %v964, -1e+30
        %v1146 = vsel %vm1144, %v1053, -1e+30
        %v1147 = vsel %vm1143, %v966, -1e+30
        %v1148 = vsel %vm1144, %v1055, -1e+30
        %v1149 = vsel %vm1143, %v969, -1e+30
        %v1150 = vsel %vm1144, %v1058, -1e+30
        %v1151 = vsel %vm1143, %v971, -1e+30
        %v1152 = vsel %vm1144, %v1060, -1e+30
        %v1153 = vsel %vm1143, %v974, -1e+30
        %v1154 = vsel %vm1144, %v1063, -1e+30
        %v1155 = vsel %vm1143, %v976, -1e+30
        %v1156 = vsel %vm1144, %v1065, -1e+30
        %v1157 = vsel %vm1143, %v979, -1e+30
        %v1158 = vsel %vm1144, %v1068, -1e+30
        %v1159 = vsel %vm1143, %v981, -1e+30
        %v1160 = vsel %vm1144, %v1070, -1e+30
        %v1161 = vsel %vm1143, %v984, -1e+30
        %v1162 = vsel %vm1144, %v1073, -1e+30
        %v1163 = vsel %vm1143, %v986, -1e+30
        %v1164 = vsel %vm1144, %v1075, -1e+30
        %v1165 = vsel %vm1143, %v989, -1e+30
        %v1166 = vsel %vm1144, %v1078, -1e+30
        %v1167 = vsel %vm1143, %v991, -1e+30
        %v1168 = vsel %vm1144, %v1080, -1e+30
        %v1169 = vsel %vm1143, %v994, -1e+30
        %v1170 = vsel %vm1144, %v1083, -1e+30
        %v1171 = vsel %vm1143, %v996, -1e+30
        %v1172 = vsel %vm1144, %v1085, -1e+30
        %v1173 = vsel %vm1143, %v999, -1e+30
        %v1174 = vsel %vm1144, %v1088, -1e+30
        %v1175 = vsel %vm1143, %v1001, -1e+30
        %v1176 = vsel %vm1144, %v1090, -1e+30
        %v1177 = vsel %vm1143, %v1004, -1e+30
        %v1178 = vsel %vm1144, %v1093, -1e+30
        %v1179 = vsel %vm1143, %v1006, -1e+30
        %v1180 = vsel %vm1144, %v1095, -1e+30
        %v1181 = vsel %vm1143, %v1009, -1e+30
        %v1182 = vsel %vm1144, %v1098, -1e+30
        %v1183 = vsel %vm1143, %v1011, -1e+30
        %v1184 = vsel %vm1144, %v1100, -1e+30
        %v1185 = vsel %vm1143, %v1014, -1e+30
        %v1186 = vsel %vm1144, %v1103, -1e+30
        %v1187 = vsel %vm1143, %v1016, -1e+30
        %v1188 = vsel %vm1144, %v1105, -1e+30
        %v1189 = vsel %vm1143, %v1019, -1e+30
        %v1190 = vsel %vm1144, %v1108, -1e+30
        %v1191 = vsel %vm1143, %v1021, -1e+30
        %v1192 = vsel %vm1144, %v1110, -1e+30
        %v1193 = vsel %vm1143, %v1024, -1e+30
        %v1194 = vsel %vm1144, %v1113, -1e+30
        %v1195 = vsel %vm1143, %v1026, -1e+30
        %v1196 = vsel %vm1144, %v1115, -1e+30
        %v1197 = vsel %vm1143, %v1029, -1e+30
        %v1198 = vsel %vm1144, %v1118, -1e+30
        %v1199 = vsel %vm1143, %v1031, -1e+30
        %v1200 = vsel %vm1144, %v1120, -1e+30
        %v1201 = vsel %vm1143, %v1034, -1e+30
        %v1202 = vsel %vm1144, %v1123, -1e+30
        %v1203 = vsel %vm1143, %v1036, -1e+30
        %v1204 = vsel %vm1144, %v1125, -1e+30
        %v1205 = vsel %vm1143, %v1039, -1e+30
        %v1206 = vsel %vm1144, %v1128, -1e+30
        %v1207 = vsel %vm1143, %v1041, -1e+30
        %v1208 = vsel %vm1144, %v1130, -1e+30
        %v1209 = vld [vmem:[#allocation2] sm:$0xff]
        %v1210 = vld [vmem:[#allocation2 + $0x8] sm:$0xff]
        %v1211 = vld [vmem:[#allocation2 + $0x10] sm:$0xff]
        %v1212 = vld [vmem:[#allocation2 + $0x18] sm:$0xff]
        %v1213 = vld [vmem:[#allocation2 + $0x20] sm:$0xff]
        %v1214 = vld [vmem:[#allocation2 + $0x28] sm:$0xff]
        %v1215 = vld [vmem:[#allocation2 + $0x30] sm:$0xff]
        %v1216 = vld [vmem:[#allocation2 + $0x38] sm:$0xff]
        %v1217 = vld [vmem:[#allocation2 + $0x40] sm:$0xff]
        %v1218 = vld [vmem:[#allocation2 + $0x48] sm:$0xff]
        %v1219 = vld [vmem:[#allocation2 + $0x50] sm:$0xff]
        %v1220 = vld [vmem:[#allocation2 + $0x58] sm:$0xff]
        %v1221 = vld [vmem:[#allocation2 + $0x60] sm:$0xff]
        %v1222 = vld [vmem:[#allocation2 + $0x68] sm:$0xff]
        %v1223 = vld [vmem:[#allocation2 + $0x70] sm:$0xff]
        %v1224 = vld [vmem:[#allocation2 + $0x78] sm:$0xff]
        %v1225 = vld [vmem:[#allocation2 + $0x80] sm:$0xff]
        %v1226 = vld [vmem:[#allocation2 + $0x88] sm:$0xff]
        %v1227 = vld [vmem:[#allocation2 + $0x90] sm:$0xff]
        %v1228 = vld [vmem:[#allocation2 + $0x98] sm:$0xff]
        %v1229 = vld [vmem:[#allocation2 + $0xa0] sm:$0xff]
        %v1230 = vld [vmem:[#allocation2 + $0xa8] sm:$0xff]
        %v1231 = vld [vmem:[#allocation2 + $0xb0] sm:$0xff]
        %v1232 = vld [vmem:[#allocation2 + $0xb8] sm:$0xff]
        %v1233 = vld [vmem:[#allocation2 + $0xc0] sm:$0xff]
        %v1234 = vld [vmem:[#allocation2 + $0xc8] sm:$0xff]
        %v1235 = vld [vmem:[#allocation2 + $0xd0] sm:$0xff]
        %v1236 = vld [vmem:[#allocation2 + $0xd8] sm:$0xff]
        %v1237 = vld [vmem:[#allocation2 + $0xe0] sm:$0xff]
        %v1238 = vld [vmem:[#allocation2 + $0xe8] sm:$0xff]
        %v1239 = vld [vmem:[#allocation2 + $0xf0] sm:$0xff]
        %v1240 = vld [vmem:[#allocation2 + $0xf8] sm:$0xff]
        %v1241 = vmax.f32 %v1145, %v1146
        %1242 = vmax.xlane.f32.xlu0 %v1241
        %v1243 = vpop.xlane.xlu0 %1242
        %v1244 = vmax.f32 %v1147, %v1148
        %1245 = vmax.xlane.f32.xlu0 %v1244
        %v1246 = vpop.xlane.xlu0 %1245
        %v1247 = vmax.f32 %v1149, %v1150
        %1248 = vmax.xlane.f32.xlu0 %v1247
        %v1249 = vpop.xlane.xlu0 %1248
        %v1250 = vmax.f32 %v1151, %v1152
        %1251 = vmax.xlane.f32.xlu0 %v1250
        %v1252 = vpop.xlane.xlu0 %1251
        %v1253 = vmax.f32 %v1153, %v1154
        %1254 = vmax.xlane.f32.xlu0 %v1253
        %v1255 = vpop.xlane.xlu0 %1254
        %v1256 = vmax.f32 %v1155, %v1156
        %1257 = vmax.xlane.f32.xlu0 %v1256
        %v1258 = vpop.xlane.xlu0 %1257
        %v1259 = vmax.f32 %v1157, %v1158
        %1260 = vmax.xlane.f32.xlu0 %v1259
        %v1261 = vpop.xlane.xlu0 %1260
        %v1262 = vmax.f32 %v1159, %v1160
        %1263 = vmax.xlane.f32.xlu0 %v1262
        %v1264 = vpop.xlane.xlu0 %1263
        %v1265 = vmax.f32 %v1161, %v1162
        %1266 = vmax.xlane.f32.xlu0 %v1265
        %v1267 = vpop.xlane.xlu0 %1266
        %v1268 = vmax.f32 %v1163, %v1164
        %1269 = vmax.xlane.f32.xlu0 %v1268
        %v1270 = vpop.xlane.xlu0 %1269
        %v1271 = vmax.f32 %v1165, %v1166
        %1272 = vmax.xlane.f32.xlu0 %v1271
        %v1273 = vpop.xlane.xlu0 %1272
        %v1274 = vmax.f32 %v1167, %v1168
        %1275 = vmax.xlane.f32.xlu0 %v1274
        %v1276 = vpop.xlane.xlu0 %1275
        %v1277 = vmax.f32 %v1169, %v1170
        %1278 = vmax.xlane.f32.xlu0 %v1277
        %v1279 = vpop.xlane.xlu0 %1278
        %v1280 = vmax.f32 %v1171, %v1172
        %1281 = vmax.xlane.f32.xlu0 %v1280
        %v1282 = vpop.xlane.xlu0 %1281
        %v1283 = vmax.f32 %v1173, %v1174
        %1284 = vmax.xlane.f32.xlu0 %v1283
        %v1285 = vpop.xlane.xlu0 %1284
        %v1286 = vmax.f32 %v1175, %v1176
        %1287 = vmax.xlane.f32.xlu0 %v1286
        %v1288 = vpop.xlane.xlu0 %1287
        %v1289 = vmax.f32 %v1177, %v1178
        %1290 = vmax.xlane.f32.xlu0 %v1289
        %v1291 = vpop.xlane.xlu0 %1290
        %v1292 = vmax.f32 %v1179, %v1180
        %1293 = vmax.xlane.f32.xlu0 %v1292
        %v1294 = vpop.xlane.xlu0 %1293
        %v1295 = vmax.f32 %v1181, %v1182
        %1296 = vmax.xlane.f32.xlu0 %v1295
        %v1297 = vpop.xlane.xlu0 %1296
        %v1298 = vmax.f32 %v1183, %v1184
        %1299 = vmax.xlane.f32.xlu0 %v1298
        %v1300 = vpop.xlane.xlu0 %1299
        %v1301 = vmax.f32 %v1185, %v1186
        %1302 = vmax.xlane.f32.xlu0 %v1301
        %v1303 = vpop.xlane.xlu0 %1302
        %v1304 = vmax.f32 %v1187, %v1188
        %1305 = vmax.xlane.f32.xlu0 %v1304
        %v1306 = vpop.xlane.xlu0 %1305
        %v1307 = vmax.f32 %v1189, %v1190
        %1308 = vmax.xlane.f32.xlu0 %v1307
        %v1309 = vpop.xlane.xlu0 %1308
        %v1310 = vmax.f32 %v1191, %v1192
        %1311 = vmax.xlane.f32.xlu0 %v1310
        %v1312 = vpop.xlane.xlu0 %1311
        %v1313 = vmax.f32 %v1193, %v1194
        %1314 = vmax.xlane.f32.xlu0 %v1313
        %v1315 = vpop.xlane.xlu0 %1314
        %v1316 = vmax.f32 %v1195, %v1196
        %1317 = vmax.xlane.f32.xlu0 %v1316
        %v1318 = vpop.xlane.xlu0 %1317
        %v1319 = vmax.f32 %v1197, %v1198
        %1320 = vmax.xlane.f32.xlu0 %v1319
        %v1321 = vpop.xlane.xlu0 %1320
        %v1322 = vmax.f32 %v1199, %v1200
        %1323 = vmax.xlane.f32.xlu0 %v1322
        %v1324 = vpop.xlane.xlu0 %1323
        %v1325 = vmax.f32 %v1201, %v1202
        %1326 = vmax.xlane.f32.xlu0 %v1325
        %v1327 = vpop.xlane.xlu0 %1326
        %v1328 = vmax.f32 %v1203, %v1204
        %1329 = vmax.xlane.f32.xlu0 %v1328
        %v1330 = vpop.xlane.xlu0 %1329
        %v1331 = vmax.f32 %v1205, %v1206
        %1332 = vmax.xlane.f32.xlu0 %v1331
        %v1333 = vpop.xlane.xlu0 %1332
        %v1334 = vmax.f32 %v1207, %v1208
        %1335 = vmax.xlane.f32.xlu0 %v1334
        %v1336 = vpop.xlane.xlu0 %1335
        %v1337 = vmax.f32 %v1209, %v1243
        %v1338 = vmax.f32 %v1210, %v1246
        %v1339 = vmax.f32 %v1211, %v1249
        %v1340 = vmax.f32 %v1212, %v1252
        %v1341 = vmax.f32 %v1213, %v1255
        %v1342 = vmax.f32 %v1214, %v1258
        %v1343 = vmax.f32 %v1215, %v1261
        %v1344 = vmax.f32 %v1216, %v1264
        %v1345 = vmax.f32 %v1217, %v1267
        %v1346 = vmax.f32 %v1218, %v1270
        %v1347 = vmax.f32 %v1219, %v1273
        %v1348 = vmax.f32 %v1220, %v1276
        %v1349 = vmax.f32 %v1221, %v1279
        %v1350 = vmax.f32 %v1222, %v1282
        %v1351 = vmax.f32 %v1223, %v1285
        %v1352 = vmax.f32 %v1224, %v1288
        %v1353 = vmax.f32 %v1225, %v1291
        %v1354 = vmax.f32 %v1226, %v1294
        %v1355 = vmax.f32 %v1227, %v1297
        %v1356 = vmax.f32 %v1228, %v1300
        %v1357 = vmax.f32 %v1229, %v1303
        %v1358 = vmax.f32 %v1230, %v1306
        %v1359 = vmax.f32 %v1231, %v1309
        %v1360 = vmax.f32 %v1232, %v1312
        %v1361 = vmax.f32 %v1233, %v1315
        %v1362 = vmax.f32 %v1234, %v1318
        %v1363 = vmax.f32 %v1235, %v1321
        %v1364 = vmax.f32 %v1236, %v1324
        %v1365 = vmax.f32 %v1237, %v1327
        %v1366 = vmax.f32 %v1238, %v1330
        %v1367 = vmax.f32 %v1239, %v1333
        %v1368 = vmax.f32 %v1240, %v1336
        %v1369 = vsub.f32 %v1209, %v1337
        %v1370 = vsub.f32 %v1210, %v1338
        %v1371 = vsub.f32 %v1211, %v1339
        %v1372 = vsub.f32 %v1212, %v1340
        %v1373 = vsub.f32 %v1213, %v1341
        %v1374 = vsub.f32 %v1214, %v1342
        %v1375 = vsub.f32 %v1215, %v1343
        %v1376 = vsub.f32 %v1216, %v1344
        %v1377 = vsub.f32 %v1217, %v1345
        %v1378 = vsub.f32 %v1218, %v1346
        %v1379 = vsub.f32 %v1219, %v1347
        %v1380 = vsub.f32 %v1220, %v1348
        %v1381 = vsub.f32 %v1221, %v1349
        %v1382 = vsub.f32 %v1222, %v1350
        %v1383 = vsub.f32 %v1223, %v1351
        %v1384 = vsub.f32 %v1224, %v1352
        %v1385 = vsub.f32 %v1225, %v1353
        %v1386 = vsub.f32 %v1226, %v1354
        %v1387 = vsub.f32 %v1227, %v1355
        %v1388 = vsub.f32 %v1228, %v1356
        %v1389 = vsub.f32 %v1229, %v1357
        %v1390 = vsub.f32 %v1230, %v1358
        %v1391 = vsub.f32 %v1231, %v1359
        %v1392 = vsub.f32 %v1232, %v1360
        %v1393 = vsub.f32 %v1233, %v1361
        %v1394 = vsub.f32 %v1234, %v1362
        %v1395 = vsub.f32 %v1235, %v1363
        %v1396 = vsub.f32 %v1236, %v1364
        %v1397 = vsub.f32 %v1237, %v1365
        %v1398 = vsub.f32 %v1238, %v1366
        %v1399 = vsub.f32 %v1239, %v1367
        %v1400 = vsub.f32 %v1240, %v1368
        %v1401 = vmul.f32 %v1369, 1.442695
        %v1402 = vpow.pop %v1401
        %v1403 = vmul.f32 %v1370, 1.442695
        %v1404 = vpow.pop %v1403
        %v1405 = vmul.f32 %v1371, 1.442695
        %v1406 = vpow.pop %v1405
        %v1407 = vmul.f32 %v1372, 1.442695
        %v1408 = vpow.pop %v1407
        %v1409 = vmul.f32 %v1373, 1.442695
        %v1410 = vpow.pop %v1409
        %v1411 = vmul.f32 %v1374, 1.442695
        %v1412 = vpow.pop %v1411
        %v1413 = vmul.f32 %v1375, 1.442695
        %v1414 = vpow.pop %v1413
        %v1415 = vmul.f32 %v1376, 1.442695
        %v1416 = vpow.pop %v1415
        %v1417 = vmul.f32 %v1377, 1.442695
        %v1418 = vpow.pop %v1417
        %v1419 = vmul.f32 %v1378, 1.442695
        %v1420 = vpow.pop %v1419
        %v1421 = vmul.f32 %v1379, 1.442695
        %v1422 = vpow.pop %v1421
        %v1423 = vmul.f32 %v1380, 1.442695
        %v1424 = vpow.pop %v1423
        %v1425 = vmul.f32 %v1381, 1.442695
        %v1426 = vpow.pop %v1425
        %v1427 = vmul.f32 %v1382, 1.442695
        %v1428 = vpow.pop %v1427
        %v1429 = vmul.f32 %v1383, 1.442695
        %v1430 = vpow.pop %v1429
        %v1431 = vmul.f32 %v1384, 1.442695
        %v1432 = vpow.pop %v1431
        %v1433 = vmul.f32 %v1385, 1.442695
        %v1434 = vpow.pop %v1433
        %v1435 = vmul.f32 %v1386, 1.442695
        %v1436 = vpow.pop %v1435
        %v1437 = vmul.f32 %v1387, 1.442695
        %v1438 = vpow.pop %v1437
        %v1439 = vmul.f32 %v1388, 1.442695
        %v1440 = vpow.pop %v1439
        %v1441 = vmul.f32 %v1389, 1.442695
        %v1442 = vpow.pop %v1441
        %v1443 = vmul.f32 %v1390, 1.442695
        %v1444 = vpow.pop %v1443
        %v1445 = vmul.f32 %v1391, 1.442695
        %v1446 = vpow.pop %v1445
        %v1447 = vmul.f32 %v1392, 1.442695
        %v1448 = vpow.pop %v1447
        %v1449 = vmul.f32 %v1393, 1.442695
        %v1450 = vpow.pop %v1449
        %v1451 = vmul.f32 %v1394, 1.442695
        %v1452 = vpow.pop %v1451
        %v1453 = vmul.f32 %v1395, 1.442695
        %v1454 = vpow.pop %v1453
        %v1455 = vmul.f32 %v1396, 1.442695
        %v1456 = vpow.pop %v1455
        %v1457 = vmul.f32 %v1397, 1.442695
        %v1458 = vpow.pop %v1457
        %v1459 = vmul.f32 %v1398, 1.442695
        %v1460 = vpow.pop %v1459
        %v1461 = vmul.f32 %v1399, 1.442695
        %v1462 = vpow.pop %v1461
        %v1463 = vmul.f32 %v1400, 1.442695
        %v1464 = vpow.pop %v1463
        %1466 = vset.pattern.permute.xlu0 0
        %1467 = vperm.xlu0 %1466, %v1337
        %v1468 = vpop.permute.xlu0 %1467
        %1471 = vset.pattern.permute.xlu0 0
        %1472 = vperm.xlu0 %1471, %v1338
        %v1473 = vpop.permute.xlu0 %1472
        %1476 = vset.pattern.permute.xlu0 0
        %1477 = vperm.xlu0 %1476, %v1339
        %v1478 = vpop.permute.xlu0 %1477
        %1481 = vset.pattern.permute.xlu0 0
        %1482 = vperm.xlu0 %1481, %v1340
        %v1483 = vpop.permute.xlu0 %1482
        %1486 = vset.pattern.permute.xlu0 0
        %1487 = vperm.xlu0 %1486, %v1341
        %v1488 = vpop.permute.xlu0 %1487
        %1491 = vset.pattern.permute.xlu0 0
        %1492 = vperm.xlu0 %1491, %v1342
        %v1493 = vpop.permute.xlu0 %1492
        %1496 = vset.pattern.permute.xlu0 0
        %1497 = vperm.xlu0 %1496, %v1343
        %v1498 = vpop.permute.xlu0 %1497
        %1501 = vset.pattern.permute.xlu0 0
        %1502 = vperm.xlu0 %1501, %v1344
        %v1503 = vpop.permute.xlu0 %1502
        %1506 = vset.pattern.permute.xlu0 0
        %1507 = vperm.xlu0 %1506, %v1345
        %v1508 = vpop.permute.xlu0 %1507
        %1511 = vset.pattern.permute.xlu0 0
        %1512 = vperm.xlu0 %1511, %v1346
        %v1513 = vpop.permute.xlu0 %1512
        %1516 = vset.pattern.permute.xlu0 0
        %1517 = vperm.xlu0 %1516, %v1347
        %v1518 = vpop.permute.xlu0 %1517
        %1521 = vset.pattern.permute.xlu0 0
        %1522 = vperm.xlu0 %1521, %v1348
        %v1523 = vpop.permute.xlu0 %1522
        %1526 = vset.pattern.permute.xlu0 0
        %1527 = vperm.xlu0 %1526, %v1349
        %v1528 = vpop.permute.xlu0 %1527
        %1531 = vset.pattern.permute.xlu0 0
        %1532 = vperm.xlu0 %1531, %v1350
        %v1533 = vpop.permute.xlu0 %1532
        %1536 = vset.pattern.permute.xlu0 0
        %1537 = vperm.xlu0 %1536, %v1351
        %v1538 = vpop.permute.xlu0 %1537
        %1541 = vset.pattern.permute.xlu0 0
        %1542 = vperm.xlu0 %1541, %v1352
        %v1543 = vpop.permute.xlu0 %1542
        %1546 = vset.pattern.permute.xlu0 0
        %1547 = vperm.xlu0 %1546, %v1353
        %v1548 = vpop.permute.xlu0 %1547
        %1551 = vset.pattern.permute.xlu0 0
        %1552 = vperm.xlu0 %1551, %v1354
        %v1553 = vpop.permute.xlu0 %1552
        %1556 = vset.pattern.permute.xlu0 0
        %1557 = vperm.xlu0 %1556, %v1355
        %v1558 = vpop.permute.xlu0 %1557
        %1561 = vset.pattern.permute.xlu0 0
        %1562 = vperm.xlu0 %1561, %v1356
        %v1563 = vpop.permute.xlu0 %1562
        %1566 = vset.pattern.permute.xlu0 0
        %1567 = vperm.xlu0 %1566, %v1357
        %v1568 = vpop.permute.xlu0 %1567
        %1571 = vset.pattern.permute.xlu0 0
        %1572 = vperm.xlu0 %1571, %v1358
        %v1573 = vpop.permute.xlu0 %1572
        %1576 = vset.pattern.permute.xlu0 0
        %1577 = vperm.xlu0 %1576, %v1359
        %v1578 = vpop.permute.xlu0 %1577
        %1581 = vset.pattern.permute.xlu0 0
        %1582 = vperm.xlu0 %1581, %v1360
        %v1583 = vpop.permute.xlu0 %1582
        %1586 = vset.pattern.permute.xlu0 0
        %1587 = vperm.xlu0 %1586, %v1361
        %v1588 = vpop.permute.xlu0 %1587
        %1591 = vset.pattern.permute.xlu0 0
        %1592 = vperm.xlu0 %1591, %v1362
        %v1593 = vpop.permute.xlu0 %1592
        %1596 = vset.pattern.permute.xlu0 0
        %1597 = vperm.xlu0 %1596, %v1363
        %v1598 = vpop.permute.xlu0 %1597
        %1601 = vset.pattern.permute.xlu0 0
        %1602 = vperm.xlu0 %1601, %v1364
        %v1603 = vpop.permute.xlu0 %1602
        %1606 = vset.pattern.permute.xlu0 0
        %1607 = vperm.xlu0 %1606, %v1365
        %v1608 = vpop.permute.xlu0 %1607
        %1611 = vset.pattern.permute.xlu0 0
        %1612 = vperm.xlu0 %1611, %v1366
        %v1613 = vpop.permute.xlu0 %1612
        %1616 = vset.pattern.permute.xlu0 0
        %1617 = vperm.xlu0 %1616, %v1367
        %v1618 = vpop.permute.xlu0 %1617
        %1621 = vset.pattern.permute.xlu0 0
        %1622 = vperm.xlu0 %1621, %v1368
        %v1623 = vpop.permute.xlu0 %1622
        %v1625 = vsub.f32 %v1145, %v1468
        %v1626 = vsub.f32 %v1146, %v1468
        %v1627 = vsub.f32 %v1147, %v1473
        %v1628 = vsub.f32 %v1148, %v1473
        %v1629 = vsub.f32 %v1149, %v1478
        %v1630 = vsub.f32 %v1150, %v1478
        %v1631 = vsub.f32 %v1151, %v1483
        %v1632 = vsub.f32 %v1152, %v1483
        %v1633 = vsub.f32 %v1153, %v1488
        %v1634 = vsub.f32 %v1154, %v1488
        %v1635 = vsub.f32 %v1155, %v1493
        %v1636 = vsub.f32 %v1156, %v1493
        %v1637 = vsub.f32 %v1157, %v1498
        %v1638 = vsub.f32 %v1158, %v1498
        %v1639 = vsub.f32 %v1159, %v1503
        %v1640 = vsub.f32 %v1160, %v1503
        %v1641 = vsub.f32 %v1161, %v1508
        %v1642 = vsub.f32 %v1162, %v1508
        %v1643 = vsub.f32 %v1163, %v1513
        %v1644 = vsub.f32 %v1164, %v1513
        %v1645 = vsub.f32 %v1165, %v1518
        %v1646 = vsub.f32 %v1166, %v1518
        %v1647 = vsub.f32 %v1167, %v1523
        %v1648 = vsub.f32 %v1168, %v1523
        %v1649 = vsub.f32 %v1169, %v1528
        %v1650 = vsub.f32 %v1170, %v1528
        %v1651 = vsub.f32 %v1171, %v1533
        %v1652 = vsub.f32 %v1172, %v1533
        %v1653 = vsub.f32 %v1173, %v1538
        %v1654 = vsub.f32 %v1174, %v1538
        %v1655 = vsub.f32 %v1175, %v1543
        %v1656 = vsub.f32 %v1176, %v1543
        %v1657 = vsub.f32 %v1177, %v1548
        %v1658 = vsub.f32 %v1178, %v1548
        %v1659 = vsub.f32 %v1179, %v1553
        %v1660 = vsub.f32 %v1180, %v1553
        %v1661 = vsub.f32 %v1181, %v1558
        %v1662 = vsub.f32 %v1182, %v1558
        %v1663 = vsub.f32 %v1183, %v1563
        %v1664 = vsub.f32 %v1184, %v1563
        %v1665 = vsub.f32 %v1185, %v1568
        %v1666 = vsub.f32 %v1186, %v1568
        %v1667 = vsub.f32 %v1187, %v1573
        %v1668 = vsub.f32 %v1188, %v1573
        %v1669 = vsub.f32 %v1189, %v1578
        %v1670 = vsub.f32 %v1190, %v1578
        %v1671 = vsub.f32 %v1191, %v1583
        %v1672 = vsub.f32 %v1192, %v1583
        %v1673 = vsub.f32 %v1193, %v1588
        %v1674 = vsub.f32 %v1194, %v1588
        %v1675 = vsub.f32 %v1195, %v1593
        %v1676 = vsub.f32 %v1196, %v1593
        %v1677 = vsub.f32 %v1197, %v1598
        %v1678 = vsub.f32 %v1198, %v1598
        %v1679 = vsub.f32 %v1199, %v1603
        %v1680 = vsub.f32 %v1200, %v1603
        %v1681 = vsub.f32 %v1201, %v1608
        %v1682 = vsub.f32 %v1202, %v1608
        %v1683 = vsub.f32 %v1203, %v1613
        %v1684 = vsub.f32 %v1204, %v1613
        %v1685 = vsub.f32 %v1205, %v1618
        %v1686 = vsub.f32 %v1206, %v1618
        %v1687 = vsub.f32 %v1207, %v1623
        %v1688 = vsub.f32 %v1208, %v1623
        %v1689 = vmul.f32 %v1625, 1.442695
        %v1690 = vpow.pop %v1689
        %v1691 = vmul.f32 %v1626, 1.442695
        %v1692 = vpow.pop %v1691
        %v1693 = vmul.f32 %v1627, 1.442695
        %v1694 = vpow.pop %v1693
        %v1695 = vmul.f32 %v1628, 1.442695
        %v1696 = vpow.pop %v1695
        %v1697 = vmul.f32 %v1629, 1.442695
        %v1698 = vpow.pop %v1697
        %v1699 = vmul.f32 %v1630, 1.442695
        %v1700 = vpow.pop %v1699
        %v1701 = vmul.f32 %v1631, 1.442695
        %v1702 = vpow.pop %v1701
        %v1703 = vmul.f32 %v1632, 1.442695
        %v1704 = vpow.pop %v1703
        %v1705 = vmul.f32 %v1633, 1.442695
        %v1706 = vpow.pop %v1705
        %v1707 = vmul.f32 %v1634, 1.442695
        %v1708 = vpow.pop %v1707
        %v1709 = vmul.f32 %v1635, 1.442695
        %v1710 = vpow.pop %v1709
        %v1711 = vmul.f32 %v1636, 1.442695
        %v1712 = vpow.pop %v1711
        %v1713 = vmul.f32 %v1637, 1.442695
        %v1714 = vpow.pop %v1713
        %v1715 = vmul.f32 %v1638, 1.442695
        %v1716 = vpow.pop %v1715
        %v1717 = vmul.f32 %v1639, 1.442695
        %v1718 = vpow.pop %v1717
        %v1719 = vmul.f32 %v1640, 1.442695
        %v1720 = vpow.pop %v1719
        %v1721 = vmul.f32 %v1641, 1.442695
        %v1722 = vpow.pop %v1721
        %v1723 = vmul.f32 %v1642, 1.442695
        %v1724 = vpow.pop %v1723
        %v1725 = vmul.f32 %v1643, 1.442695
        %v1726 = vpow.pop %v1725
        %v1727 = vmul.f32 %v1644, 1.442695
        %v1728 = vpow.pop %v1727
        %v1729 = vmul.f32 %v1645, 1.442695
        %v1730 = vpow.pop %v1729
        %v1731 = vmul.f32 %v1646, 1.442695
        %v1732 = vpow.pop %v1731
        %v1733 = vmul.f32 %v1647, 1.442695
        %v1734 = vpow.pop %v1733
        %v1735 = vmul.f32 %v1648, 1.442695
        %v1736 = vpow.pop %v1735
        %v1737 = vmul.f32 %v1649, 1.442695
        %v1738 = vpow.pop %v1737
        %v1739 = vmul.f32 %v1650, 1.442695
        %v1740 = vpow.pop %v1739
        %v1741 = vmul.f32 %v1651, 1.442695
        %v1742 = vpow.pop %v1741
        %v1743 = vmul.f32 %v1652, 1.442695
        %v1744 = vpow.pop %v1743
        %v1745 = vmul.f32 %v1653, 1.442695
        %v1746 = vpow.pop %v1745
        %v1747 = vmul.f32 %v1654, 1.442695
        %v1748 = vpow.pop %v1747
        %v1749 = vmul.f32 %v1655, 1.442695
        %v1750 = vpow.pop %v1749
        %v1751 = vmul.f32 %v1656, 1.442695
        %v1752 = vpow.pop %v1751
        %v1753 = vmul.f32 %v1657, 1.442695
        %v1754 = vpow.pop %v1753
        %v1755 = vmul.f32 %v1658, 1.442695
        %v1756 = vpow.pop %v1755
        %v1757 = vmul.f32 %v1659, 1.442695
        %v1758 = vpow.pop %v1757
        %v1759 = vmul.f32 %v1660, 1.442695
        %v1760 = vpow.pop %v1759
        %v1761 = vmul.f32 %v1661, 1.442695
        %v1762 = vpow.pop %v1761
        %v1763 = vmul.f32 %v1662, 1.442695
        %v1764 = vpow.pop %v1763
        %v1765 = vmul.f32 %v1663, 1.442695
        %v1766 = vpow.pop %v1765
        %v1767 = vmul.f32 %v1664, 1.442695
        %v1768 = vpow.pop %v1767
        %v1769 = vmul.f32 %v1665, 1.442695
        %v1770 = vpow.pop %v1769
        %v1771 = vmul.f32 %v1666, 1.442695
        %v1772 = vpow.pop %v1771
        %v1773 = vmul.f32 %v1667, 1.442695
        %v1774 = vpow.pop %v1773
        %v1775 = vmul.f32 %v1668, 1.442695
        %v1776 = vpow.pop %v1775
        %v1777 = vmul.f32 %v1669, 1.442695
        %v1778 = vpow.pop %v1777
        %v1779 = vmul.f32 %v1670, 1.442695
        %v1780 = vpow.pop %v1779
        %v1781 = vmul.f32 %v1671, 1.442695
        %v1782 = vpow.pop %v1781
        %v1783 = vmul.f32 %v1672, 1.442695
        %v1784 = vpow.pop %v1783
        %v1785 = vmul.f32 %v1673, 1.442695
        %v1786 = vpow.pop %v1785
        %v1787 = vmul.f32 %v1674, 1.442695
        %v1788 = vpow.pop %v1787
        %v1789 = vmul.f32 %v1675, 1.442695
        %v1790 = vpow.pop %v1789
        %v1791 = vmul.f32 %v1676, 1.442695
        %v1792 = vpow.pop %v1791
        %v1793 = vmul.f32 %v1677, 1.442695
        %v1794 = vpow.pop %v1793
        %v1795 = vmul.f32 %v1678, 1.442695
        %v1796 = vpow.pop %v1795
        %v1797 = vmul.f32 %v1679, 1.442695
        %v1798 = vpow.pop %v1797
        %v1799 = vmul.f32 %v1680, 1.442695
        %v1800 = vpow.pop %v1799
        %v1801 = vmul.f32 %v1681, 1.442695
        %v1802 = vpow.pop %v1801
        %v1803 = vmul.f32 %v1682, 1.442695
        %v1804 = vpow.pop %v1803
        %v1805 = vmul.f32 %v1683, 1.442695
        %v1806 = vpow.pop %v1805
        %v1807 = vmul.f32 %v1684, 1.442695
        %v1808 = vpow.pop %v1807
        %v1809 = vmul.f32 %v1685, 1.442695
        %v1810 = vpow.pop %v1809
        %v1811 = vmul.f32 %v1686, 1.442695
        %v1812 = vpow.pop %v1811
        %v1813 = vmul.f32 %v1687, 1.442695
        %v1814 = vpow.pop %v1813
        %v1815 = vmul.f32 %v1688, 1.442695
        %v1816 = vpow.pop %v1815
        %v1817 = vld [vmem:[#allocation3] sm:$0xff]
        %v1818 = vld [vmem:[#allocation3 + $0x8] sm:$0xff]
        %v1819 = vld [vmem:[#allocation3 + $0x10] sm:$0xff]
        %v1820 = vld [vmem:[#allocation3 + $0x18] sm:$0xff]
        %v1821 = vld [vmem:[#allocation3 + $0x20] sm:$0xff]
        %v1822 = vld [vmem:[#allocation3 + $0x28] sm:$0xff]
        %v1823 = vld [vmem:[#allocation3 + $0x30] sm:$0xff]
        %v1824 = vld [vmem:[#allocation3 + $0x38] sm:$0xff]
        %v1825 = vld [vmem:[#allocation3 + $0x40] sm:$0xff]
        %v1826 = vld [vmem:[#allocation3 + $0x48] sm:$0xff]
        %v1827 = vld [vmem:[#allocation3 + $0x50] sm:$0xff]
        %v1828 = vld [vmem:[#allocation3 + $0x58] sm:$0xff]
        %v1829 = vld [vmem:[#allocation3 + $0x60] sm:$0xff]
        %v1830 = vld [vmem:[#allocation3 + $0x68] sm:$0xff]
        %v1831 = vld [vmem:[#allocation3 + $0x70] sm:$0xff]
        %v1832 = vld [vmem:[#allocation3 + $0x78] sm:$0xff]
        %v1833 = vld [vmem:[#allocation3 + $0x80] sm:$0xff]
        %v1834 = vld [vmem:[#allocation3 + $0x88] sm:$0xff]
        %v1835 = vld [vmem:[#allocation3 + $0x90] sm:$0xff]
        %v1836 = vld [vmem:[#allocation3 + $0x98] sm:$0xff]
        %v1837 = vld [vmem:[#allocation3 + $0xa0] sm:$0xff]
        %v1838 = vld [vmem:[#allocation3 + $0xa8] sm:$0xff]
        %v1839 = vld [vmem:[#allocation3 + $0xb0] sm:$0xff]
        %v1840 = vld [vmem:[#allocation3 + $0xb8] sm:$0xff]
        %v1841 = vld [vmem:[#allocation3 + $0xc0] sm:$0xff]
        %v1842 = vld [vmem:[#allocation3 + $0xc8] sm:$0xff]
        %v1843 = vld [vmem:[#allocation3 + $0xd0] sm:$0xff]
        %v1844 = vld [vmem:[#allocation3 + $0xd8] sm:$0xff]
        %v1845 = vld [vmem:[#allocation3 + $0xe0] sm:$0xff]
        %v1846 = vld [vmem:[#allocation3 + $0xe8] sm:$0xff]
        %v1847 = vld [vmem:[#allocation3 + $0xf0] sm:$0xff]
        %v1848 = vld [vmem:[#allocation3 + $0xf8] sm:$0xff]
        %v1849 = vmul.f32 %v1402, %v1817
        %v1850 = vmul.f32 %v1404, %v1818
        %v1851 = vmul.f32 %v1406, %v1819
        %v1852 = vmul.f32 %v1408, %v1820
        %v1853 = vmul.f32 %v1410, %v1821
        %v1854 = vmul.f32 %v1412, %v1822
        %v1855 = vmul.f32 %v1414, %v1823
        %v1856 = vmul.f32 %v1416, %v1824
        %v1857 = vmul.f32 %v1418, %v1825
        %v1858 = vmul.f32 %v1420, %v1826
        %v1859 = vmul.f32 %v1422, %v1827
        %v1860 = vmul.f32 %v1424, %v1828
        %v1861 = vmul.f32 %v1426, %v1829
        %v1862 = vmul.f32 %v1428, %v1830
        %v1863 = vmul.f32 %v1430, %v1831
        %v1864 = vmul.f32 %v1432, %v1832
        %v1865 = vmul.f32 %v1434, %v1833
        %v1866 = vmul.f32 %v1436, %v1834
        %v1867 = vmul.f32 %v1438, %v1835
        %v1868 = vmul.f32 %v1440, %v1836
        %v1869 = vmul.f32 %v1442, %v1837
        %v1870 = vmul.f32 %v1444, %v1838
        %v1871 = vmul.f32 %v1446, %v1839
        %v1872 = vmul.f32 %v1448, %v1840
        %v1873 = vmul.f32 %v1450, %v1841
        %v1874 = vmul.f32 %v1452, %v1842
        %v1875 = vmul.f32 %v1454, %v1843
        %v1876 = vmul.f32 %v1456, %v1844
        %v1877 = vmul.f32 %v1458, %v1845
        %v1878 = vmul.f32 %v1460, %v1846
        %v1879 = vmul.f32 %v1462, %v1847
        %v1880 = vmul.f32 %v1464, %v1848
        %v1881 = vadd.f32 %v1690, %v1692
        %1882 = vadd.xlane.f32.xlu0 %v1881
        %v1883 = vpop.xlane.xlu0 %1882
        %v1884 = vadd.f32 %v1694, %v1696
        %1885 = vadd.xlane.f32.xlu0 %v1884
        %v1886 = vpop.xlane.xlu0 %1885
        %v1887 = vadd.f32 %v1698, %v1700
        %1888 = vadd.xlane.f32.xlu0 %v1887
        %v1889 = vpop.xlane.xlu0 %1888
        %v1890 = vadd.f32 %v1702, %v1704
        %1891 = vadd.xlane.f32.xlu0 %v1890
        %v1892 = vpop.xlane.xlu0 %1891
        %v1893 = vadd.f32 %v1706, %v1708
        %1894 = vadd.xlane.f32.xlu0 %v1893
        %v1895 = vpop.xlane.xlu0 %1894
        %v1896 = vadd.f32 %v1710, %v1712
        %1897 = vadd.xlane.f32.xlu0 %v1896
        %v1898 = vpop.xlane.xlu0 %1897
        %v1899 = vadd.f32 %v1714, %v1716
        %1900 = vadd.xlane.f32.xlu0 %v1899
        %v1901 = vpop.xlane.xlu0 %1900
        %v1902 = vadd.f32 %v1718, %v1720
        %1903 = vadd.xlane.f32.xlu0 %v1902
        %v1904 = vpop.xlane.xlu0 %1903
        %v1905 = vadd.f32 %v1722, %v1724
        %1906 = vadd.xlane.f32.xlu0 %v1905
        %v1907 = vpop.xlane.xlu0 %1906
        %v1908 = vadd.f32 %v1726, %v1728
        %1909 = vadd.xlane.f32.xlu0 %v1908
        %v1910 = vpop.xlane.xlu0 %1909
        %v1911 = vadd.f32 %v1730, %v1732
        %1912 = vadd.xlane.f32.xlu0 %v1911
        %v1913 = vpop.xlane.xlu0 %1912
        %v1914 = vadd.f32 %v1734, %v1736
        %1915 = vadd.xlane.f32.xlu0 %v1914
        %v1916 = vpop.xlane.xlu0 %1915
        %v1917 = vadd.f32 %v1738, %v1740
        %1918 = vadd.xlane.f32.xlu0 %v1917
        %v1919 = vpop.xlane.xlu0 %1918
        %v1920 = vadd.f32 %v1742, %v1744
        %1921 = vadd.xlane.f32.xlu0 %v1920
        %v1922 = vpop.xlane.xlu0 %1921
        %v1923 = vadd.f32 %v1746, %v1748
        %1924 = vadd.xlane.f32.xlu0 %v1923
        %v1925 = vpop.xlane.xlu0 %1924
        %v1926 = vadd.f32 %v1750, %v1752
        %1927 = vadd.xlane.f32.xlu0 %v1926
        %v1928 = vpop.xlane.xlu0 %1927
        %v1929 = vadd.f32 %v1754, %v1756
        %1930 = vadd.xlane.f32.xlu0 %v1929
        %v1931 = vpop.xlane.xlu0 %1930
        %v1932 = vadd.f32 %v1758, %v1760
        %1933 = vadd.xlane.f32.xlu0 %v1932
        %v1934 = vpop.xlane.xlu0 %1933
        %v1935 = vadd.f32 %v1762, %v1764
        %1936 = vadd.xlane.f32.xlu0 %v1935
        %v1937 = vpop.xlane.xlu0 %1936
        %v1938 = vadd.f32 %v1766, %v1768
        %1939 = vadd.xlane.f32.xlu0 %v1938
        %v1940 = vpop.xlane.xlu0 %1939
        %v1941 = vadd.f32 %v1770, %v1772
        %1942 = vadd.xlane.f32.xlu0 %v1941
        %v1943 = vpop.xlane.xlu0 %1942
        %v1944 = vadd.f32 %v1774, %v1776
        %1945 = vadd.xlane.f32.xlu0 %v1944
        %v1946 = vpop.xlane.xlu0 %1945
        %v1947 = vadd.f32 %v1778, %v1780
        %1948 = vadd.xlane.f32.xlu0 %v1947
        %v1949 = vpop.xlane.xlu0 %1948
        %v1950 = vadd.f32 %v1782, %v1784
        %1951 = vadd.xlane.f32.xlu0 %v1950
        %v1952 = vpop.xlane.xlu0 %1951
        %v1953 = vadd.f32 %v1786, %v1788
        %1954 = vadd.xlane.f32.xlu0 %v1953
        %v1955 = vpop.xlane.xlu0 %1954
        %v1956 = vadd.f32 %v1790, %v1792
        %1957 = vadd.xlane.f32.xlu0 %v1956
        %v1958 = vpop.xlane.xlu0 %1957
        %v1959 = vadd.f32 %v1794, %v1796
        %1960 = vadd.xlane.f32.xlu0 %v1959
        %v1961 = vpop.xlane.xlu0 %1960
        %v1962 = vadd.f32 %v1798, %v1800
        %1963 = vadd.xlane.f32.xlu0 %v1962
        %v1964 = vpop.xlane.xlu0 %1963
        %v1965 = vadd.f32 %v1802, %v1804
        %1966 = vadd.xlane.f32.xlu0 %v1965
        %v1967 = vpop.xlane.xlu0 %1966
        %v1968 = vadd.f32 %v1806, %v1808
        %1969 = vadd.xlane.f32.xlu0 %v1968
        %v1970 = vpop.xlane.xlu0 %1969
        %v1971 = vadd.f32 %v1810, %v1812
        %1972 = vadd.xlane.f32.xlu0 %v1971
        %v1973 = vpop.xlane.xlu0 %1972
        %v1974 = vadd.f32 %v1814, %v1816
        %1975 = vadd.xlane.f32.xlu0 %v1974
        %v1976 = vpop.xlane.xlu0 %1975
        %v1977 = vadd.f32 %v1849, %v1883
        %v1978 = vadd.f32 %v1850, %v1886
        %v1979 = vadd.f32 %v1851, %v1889
        %v1980 = vadd.f32 %v1852, %v1892
        %v1981 = vadd.f32 %v1853, %v1895
        %v1982 = vadd.f32 %v1854, %v1898
        %v1983 = vadd.f32 %v1855, %v1901
        %v1984 = vadd.f32 %v1856, %v1904
        %v1985 = vadd.f32 %v1857, %v1907
        %v1986 = vadd.f32 %v1858, %v1910
        %v1987 = vadd.f32 %v1859, %v1913
        %v1988 = vadd.f32 %v1860, %v1916
        %v1989 = vadd.f32 %v1861, %v1919
        %v1990 = vadd.f32 %v1862, %v1922
        %v1991 = vadd.f32 %v1863, %v1925
        %v1992 = vadd.f32 %v1864, %v1928
        %v1993 = vadd.f32 %v1865, %v1931
        %v1994 = vadd.f32 %v1866, %v1934
        %v1995 = vadd.f32 %v1867, %v1937
        %v1996 = vadd.f32 %v1868, %v1940
        %v1997 = vadd.f32 %v1869, %v1943
        %v1998 = vadd.f32 %v1870, %v1946
        %v1999 = vadd.f32 %v1871, %v1949
        %v2000 = vadd.f32 %v1872, %v1952
        %v2001 = vadd.f32 %v1873, %v1955
        %v2002 = vadd.f32 %v1874, %v1958
        %v2003 = vadd.f32 %v1875, %v1961
        %v2004 = vadd.f32 %v1876, %v1964
        %v2005 = vadd.f32 %v1877, %v1967
        %v2006 = vadd.f32 %v1878, %v1970
        %v2007 = vadd.f32 %v1879, %v1973
        %v2008 = vadd.f32 %v1880, %v1976
        %vm2009 = vcmask 7168
        %2010 = vst.msk [vmem:[#allocation3] sm:$0xff] %vm2009, %v1977
        %2011 = vst.msk [vmem:[#allocation3 + $0x8] sm:$0xff] %vm2009, %v1978
        %2012 = vst.msk [vmem:[#allocation3 + $0x10] sm:$0xff] %vm2009, %v1979
        %2013 = vst.msk [vmem:[#allocation3 + $0x18] sm:$0xff] %vm2009, %v1980
        %2014 = vst.msk [vmem:[#allocation3 + $0x20] sm:$0xff] %vm2009, %v1981
        %2015 = vst.msk [vmem:[#allocation3 + $0x28] sm:$0xff] %vm2009, %v1982
        %2016 = vst.msk [vmem:[#allocation3 + $0x30] sm:$0xff] %vm2009, %v1983
        %2017 = vst.msk [vmem:[#allocation3 + $0x38] sm:$0xff] %vm2009, %v1984
        %2018 = vst.msk [vmem:[#allocation3 + $0x40] sm:$0xff] %vm2009, %v1985
        %2019 = vst.msk [vmem:[#allocation3 + $0x48] sm:$0xff] %vm2009, %v1986
        %2020 = vst.msk [vmem:[#allocation3 + $0x50] sm:$0xff] %vm2009, %v1987
        %2021 = vst.msk [vmem:[#allocation3 + $0x58] sm:$0xff] %vm2009, %v1988
        %2022 = vst.msk [vmem:[#allocation3 + $0x60] sm:$0xff] %vm2009, %v1989
        %2023 = vst.msk [vmem:[#allocation3 + $0x68] sm:$0xff] %vm2009, %v1990
        %2024 = vst.msk [vmem:[#allocation3 + $0x70] sm:$0xff] %vm2009, %v1991
        %2025 = vst.msk [vmem:[#allocation3 + $0x78] sm:$0xff] %vm2009, %v1992
        %2026 = vst.msk [vmem:[#allocation3 + $0x80] sm:$0xff] %vm2009, %v1993
        %2027 = vst.msk [vmem:[#allocation3 + $0x88] sm:$0xff] %vm2009, %v1994
        %2028 = vst.msk [vmem:[#allocation3 + $0x90] sm:$0xff] %vm2009, %v1995
        %2029 = vst.msk [vmem:[#allocation3 + $0x98] sm:$0xff] %vm2009, %v1996
        %2030 = vst.msk [vmem:[#allocation3 + $0xa0] sm:$0xff] %vm2009, %v1997
        %2031 = vst.msk [vmem:[#allocation3 + $0xa8] sm:$0xff] %vm2009, %v1998
        %2032 = vst.msk [vmem:[#allocation3 + $0xb0] sm:$0xff] %vm2009, %v1999
        %2033 = vst.msk [vmem:[#allocation3 + $0xb8] sm:$0xff] %vm2009, %v2000
        %2034 = vst.msk [vmem:[#allocation3 + $0xc0] sm:$0xff] %vm2009, %v2001
        %2035 = vst.msk [vmem:[#allocation3 + $0xc8] sm:$0xff] %vm2009, %v2002
        %2036 = vst.msk [vmem:[#allocation3 + $0xd0] sm:$0xff] %vm2009, %v2003
        %2037 = vst.msk [vmem:[#allocation3 + $0xd8] sm:$0xff] %vm2009, %v2004
        %2038 = vst.msk [vmem:[#allocation3 + $0xe0] sm:$0xff] %vm2009, %v2005
        %2039 = vst.msk [vmem:[#allocation3 + $0xe8] sm:$0xff] %vm2009, %v2006
        %2040 = vst.msk [vmem:[#allocation3 + $0xf0] sm:$0xff] %vm2009, %v2007
        %2041 = vst.msk [vmem:[#allocation3 + $0xf8] sm:$0xff] %vm2009, %v2008
        %v2042 = vld [vmem:[#allocation4] sm:$0xff]
        %v2043 = vld [vmem:[#allocation4 + $0x8] sm:$0xff]
        %v2044 = vld [vmem:[#allocation4 + $0x10] sm:$0xff]
        %v2045 = vld [vmem:[#allocation4 + $0x18] sm:$0xff]
        %v2046 = vld [vmem:[#allocation4 + $0x20] sm:$0xff]
        %v2047 = vld [vmem:[#allocation4 + $0x28] sm:$0xff]
        %v2048 = vld [vmem:[#allocation4 + $0x30] sm:$0xff]
        %v2049 = vld [vmem:[#allocation4 + $0x38] sm:$0xff]
        %v2050 = vld [vmem:[#allocation4 + $0x40] sm:$0xff]
        %v2051 = vld [vmem:[#allocation4 + $0x48] sm:$0xff]
        %v2052 = vld [vmem:[#allocation4 + $0x50] sm:$0xff]
        %v2053 = vld [vmem:[#allocation4 + $0x58] sm:$0xff]
        %v2054 = vld [vmem:[#allocation4 + $0x60] sm:$0xff]
        %v2055 = vld [vmem:[#allocation4 + $0x68] sm:$0xff]
        %v2056 = vld [vmem:[#allocation4 + $0x70] sm:$0xff]
        %v2057 = vld [vmem:[#allocation4 + $0x78] sm:$0xff]
        %v2058 = vld [vmem:[#allocation4 + $0x80] sm:$0xff]
        %v2059 = vld [vmem:[#allocation4 + $0x88] sm:$0xff]
        %v2060 = vld [vmem:[#allocation4 + $0x90] sm:$0xff]
        %v2061 = vld [vmem:[#allocation4 + $0x98] sm:$0xff]
        %v2062 = vld [vmem:[#allocation4 + $0xa0] sm:$0xff]
        %v2063 = vld [vmem:[#allocation4 + $0xa8] sm:$0xff]
        %v2064 = vld [vmem:[#allocation4 + $0xb0] sm:$0xff]
        %v2065 = vld [vmem:[#allocation4 + $0xb8] sm:$0xff]
        %v2066 = vld [vmem:[#allocation4 + $0xc0] sm:$0xff]
        %v2067 = vld [vmem:[#allocation4 + $0xc8] sm:$0xff]
        %v2068 = vld [vmem:[#allocation4 + $0xd0] sm:$0xff]
        %v2069 = vld [vmem:[#allocation4 + $0xd8] sm:$0xff]
        %v2070 = vld [vmem:[#allocation4 + $0xe0] sm:$0xff]
        %v2071 = vld [vmem:[#allocation4 + $0xe8] sm:$0xff]
        %v2072 = vld [vmem:[#allocation4 + $0xf0] sm:$0xff]
        %v2073 = vld [vmem:[#allocation4 + $0xf8] sm:$0xff]
        %2075 = vset.pattern.permute.xlu0 0
        %2076 = vperm.xlu0 %2075, %v1402
        %v2077 = vpop.permute.xlu0 %2076
        %2080 = vset.pattern.permute.xlu0 0
        %2081 = vperm.xlu0 %2080, %v1404
        %v2082 = vpop.permute.xlu0 %2081
        %2085 = vset.pattern.permute.xlu0 0
        %2086 = vperm.xlu0 %2085, %v1406
        %v2087 = vpop.permute.xlu0 %2086
        %2090 = vset.pattern.permute.xlu0 0
        %2091 = vperm.xlu0 %2090, %v1408
        %v2092 = vpop.permute.xlu0 %2091
        %2095 = vset.pattern.permute.xlu0 0
        %2096 = vperm.xlu0 %2095, %v1410
        %v2097 = vpop.permute.xlu0 %2096
        %2100 = vset.pattern.permute.xlu0 0
        %2101 = vperm.xlu0 %2100, %v1412
        %v2102 = vpop.permute.xlu0 %2101
        %2105 = vset.pattern.permute.xlu0 0
        %2106 = vperm.xlu0 %2105, %v1414
        %v2107 = vpop.permute.xlu0 %2106
        %2110 = vset.pattern.permute.xlu0 0
        %2111 = vperm.xlu0 %2110, %v1416
        %v2112 = vpop.permute.xlu0 %2111
        %2115 = vset.pattern.permute.xlu0 0
        %2116 = vperm.xlu0 %2115, %v1418
        %v2117 = vpop.permute.xlu0 %2116
        %2120 = vset.pattern.permute.xlu0 0
        %2121 = vperm.xlu0 %2120, %v1420
        %v2122 = vpop.permute.xlu0 %2121
        %2125 = vset.pattern.permute.xlu0 0
        %2126 = vperm.xlu0 %2125, %v1422
        %v2127 = vpop.permute.xlu0 %2126
        %2130 = vset.pattern.permute.xlu0 0
        %2131 = vperm.xlu0 %2130, %v1424
        %v2132 = vpop.permute.xlu0 %2131
        %2135 = vset.pattern.permute.xlu0 0
        %2136 = vperm.xlu0 %2135, %v1426
        %v2137 = vpop.permute.xlu0 %2136
        %2140 = vset.pattern.permute.xlu0 0
        %2141 = vperm.xlu0 %2140, %v1428
        %v2142 = vpop.permute.xlu0 %2141
        %2145 = vset.pattern.permute.xlu0 0
        %2146 = vperm.xlu0 %2145, %v1430
        %v2147 = vpop.permute.xlu0 %2146
        %2150 = vset.pattern.permute.xlu0 0
        %2151 = vperm.xlu0 %2150, %v1432
        %v2152 = vpop.permute.xlu0 %2151
        %2155 = vset.pattern.permute.xlu0 0
        %2156 = vperm.xlu0 %2155, %v1434
        %v2157 = vpop.permute.xlu0 %2156
        %2160 = vset.pattern.permute.xlu0 0
        %2161 = vperm.xlu0 %2160, %v1436
        %v2162 = vpop.permute.xlu0 %2161
        %2165 = vset.pattern.permute.xlu0 0
        %2166 = vperm.xlu0 %2165, %v1438
        %v2167 = vpop.permute.xlu0 %2166
        %2170 = vset.pattern.permute.xlu0 0
        %2171 = vperm.xlu0 %2170, %v1440
        %v2172 = vpop.permute.xlu0 %2171
        %2175 = vset.pattern.permute.xlu0 0
        %2176 = vperm.xlu0 %2175, %v1442
        %v2177 = vpop.permute.xlu0 %2176
        %2180 = vset.pattern.permute.xlu0 0
        %2181 = vperm.xlu0 %2180, %v1444
        %v2182 = vpop.permute.xlu0 %2181
        %2185 = vset.pattern.permute.xlu0 0
        %2186 = vperm.xlu0 %2185, %v1446
        %v2187 = vpop.permute.xlu0 %2186
        %2190 = vset.pattern.permute.xlu0 0
        %2191 = vperm.xlu0 %2190, %v1448
        %v2192 = vpop.permute.xlu0 %2191
        %2195 = vset.pattern.permute.xlu0 0
        %2196 = vperm.xlu0 %2195, %v1450
        %v2197 = vpop.permute.xlu0 %2196
        %2200 = vset.pattern.permute.xlu0 0
        %2201 = vperm.xlu0 %2200, %v1452
        %v2202 = vpop.permute.xlu0 %2201
        %2205 = vset.pattern.permute.xlu0 0
        %2206 = vperm.xlu0 %2205, %v1454
        %v2207 = vpop.permute.xlu0 %2206
        %2210 = vset.pattern.permute.xlu0 0
        %2211 = vperm.xlu0 %2210, %v1456
        %v2212 = vpop.permute.xlu0 %2211
        %2215 = vset.pattern.permute.xlu0 0
        %2216 = vperm.xlu0 %2215, %v1458
        %v2217 = vpop.permute.xlu0 %2216
        %2220 = vset.pattern.permute.xlu0 0
        %2221 = vperm.xlu0 %2220, %v1460
        %v2222 = vpop.permute.xlu0 %2221
        %2225 = vset.pattern.permute.xlu0 0
        %2226 = vperm.xlu0 %2225, %v1462
        %v2227 = vpop.permute.xlu0 %2226
        %2230 = vset.pattern.permute.xlu0 0
        %2231 = vperm.xlu0 %2230, %v1464
        %v2232 = vpop.permute.xlu0 %2231
        %v2234 = vmul.f32 %v2077, %v2042
        %v2235 = vmul.f32 %v2082, %v2043
        %v2236 = vmul.f32 %v2087, %v2044
        %v2237 = vmul.f32 %v2092, %v2045
        %v2238 = vmul.f32 %v2097, %v2046
        %v2239 = vmul.f32 %v2102, %v2047
        %v2240 = vmul.f32 %v2107, %v2048
        %v2241 = vmul.f32 %v2112, %v2049
        %v2242 = vmul.f32 %v2117, %v2050
        %v2243 = vmul.f32 %v2122, %v2051
        %v2244 = vmul.f32 %v2127, %v2052
        %v2245 = vmul.f32 %v2132, %v2053
        %v2246 = vmul.f32 %v2137, %v2054
        %v2247 = vmul.f32 %v2142, %v2055
        %v2248 = vmul.f32 %v2147, %v2056
        %v2249 = vmul.f32 %v2152, %v2057
        %v2250 = vmul.f32 %v2157, %v2058
        %v2251 = vmul.f32 %v2162, %v2059
        %v2252 = vmul.f32 %v2167, %v2060
        %v2253 = vmul.f32 %v2172, %v2061
        %v2254 = vmul.f32 %v2177, %v2062
        %v2255 = vmul.f32 %v2182, %v2063
        %v2256 = vmul.f32 %v2187, %v2064
        %v2257 = vmul.f32 %v2192, %v2065
        %v2258 = vmul.f32 %v2197, %v2066
        %v2259 = vmul.f32 %v2202, %v2067
        %v2260 = vmul.f32 %v2207, %v2068
        %v2261 = vmul.f32 %v2212, %v2069
        %v2262 = vmul.f32 %v2217, %v2070
        %v2263 = vmul.f32 %v2222, %v2071
        %v2264 = vmul.f32 %v2227, %v2072
        %v2265 = vmul.f32 %v2232, %v2073
        %v2266 = vpack.c.bf16 %v1694, %v1690
        %v2267 = vpack.c.bf16 %v1696, %v1692
        %v2268 = vpack.c.bf16 %v1702, %v1698
        %v2269 = vpack.c.bf16 %v1704, %v1700
        %v2270 = vpack.c.bf16 %v1710, %v1706
        %v2271 = vpack.c.bf16 %v1712, %v1708
        %v2272 = vpack.c.bf16 %v1718, %v1714
        %v2273 = vpack.c.bf16 %v1720, %v1716
        %v2274 = vpack.c.bf16 %v1726, %v1722
        %v2275 = vpack.c.bf16 %v1728, %v1724
        %v2276 = vpack.c.bf16 %v1734, %v1730
        %v2277 = vpack.c.bf16 %v1736, %v1732
        %v2278 = vpack.c.bf16 %v1742, %v1738
        %v2279 = vpack.c.bf16 %v1744, %v1740
        %v2280 = vpack.c.bf16 %v1750, %v1746
        %v2281 = vpack.c.bf16 %v1752, %v1748
        %v2282 = vpack.c.bf16 %v1758, %v1754
        %v2283 = vpack.c.bf16 %v1760, %v1756
        %v2284 = vpack.c.bf16 %v1766, %v1762
        %v2285 = vpack.c.bf16 %v1768, %v1764
        %v2286 = vpack.c.bf16 %v1774, %v1770
        %v2287 = vpack.c.bf16 %v1776, %v1772
        %v2288 = vpack.c.bf16 %v1782, %v1778
        %v2289 = vpack.c.bf16 %v1784, %v1780
        %v2290 = vpack.c.bf16 %v1790, %v1786
        %v2291 = vpack.c.bf16 %v1792, %v1788
        %v2292 = vpack.c.bf16 %v1798, %v1794
        %v2293 = vpack.c.bf16 %v1800, %v1796
        %v2294 = vpack.c.bf16 %v1806, %v1802
        %v2295 = vpack.c.bf16 %v1808, %v1804
        %v2296 = vpack.c.bf16 %v1814, %v1810
        %v2297 = vpack.c.bf16 %v1816, %v1812
        %2298 = vmatpush.bf16.msra.mxu0 %v817
        %2299 = vmatpush.bf16.msra.mxu0 %v816
        %2300 = vmatpush.bf16.msra.mxu0 %v815
        %2301 = vmatpush.bf16.msra.mxu0 %v814
        %2302 = vmatpush.bf16.msra.mxu0 %v813
        %2303 = vmatpush.bf16.msra.mxu0 %v812
        %2304 = vmatpush.bf16.msra.mxu0 %v811
        %2305 = vmatpush.bf16.msra.mxu0 %v810
        %2306 = vmatmul.bf16.gmra.mxu0 %v2266
        %v2307 = vpop.f32.mrf.mxu0
        %v2308 = vadd.f32 0.0, %v2307
        %v2309 = vpop.f32.mrf.mxu0
        %v2310 = vadd.f32 0.0, %v2309
        %2311 = vmatmul.bf16.gmra.mxu0 %v2268
        %v2312 = vpop.f32.mrf.mxu0
        %v2313 = vadd.f32 0.0, %v2312
        %v2314 = vpop.f32.mrf.mxu0
        %v2315 = vadd.f32 0.0, %v2314
        %2316 = vmatmul.bf16.gmra.mxu0 %v2270
        %v2317 = vpop.f32.mrf.mxu0
        %v2318 = vadd.f32 0.0, %v2317
        %v2319 = vpop.f32.mrf.mxu0
        %v2320 = vadd.f32 0.0, %v2319
        %2321 = vmatmul.bf16.gmra.mxu0 %v2272
        %v2322 = vpop.f32.mrf.mxu0
        %v2323 = vadd.f32 0.0, %v2322
        %v2324 = vpop.f32.mrf.mxu0
        %v2325 = vadd.f32 0.0, %v2324
        %2326 = vmatmul.bf16.gmra.mxu0 %v2274
        %v2327 = vpop.f32.mrf.mxu0
        %v2328 = vadd.f32 0.0, %v2327
        %v2329 = vpop.f32.mrf.mxu0
        %v2330 = vadd.f32 0.0, %v2329
        %2331 = vmatmul.bf16.gmra.mxu0 %v2276
        %v2332 = vpop.f32.mrf.mxu0
        %v2333 = vadd.f32 0.0, %v2332
        %v2334 = vpop.f32.mrf.mxu0
        %v2335 = vadd.f32 0.0, %v2334
        %2336 = vmatmul.bf16.gmra.mxu0 %v2278
        %v2337 = vpop.f32.mrf.mxu0
        %v2338 = vadd.f32 0.0, %v2337
        %v2339 = vpop.f32.mrf.mxu0
        %v2340 = vadd.f32 0.0, %v2339
        %2341 = vmatmul.bf16.gmra.mxu0 %v2280
        %v2342 = vpop.f32.mrf.mxu0
        %v2343 = vadd.f32 0.0, %v2342
        %v2344 = vpop.f32.mrf.mxu0
        %v2345 = vadd.f32 0.0, %v2344
        %2346 = vmatmul.bf16.gmra.mxu0 %v2282
        %v2347 = vpop.f32.mrf.mxu0
        %v2348 = vadd.f32 0.0, %v2347
        %v2349 = vpop.f32.mrf.mxu0
        %v2350 = vadd.f32 0.0, %v2349
        %2351 = vmatmul.bf16.gmra.mxu0 %v2284
        %v2352 = vpop.f32.mrf.mxu0
        %v2353 = vadd.f32 0.0, %v2352
        %v2354 = vpop.f32.mrf.mxu0
        %v2355 = vadd.f32 0.0, %v2354
        %2356 = vmatmul.bf16.gmra.mxu0 %v2286
        %v2357 = vpop.f32.mrf.mxu0
        %v2358 = vadd.f32 0.0, %v2357
        %v2359 = vpop.f32.mrf.mxu0
        %v2360 = vadd.f32 0.0, %v2359
        %2361 = vmatmul.bf16.gmra.mxu0 %v2288
        %v2362 = vpop.f32.mrf.mxu0
        %v2363 = vadd.f32 0.0, %v2362
        %v2364 = vpop.f32.mrf.mxu0
        %v2365 = vadd.f32 0.0, %v2364
        %2366 = vmatmul.bf16.gmra.mxu0 %v2290
        %v2367 = vpop.f32.mrf.mxu0
        %v2368 = vadd.f32 0.0, %v2367
        %v2369 = vpop.f32.mrf.mxu0
        %v2370 = vadd.f32 0.0, %v2369
        %2371 = vmatmul.bf16.gmra.mxu0 %v2292
        %v2372 = vpop.f32.mrf.mxu0
        %v2373 = vadd.f32 0.0, %v2372
        %v2374 = vpop.f32.mrf.mxu0
        %v2375 = vadd.f32 0.0, %v2374
        %2376 = vmatmul.bf16.gmra.mxu0 %v2294
        %v2377 = vpop.f32.mrf.mxu0
        %v2378 = vadd.f32 0.0, %v2377
        %v2379 = vpop.f32.mrf.mxu0
        %v2380 = vadd.f32 0.0, %v2379
        %2381 = vmatmul.bf16.gmra.mxu0 %v2296
        %v2382 = vpop.f32.mrf.mxu0
        %v2383 = vadd.f32 0.0, %v2382
        %v2384 = vpop.f32.mrf.mxu0
        %v2385 = vadd.f32 0.0, %v2384
        %2386 = vdwg.mxu0
        %2387 = vmatpush.bf16.msra.mxu0 %v825
        %2388 = vmatpush.bf16.msra.mxu0 %v824
        %2389 = vmatpush.bf16.msra.mxu0 %v823
        %2390 = vmatpush.bf16.msra.mxu0 %v822
        %2391 = vmatpush.bf16.msra.mxu0 %v821
        %2392 = vmatpush.bf16.msra.mxu0 %v820
        %2393 = vmatpush.bf16.msra.mxu0 %v819
        %2394 = vmatpush.bf16.msra.mxu0 %v818
        %2395 = vmatmul.bf16.gmra.mxu0 %v2267
        %v2396 = vpop.f32.mrf.mxu0
        %v2397 = vadd.f32 %v2308, %v2396
        %v2398 = vpop.f32.mrf.mxu0
        %v2399 = vadd.f32 %v2310, %v2398
        %2400 = vmatmul.bf16.gmra.mxu0 %v2269
        %v2401 = vpop.f32.mrf.mxu0
        %v2402 = vadd.f32 %v2313, %v2401
        %v2403 = vpop.f32.mrf.mxu0
        %v2404 = vadd.f32 %v2315, %v2403
        %2405 = vmatmul.bf16.gmra.mxu0 %v2271
        %v2406 = vpop.f32.mrf.mxu0
        %v2407 = vadd.f32 %v2318, %v2406
        %v2408 = vpop.f32.mrf.mxu0
        %v2409 = vadd.f32 %v2320, %v2408
        %2410 = vmatmul.bf16.gmra.mxu0 %v2273
        %v2411 = vpop.f32.mrf.mxu0
        %v2412 = vadd.f32 %v2323, %v2411
        %v2413 = vpop.f32.mrf.mxu0
        %v2414 = vadd.f32 %v2325, %v2413
        %2415 = vmatmul.bf16.gmra.mxu0 %v2275
        %v2416 = vpop.f32.mrf.mxu0
        %v2417 = vadd.f32 %v2328, %v2416
        %v2418 = vpop.f32.mrf.mxu0
        %v2419 = vadd.f32 %v2330, %v2418
        %2420 = vmatmul.bf16.gmra.mxu0 %v2277
        %v2421 = vpop.f32.mrf.mxu0
        %v2422 = vadd.f32 %v2333, %v2421
        %v2423 = vpop.f32.mrf.mxu0
        %v2424 = vadd.f32 %v2335, %v2423
        %2425 = vmatmul.bf16.gmra.mxu0 %v2279
        %v2426 = vpop.f32.mrf.mxu0
        %v2427 = vadd.f32 %v2338, %v2426
        %v2428 = vpop.f32.mrf.mxu0
        %v2429 = vadd.f32 %v2340, %v2428
        %2430 = vmatmul.bf16.gmra.mxu0 %v2281
        %v2431 = vpop.f32.mrf.mxu0
        %v2432 = vadd.f32 %v2343, %v2431
        %v2433 = vpop.f32.mrf.mxu0
        %v2434 = vadd.f32 %v2345, %v2433
        %2435 = vmatmul.bf16.gmra.mxu0 %v2283
        %v2436 = vpop.f32.mrf.mxu0
        %v2437 = vadd.f32 %v2348, %v2436
        %v2438 = vpop.f32.mrf.mxu0
        %v2439 = vadd.f32 %v2350, %v2438
        %2440 = vmatmul.bf16.gmra.mxu0 %v2285
        %v2441 = vpop.f32.mrf.mxu0
        %v2442 = vadd.f32 %v2353, %v2441
        %v2443 = vpop.f32.mrf.mxu0
        %v2444 = vadd.f32 %v2355, %v2443
        %2445 = vmatmul.bf16.gmra.mxu0 %v2287
        %v2446 = vpop.f32.mrf.mxu0
        %v2447 = vadd.f32 %v2358, %v2446
        %v2448 = vpop.f32.mrf.mxu0
        %v2449 = vadd.f32 %v2360, %v2448
        %2450 = vmatmul.bf16.gmra.mxu0 %v2289
        %v2451 = vpop.f32.mrf.mxu0
        %v2452 = vadd.f32 %v2363, %v2451
        %v2453 = vpop.f32.mrf.mxu0
        %v2454 = vadd.f32 %v2365, %v2453
        %2455 = vmatmul.bf16.gmra.mxu0 %v2291
        %v2456 = vpop.f32.mrf.mxu0
        %v2457 = vadd.f32 %v2368, %v2456
        %v2458 = vpop.f32.mrf.mxu0
        %v2459 = vadd.f32 %v2370, %v2458
        %2460 = vmatmul.bf16.gmra.mxu0 %v2293
        %v2461 = vpop.f32.mrf.mxu0
        %v2462 = vadd.f32 %v2373, %v2461
        %v2463 = vpop.f32.mrf.mxu0
        %v2464 = vadd.f32 %v2375, %v2463
        %2465 = vmatmul.bf16.gmra.mxu0 %v2295
        %v2466 = vpop.f32.mrf.mxu0
        %v2467 = vadd.f32 %v2378, %v2466
        %v2468 = vpop.f32.mrf.mxu0
        %v2469 = vadd.f32 %v2380, %v2468
        %2470 = vmatmul.bf16.gmra.mxu0 %v2297
        %v2471 = vpop.f32.mrf.mxu0
        %v2472 = vadd.f32 %v2383, %v2471
        %v2473 = vpop.f32.mrf.mxu0
        %v2474 = vadd.f32 %v2385, %v2473
        %2475 = vdwg.mxu0
        %v2476 = vadd.f32 %v2234, %v2397
        %v2477 = vadd.f32 %v2235, %v2399
        %v2478 = vadd.f32 %v2236, %v2402
        %v2479 = vadd.f32 %v2237, %v2404
        %v2480 = vadd.f32 %v2238, %v2407
        %v2481 = vadd.f32 %v2239, %v2409
        %v2482 = vadd.f32 %v2240, %v2412
        %v2483 = vadd.f32 %v2241, %v2414
        %v2484 = vadd.f32 %v2242, %v2417
        %v2485 = vadd.f32 %v2243, %v2419
        %v2486 = vadd.f32 %v2244, %v2422
        %v2487 = vadd.f32 %v2245, %v2424
        %v2488 = vadd.f32 %v2246, %v2427
        %v2489 = vadd.f32 %v2247, %v2429
        %v2490 = vadd.f32 %v2248, %v2432
        %v2491 = vadd.f32 %v2249, %v2434
        %v2492 = vadd.f32 %v2250, %v2437
        %v2493 = vadd.f32 %v2251, %v2439
        %v2494 = vadd.f32 %v2252, %v2442
        %v2495 = vadd.f32 %v2253, %v2444
        %v2496 = vadd.f32 %v2254, %v2447
        %v2497 = vadd.f32 %v2255, %v2449
        %v2498 = vadd.f32 %v2256, %v2452
        %v2499 = vadd.f32 %v2257, %v2454
        %v2500 = vadd.f32 %v2258, %v2457
        %v2501 = vadd.f32 %v2259, %v2459
        %v2502 = vadd.f32 %v2260, %v2462
        %v2503 = vadd.f32 %v2261, %v2464
        %v2504 = vadd.f32 %v2262, %v2467
        %v2505 = vadd.f32 %v2263, %v2469
        %v2506 = vadd.f32 %v2264, %v2472
        %v2507 = vadd.f32 %v2265, %v2474
        %2508 = vst [vmem:[#allocation4] sm:$0xff] %v2476
        %2509 = vst [vmem:[#allocation4 + $0x8] sm:$0xff] %v2477
        %2510 = vst [vmem:[#allocation4 + $0x10] sm:$0xff] %v2478
        %2511 = vst [vmem:[#allocation4 + $0x18] sm:$0xff] %v2479
        %2512 = vst [vmem:[#allocation4 + $0x20] sm:$0xff] %v2480
        %2513 = vst [vmem:[#allocation4 + $0x28] sm:$0xff] %v2481
        %2514 = vst [vmem:[#allocation4 + $0x30] sm:$0xff] %v2482
        %2515 = vst [vmem:[#allocation4 + $0x38] sm:$0xff] %v2483
        %2516 = vst [vmem:[#allocation4 + $0x40] sm:$0xff] %v2484
        %2517 = vst [vmem:[#allocation4 + $0x48] sm:$0xff] %v2485
        %2518 = vst [vmem:[#allocation4 + $0x50] sm:$0xff] %v2486
        %2519 = vst [vmem:[#allocation4 + $0x58] sm:$0xff] %v2487
        %2520 = vst [vmem:[#allocation4 + $0x60] sm:$0xff] %v2488
        %2521 = vst [vmem:[#allocation4 + $0x68] sm:$0xff] %v2489
        %2522 = vst [vmem:[#allocation4 + $0x70] sm:$0xff] %v2490
        %2523 = vst [vmem:[#allocation4 + $0x78] sm:$0xff] %v2491
        %2524 = vst [vmem:[#allocation4 + $0x80] sm:$0xff] %v2492
        %2525 = vst [vmem:[#allocation4 + $0x88] sm:$0xff] %v2493
        %2526 = vst [vmem:[#allocation4 + $0x90] sm:$0xff] %v2494
        %2527 = vst [vmem:[#allocation4 + $0x98] sm:$0xff] %v2495
        %2528 = vst [vmem:[#allocation4 + $0xa0] sm:$0xff] %v2496
        %2529 = vst [vmem:[#allocation4 + $0xa8] sm:$0xff] %v2497
        %2530 = vst [vmem:[#allocation4 + $0xb0] sm:$0xff] %v2498
        %2531 = vst [vmem:[#allocation4 + $0xb8] sm:$0xff] %v2499
        %2532 = vst [vmem:[#allocation4 + $0xc0] sm:$0xff] %v2500
        %2533 = vst [vmem:[#allocation4 + $0xc8] sm:$0xff] %v2501
        %2534 = vst [vmem:[#allocation4 + $0xd0] sm:$0xff] %v2502
        %2535 = vst [vmem:[#allocation4 + $0xd8] sm:$0xff] %v2503
        %2536 = vst [vmem:[#allocation4 + $0xe0] sm:$0xff] %v2504
        %2537 = vst [vmem:[#allocation4 + $0xe8] sm:$0xff] %v2505
        %2538 = vst [vmem:[#allocation4 + $0xf0] sm:$0xff] %v2506
        %2539 = vst [vmem:[#allocation4 + $0xf8] sm:$0xff] %v2507
        %2540 = vst.msk [vmem:[#allocation2] sm:$0xff] %vm2009, %v1337
        %2541 = vst.msk [vmem:[#allocation2 + $0x8] sm:$0xff] %vm2009, %v1338
        %2542 = vst.msk [vmem:[#allocation2 + $0x10] sm:$0xff] %vm2009, %v1339
        %2543 = vst.msk [vmem:[#allocation2 + $0x18] sm:$0xff] %vm2009, %v1340
        %2544 = vst.msk [vmem:[#allocation2 + $0x20] sm:$0xff] %vm2009, %v1341
        %2545 = vst.msk [vmem:[#allocation2 + $0x28] sm:$0xff] %vm2009, %v1342
        %2546 = vst.msk [vmem:[#allocation2 + $0x30] sm:$0xff] %vm2009, %v1343
        %2547 = vst.msk [vmem:[#allocation2 + $0x38] sm:$0xff] %vm2009, %v1344
        %2548 = vst.msk [vmem:[#allocation2 + $0x40] sm:$0xff] %vm2009, %v1345
        %2549 = vst.msk [vmem:[#allocation2 + $0x48] sm:$0xff] %vm2009, %v1346
        %2550 = vst.msk [vmem:[#allocation2 + $0x50] sm:$0xff] %vm2009, %v1347
        %2551 = vst.msk [vmem:[#allocation2 + $0x58] sm:$0xff] %vm2009, %v1348
        %2552 = vst.msk [vmem:[#allocation2 + $0x60] sm:$0xff] %vm2009, %v1349
        %2553 = vst.msk [vmem:[#allocation2 + $0x68] sm:$0xff] %vm2009, %v1350
        %2554 = vst.msk [vmem:[#allocation2 + $0x70] sm:$0xff] %vm2009, %v1351
        %2555 = vst.msk [vmem:[#allocation2 + $0x78] sm:$0xff] %vm2009, %v1352
        %2556 = vst.msk [vmem:[#allocation2 + $0x80] sm:$0xff] %vm2009, %v1353
        %2557 = vst.msk [vmem:[#allocation2 + $0x88] sm:$0xff] %vm2009, %v1354
        %2558 = vst.msk [vmem:[#allocation2 + $0x90] sm:$0xff] %vm2009, %v1355
        %2559 = vst.msk [vmem:[#allocation2 + $0x98] sm:$0xff] %vm2009, %v1356
        %2560 = vst.msk [vmem:[#allocation2 + $0xa0] sm:$0xff] %vm2009, %v1357
        %2561 = vst.msk [vmem:[#allocation2 + $0xa8] sm:$0xff] %vm2009, %v1358
        %2562 = vst.msk [vmem:[#allocation2 + $0xb0] sm:$0xff] %vm2009, %v1359
        %2563 = vst.msk [vmem:[#allocation2 + $0xb8] sm:$0xff] %vm2009, %v1360
        %2564 = vst.msk [vmem:[#allocation2 + $0xc0] sm:$0xff] %vm2009, %v1361
        %2565 = vst.msk [vmem:[#allocation2 + $0xc8] sm:$0xff] %vm2009, %v1362
        %2566 = vst.msk [vmem:[#allocation2 + $0xd0] sm:$0xff] %vm2009, %v1363
        %2567 = vst.msk [vmem:[#allocation2 + $0xd8] sm:$0xff] %vm2009, %v1364
        %2568 = vst.msk [vmem:[#allocation2 + $0xe0] sm:$0xff] %vm2009, %v1365
        %2569 = vst.msk [vmem:[#allocation2 + $0xe8] sm:$0xff] %vm2009, %v1366
        %2570 = vst.msk [vmem:[#allocation2 + $0xf0] sm:$0xff] %vm2009, %v1367
        %2571 = vst.msk [vmem:[#allocation2 + $0xf8] sm:$0xff] %vm2009, %v1368
        %p2572 = scmp.eq.s32.totalorder %s37, 1
        // Predicated region
        $region69: #{tpu_custom_call.1} parent=47 // pred_check
          %p2573 = pneg %p2572
        $region70: #{tpu_custom_call.1} parent=47 // pred_check_branch
          %2575 = sbr.rel (%p2573) target = $region72
        $region71: #{tpu_custom_call.1} parent=47 // pred_region
          %v2576 = vld [vmem:[#allocation3] sm:$0xff]
          %v2577 = vld [vmem:[#allocation3 + $0x8] sm:$0xff]
          %v2578 = vld [vmem:[#allocation3 + $0x10] sm:$0xff]
          %v2579 = vld [vmem:[#allocation3 + $0x18] sm:$0xff]
          %v2580 = vld [vmem:[#allocation3 + $0x20] sm:$0xff]
          %v2581 = vld [vmem:[#allocation3 + $0x28] sm:$0xff]
          %v2582 = vld [vmem:[#allocation3 + $0x30] sm:$0xff]
          %v2583 = vld [vmem:[#allocation3 + $0x38] sm:$0xff]
          %v2584 = vld [vmem:[#allocation3 + $0x40] sm:$0xff]
          %v2585 = vld [vmem:[#allocation3 + $0x48] sm:$0xff]
          %v2586 = vld [vmem:[#allocation3 + $0x50] sm:$0xff]
          %v2587 = vld [vmem:[#allocation3 + $0x58] sm:$0xff]
          %v2588 = vld [vmem:[#allocation3 + $0x60] sm:$0xff]
          %v2589 = vld [vmem:[#allocation3 + $0x68] sm:$0xff]
          %v2590 = vld [vmem:[#allocation3 + $0x70] sm:$0xff]
          %v2591 = vld [vmem:[#allocation3 + $0x78] sm:$0xff]
          %v2592 = vld [vmem:[#allocation3 + $0x80] sm:$0xff]
          %v2593 = vld [vmem:[#allocation3 + $0x88] sm:$0xff]
          %v2594 = vld [vmem:[#allocation3 + $0x90] sm:$0xff]
          %v2595 = vld [vmem:[#allocation3 + $0x98] sm:$0xff]
          %v2596 = vld [vmem:[#allocation3 + $0xa0] sm:$0xff]
          %v2597 = vld [vmem:[#allocation3 + $0xa8] sm:$0xff]
          %v2598 = vld [vmem:[#allocation3 + $0xb0] sm:$0xff]
          %v2599 = vld [vmem:[#allocation3 + $0xb8] sm:$0xff]
          %v2600 = vld [vmem:[#allocation3 + $0xc0] sm:$0xff]
          %v2601 = vld [vmem:[#allocation3 + $0xc8] sm:$0xff]
          %v2602 = vld [vmem:[#allocation3 + $0xd0] sm:$0xff]
          %v2603 = vld [vmem:[#allocation3 + $0xd8] sm:$0xff]
          %v2604 = vld [vmem:[#allocation3 + $0xe0] sm:$0xff]
          %v2605 = vld [vmem:[#allocation3 + $0xe8] sm:$0xff]
          %v2606 = vld [vmem:[#allocation3 + $0xf0] sm:$0xff]
          %v2607 = vld [vmem:[#allocation3 + $0xf8] sm:$0xff]
          %v2608 = vrcp.pop %v2576
          %v2609 = vrcp.pop %v2577
          %v2610 = vrcp.pop %v2578
          %v2611 = vrcp.pop %v2579
          %v2612 = vrcp.pop %v2580
          %v2613 = vrcp.pop %v2581
          %v2614 = vrcp.pop %v2582
          %v2615 = vrcp.pop %v2583
          %v2616 = vrcp.pop %v2584
          %v2617 = vrcp.pop %v2585
          %v2618 = vrcp.pop %v2586
          %v2619 = vrcp.pop %v2587
          %v2620 = vrcp.pop %v2588
          %v2621 = vrcp.pop %v2589
          %v2622 = vrcp.pop %v2590
          %v2623 = vrcp.pop %v2591
          %v2624 = vrcp.pop %v2592
          %v2625 = vrcp.pop %v2593
          %v2626 = vrcp.pop %v2594
          %v2627 = vrcp.pop %v2595
          %v2628 = vrcp.pop %v2596
          %v2629 = vrcp.pop %v2597
          %v2630 = vrcp.pop %v2598
          %v2631 = vrcp.pop %v2599
          %v2632 = vrcp.pop %v2600
          %v2633 = vrcp.pop %v2601
          %v2634 = vrcp.pop %v2602
          %v2635 = vrcp.pop %v2603
          %v2636 = vrcp.pop %v2604
          %v2637 = vrcp.pop %v2605
          %v2638 = vrcp.pop %v2606
          %v2639 = vrcp.pop %v2607
          %v2640 = vld [vmem:[#allocation4] sm:$0xff]
          %v2641 = vld [vmem:[#allocation4 + $0x8] sm:$0xff]
          %v2642 = vld [vmem:[#allocation4 + $0x10] sm:$0xff]
          %v2643 = vld [vmem:[#allocation4 + $0x18] sm:$0xff]
          %v2644 = vld [vmem:[#allocation4 + $0x20] sm:$0xff]
          %v2645 = vld [vmem:[#allocation4 + $0x28] sm:$0xff]
          %v2646 = vld [vmem:[#allocation4 + $0x30] sm:$0xff]
          %v2647 = vld [vmem:[#allocation4 + $0x38] sm:$0xff]
          %v2648 = vld [vmem:[#allocation4 + $0x40] sm:$0xff]
          %v2649 = vld [vmem:[#allocation4 + $0x48] sm:$0xff]
          %v2650 = vld [vmem:[#allocation4 + $0x50] sm:$0xff]
          %v2651 = vld [vmem:[#allocation4 + $0x58] sm:$0xff]
          %v2652 = vld [vmem:[#allocation4 + $0x60] sm:$0xff]
          %v2653 = vld [vmem:[#allocation4 + $0x68] sm:$0xff]
          %v2654 = vld [vmem:[#allocation4 + $0x70] sm:$0xff]
          %v2655 = vld [vmem:[#allocation4 + $0x78] sm:$0xff]
          %v2656 = vld [vmem:[#allocation4 + $0x80] sm:$0xff]
          %v2657 = vld [vmem:[#allocation4 + $0x88] sm:$0xff]
          %v2658 = vld [vmem:[#allocation4 + $0x90] sm:$0xff]
          %v2659 = vld [vmem:[#allocation4 + $0x98] sm:$0xff]
          %v2660 = vld [vmem:[#allocation4 + $0xa0] sm:$0xff]
          %v2661 = vld [vmem:[#allocation4 + $0xa8] sm:$0xff]
          %v2662 = vld [vmem:[#allocation4 + $0xb0] sm:$0xff]
          %v2663 = vld [vmem:[#allocation4 + $0xb8] sm:$0xff]
          %v2664 = vld [vmem:[#allocation4 + $0xc0] sm:$0xff]
          %v2665 = vld [vmem:[#allocation4 + $0xc8] sm:$0xff]
          %v2666 = vld [vmem:[#allocation4 + $0xd0] sm:$0xff]
          %v2667 = vld [vmem:[#allocation4 + $0xd8] sm:$0xff]
          %v2668 = vld [vmem:[#allocation4 + $0xe0] sm:$0xff]
          %v2669 = vld [vmem:[#allocation4 + $0xe8] sm:$0xff]
          %v2670 = vld [vmem:[#allocation4 + $0xf0] sm:$0xff]
          %v2671 = vld [vmem:[#allocation4 + $0xf8] sm:$0xff]
          %2673 = vset.pattern.permute.xlu0 0
          %2674 = vperm.xlu0 %2673, %v2608
          %v2675 = vpop.permute.xlu0 %2674
          %2678 = vset.pattern.permute.xlu0 0
          %2679 = vperm.xlu0 %2678, %v2609
          %v2680 = vpop.permute.xlu0 %2679
          %2683 = vset.pattern.permute.xlu0 0
          %2684 = vperm.xlu0 %2683, %v2610
          %v2685 = vpop.permute.xlu0 %2684
          %2688 = vset.pattern.permute.xlu0 0
          %2689 = vperm.xlu0 %2688, %v2611
          %v2690 = vpop.permute.xlu0 %2689
          %2693 = vset.pattern.permute.xlu0 0
          %2694 = vperm.xlu0 %2693, %v2612
          %v2695 = vpop.permute.xlu0 %2694
          %2698 = vset.pattern.permute.xlu0 0
          %2699 = vperm.xlu0 %2698, %v2613
          %v2700 = vpop.permute.xlu0 %2699
          %2703 = vset.pattern.permute.xlu0 0
          %2704 = vperm.xlu0 %2703, %v2614
          %v2705 = vpop.permute.xlu0 %2704
          %2708 = vset.pattern.permute.xlu0 0
          %2709 = vperm.xlu0 %2708, %v2615
          %v2710 = vpop.permute.xlu0 %2709
          %2713 = vset.pattern.permute.xlu0 0
          %2714 = vperm.xlu0 %2713, %v2616
          %v2715 = vpop.permute.xlu0 %2714
          %2718 = vset.pattern.permute.xlu0 0
          %2719 = vperm.xlu0 %2718, %v2617
          %v2720 = vpop.permute.xlu0 %2719
          %2723 = vset.pattern.permute.xlu0 0
          %2724 = vperm.xlu0 %2723, %v2618
          %v2725 = vpop.permute.xlu0 %2724
          %2728 = vset.pattern.permute.xlu0 0
          %2729 = vperm.xlu0 %2728, %v2619
          %v2730 = vpop.permute.xlu0 %2729
          %2733 = vset.pattern.permute.xlu0 0
          %2734 = vperm.xlu0 %2733, %v2620
          %v2735 = vpop.permute.xlu0 %2734
          %2738 = vset.pattern.permute.xlu0 0
          %2739 = vperm.xlu0 %2738, %v2621
          %v2740 = vpop.permute.xlu0 %2739
          %2743 = vset.pattern.permute.xlu0 0
          %2744 = vperm.xlu0 %2743, %v2622
          %v2745 = vpop.permute.xlu0 %2744
          %2748 = vset.pattern.permute.xlu0 0
          %2749 = vperm.xlu0 %2748, %v2623
          %v2750 = vpop.permute.xlu0 %2749
          %2753 = vset.pattern.permute.xlu0 0
          %2754 = vperm.xlu0 %2753, %v2624
          %v2755 = vpop.permute.xlu0 %2754
          %2758 = vset.pattern.permute.xlu0 0
          %2759 = vperm.xlu0 %2758, %v2625
          %v2760 = vpop.permute.xlu0 %2759
          %2763 = vset.pattern.permute.xlu0 0
          %2764 = vperm.xlu0 %2763, %v2626
          %v2765 = vpop.permute.xlu0 %2764
          %2768 = vset.pattern.permute.xlu0 0
          %2769 = vperm.xlu0 %2768, %v2627
          %v2770 = vpop.permute.xlu0 %2769
          %2773 = vset.pattern.permute.xlu0 0
          %2774 = vperm.xlu0 %2773, %v2628
          %v2775 = vpop.permute.xlu0 %2774
          %2778 = vset.pattern.permute.xlu0 0
          %2779 = vperm.xlu0 %2778, %v2629
          %v2780 = vpop.permute.xlu0 %2779
          %2783 = vset.pattern.permute.xlu0 0
          %2784 = vperm.xlu0 %2783, %v2630
          %v2785 = vpop.permute.xlu0 %2784
          %2788 = vset.pattern.permute.xlu0 0
          %2789 = vperm.xlu0 %2788, %v2631
          %v2790 = vpop.permute.xlu0 %2789
          %2793 = vset.pattern.permute.xlu0 0
          %2794 = vperm.xlu0 %2793, %v2632
          %v2795 = vpop.permute.xlu0 %2794
          %2798 = vset.pattern.permute.xlu0 0
          %2799 = vperm.xlu0 %2798, %v2633
          %v2800 = vpop.permute.xlu0 %2799
          %2803 = vset.pattern.permute.xlu0 0
          %2804 = vperm.xlu0 %2803, %v2634
          %v2805 = vpop.permute.xlu0 %2804
          %2808 = vset.pattern.permute.xlu0 0
          %2809 = vperm.xlu0 %2808, %v2635
          %v2810 = vpop.permute.xlu0 %2809
          %2813 = vset.pattern.permute.xlu0 0
          %2814 = vperm.xlu0 %2813, %v2636
          %v2815 = vpop.permute.xlu0 %2814
          %2818 = vset.pattern.permute.xlu0 0
          %2819 = vperm.xlu0 %2818, %v2637
          %v2820 = vpop.permute.xlu0 %2819
          %2823 = vset.pattern.permute.xlu0 0
          %2824 = vperm.xlu0 %2823, %v2638
          %v2825 = vpop.permute.xlu0 %2824
          %2828 = vset.pattern.permute.xlu0 0
          %2829 = vperm.xlu0 %2828, %v2639
          %v2830 = vpop.permute.xlu0 %2829
          %v2832 = vmul.f32 %v2640, %v2675
          %v2833 = vmul.f32 %v2641, %v2680
          %v2834 = vmul.f32 %v2642, %v2685
          %v2835 = vmul.f32 %v2643, %v2690
          %v2836 = vmul.f32 %v2644, %v2695
          %v2837 = vmul.f32 %v2645, %v2700
          %v2838 = vmul.f32 %v2646, %v2705
          %v2839 = vmul.f32 %v2647, %v2710
          %v2840 = vmul.f32 %v2648, %v2715
          %v2841 = vmul.f32 %v2649, %v2720
          %v2842 = vmul.f32 %v2650, %v2725
          %v2843 = vmul.f32 %v2651, %v2730
          %v2844 = vmul.f32 %v2652, %v2735
          %v2845 = vmul.f32 %v2653, %v2740
          %v2846 = vmul.f32 %v2654, %v2745
          %v2847 = vmul.f32 %v2655, %v2750
          %v2848 = vmul.f32 %v2656, %v2755
          %v2849 = vmul.f32 %v2657, %v2760
          %v2850 = vmul.f32 %v2658, %v2765
          %v2851 = vmul.f32 %v2659, %v2770
          %v2852 = vmul.f32 %v2660, %v2775
          %v2853 = vmul.f32 %v2661, %v2780
          %v2854 = vmul.f32 %v2662, %v2785
          %v2855 = vmul.f32 %v2663, %v2790
          %v2856 = vmul.f32 %v2664, %v2795
          %v2857 = vmul.f32 %v2665, %v2800
          %v2858 = vmul.f32 %v2666, %v2805
          %v2859 = vmul.f32 %v2667, %v2810
          %v2860 = vmul.f32 %v2668, %v2815
          %v2861 = vmul.f32 %v2669, %v2820
          %v2862 = vmul.f32 %v2670, %v2825
          %v2863 = vmul.f32 %v2671, %v2830
          %v2864 = vpack.c.bf16 %v2833, %v2832
          %v2865 = vpack.c.bf16 %v2835, %v2834
          %v2866 = vpack.c.bf16 %v2837, %v2836
          %v2867 = vpack.c.bf16 %v2839, %v2838
          %v2868 = vpack.c.bf16 %v2841, %v2840
          %v2869 = vpack.c.bf16 %v2843, %v2842
          %v2870 = vpack.c.bf16 %v2845, %v2844
          %v2871 = vpack.c.bf16 %v2847, %v2846
          %v2872 = vpack.c.bf16 %v2849, %v2848
          %v2873 = vpack.c.bf16 %v2851, %v2850
          %v2874 = vpack.c.bf16 %v2853, %v2852
          %v2875 = vpack.c.bf16 %v2855, %v2854
          %v2876 = vpack.c.bf16 %v2857, %v2856
          %v2877 = vpack.c.bf16 %v2859, %v2858
          %v2878 = vpack.c.bf16 %v2861, %v2860
          %v2879 = vpack.c.bf16 %v2863, %v2862
          %v2880 = vld [vmem:[#allocation13] sm:$0xf]
          %v2881 = vld [vmem:[#allocation13 + $0x4] sm:$0xf]
          %v2882 = vld [vmem:[#allocation13 + $0x8] sm:$0xf]
          %v2883 = vld [vmem:[#allocation13 + $0xc] sm:$0xf]
          %v2884 = vld [vmem:[#allocation13 + $0x10] sm:$0xf]
          %v2885 = vld [vmem:[#allocation13 + $0x14] sm:$0xf]
          %v2886 = vld [vmem:[#allocation13 + $0x18] sm:$0xf]
          %v2887 = vld [vmem:[#allocation13 + $0x1c] sm:$0xf]
          %v2888 = vld [vmem:[#allocation13 + $0x20] sm:$0xf]
          %v2889 = vld [vmem:[#allocation13 + $0x24] sm:$0xf]
          %v2890 = vld [vmem:[#allocation13 + $0x28] sm:$0xf]
          %v2891 = vld [vmem:[#allocation13 + $0x2c] sm:$0xf]
          %v2892 = vld [vmem:[#allocation13 + $0x30] sm:$0xf]
          %v2893 = vld [vmem:[#allocation13 + $0x34] sm:$0xf]
          %v2894 = vld [vmem:[#allocation13 + $0x38] sm:$0xf]
          %v2895 = vld [vmem:[#allocation13 + $0x3c] sm:$0xf]
          %v2896 = vld [vmem:[%s5] sm:$0x1]
          %v2898 = vperm.slane %v2896, 0
          %v2916 = vunpack.c.l.b16 %v2880
          %v2917 = vunpack.c.l.b16 %v2881
          %v2918 = vunpack.c.l.b16 %v2882
          %v2919 = vunpack.c.l.b16 %v2883
          %v2920 = vunpack.c.l.b16 %v2884
          %v2921 = vunpack.c.l.b16 %v2885
          %v2922 = vunpack.c.l.b16 %v2886
          %v2923 = vunpack.c.l.b16 %v2887
          %v2924 = vunpack.c.l.b16 %v2888
          %v2925 = vunpack.c.l.b16 %v2889
          %v2926 = vunpack.c.l.b16 %v2890
          %v2927 = vunpack.c.l.b16 %v2891
          %v2928 = vunpack.c.l.b16 %v2892
          %v2929 = vunpack.c.l.b16 %v2893
          %v2930 = vunpack.c.l.b16 %v2894
          %v2931 = vunpack.c.l.b16 %v2895
          %v2932 = vpack.c.b16 %v2917, %v2916
          %v2933 = vpack.c.b16 %v2919, %v2918
          %v2934 = vpack.c.b16 %v2921, %v2920
          %v2935 = vpack.c.b16 %v2923, %v2922
          %v2936 = vpack.c.b16 %v2925, %v2924
          %v2937 = vpack.c.b16 %v2927, %v2926
          %v2938 = vpack.c.b16 %v2929, %v2928
          %v2939 = vpack.c.b16 %v2931, %v2930
          %2948 = vmatpush.bf16.msra.mxu0 %v2939
          %2949 = vmatpush.bf16.msra.mxu0 %v2938
          %2950 = vmatpush.bf16.msra.mxu0 %v2937
          %2951 = vmatpush.bf16.msra.mxu0 %v2936
          %2952 = vmatpush.bf16.msra.mxu0 %v2935
          %2953 = vmatpush.bf16.msra.mxu0 %v2934
          %2954 = vmatpush.bf16.msra.mxu0 %v2933
          %2955 = vmatpush.bf16.msra.mxu0 %v2932
          %2956 = vmatmul.bf16.gmra.mxu0 %v2864
          %v2957 = vpop.f32.mrf.mxu0
          %v2958 = vadd.f32 %v2898, %v2957
          %v2959 = vpop.f32.mrf.mxu0
          %v2960 = vadd.f32 %v2898, %v2959
          %2961 = vmatmul.bf16.gmra.mxu0 %v2865
          %v2962 = vpop.f32.mrf.mxu0
          %v2963 = vadd.f32 %v2898, %v2962
          %v2964 = vpop.f32.mrf.mxu0
          %v2965 = vadd.f32 %v2898, %v2964
          %2966 = vmatmul.bf16.gmra.mxu0 %v2866
          %v2967 = vpop.f32.mrf.mxu0
          %v2968 = vadd.f32 %v2898, %v2967
          %v2969 = vpop.f32.mrf.mxu0
          %v2970 = vadd.f32 %v2898, %v2969
          %2971 = vmatmul.bf16.gmra.mxu0 %v2867
          %v2972 = vpop.f32.mrf.mxu0
          %v2973 = vadd.f32 %v2898, %v2972
          %v2974 = vpop.f32.mrf.mxu0
          %v2975 = vadd.f32 %v2898, %v2974
          %2976 = vmatmul.bf16.gmra.mxu0 %v2868
          %v2977 = vpop.f32.mrf.mxu0
          %v2978 = vadd.f32 %v2898, %v2977
          %v2979 = vpop.f32.mrf.mxu0
          %v2980 = vadd.f32 %v2898, %v2979
          %2981 = vmatmul.bf16.gmra.mxu0 %v2869
          %v2982 = vpop.f32.mrf.mxu0
          %v2983 = vadd.f32 %v2898, %v2982
          %v2984 = vpop.f32.mrf.mxu0
          %v2985 = vadd.f32 %v2898, %v2984
          %2986 = vmatmul.bf16.gmra.mxu0 %v2870
          %v2987 = vpop.f32.mrf.mxu0
          %v2988 = vadd.f32 %v2898, %v2987
          %v2989 = vpop.f32.mrf.mxu0
          %v2990 = vadd.f32 %v2898, %v2989
          %2991 = vmatmul.bf16.gmra.mxu0 %v2871
          %v2992 = vpop.f32.mrf.mxu0
          %v2993 = vadd.f32 %v2898, %v2992
          %v2994 = vpop.f32.mrf.mxu0
          %v2995 = vadd.f32 %v2898, %v2994
          %2996 = vmatmul.bf16.gmra.mxu0 %v2872
          %v2997 = vpop.f32.mrf.mxu0
          %v2998 = vadd.f32 %v2898, %v2997
          %v2999 = vpop.f32.mrf.mxu0
          %v3000 = vadd.f32 %v2898, %v2999
          %3001 = vmatmul.bf16.gmra.mxu0 %v2873
          %v3002 = vpop.f32.mrf.mxu0
          %v3003 = vadd.f32 %v2898, %v3002
          %v3004 = vpop.f32.mrf.mxu0
          %v3005 = vadd.f32 %v2898, %v3004
          %3006 = vmatmul.bf16.gmra.mxu0 %v2874
          %v3007 = vpop.f32.mrf.mxu0
          %v3008 = vadd.f32 %v2898, %v3007
          %v3009 = vpop.f32.mrf.mxu0
          %v3010 = vadd.f32 %v2898, %v3009
          %3011 = vmatmul.bf16.gmra.mxu0 %v2875
          %v3012 = vpop.f32.mrf.mxu0
          %v3013 = vadd.f32 %v2898, %v3012
          %v3014 = vpop.f32.mrf.mxu0
          %v3015 = vadd.f32 %v2898, %v3014
          %3016 = vmatmul.bf16.gmra.mxu0 %v2876
          %v3017 = vpop.f32.mrf.mxu0
          %v3018 = vadd.f32 %v2898, %v3017
          %v3019 = vpop.f32.mrf.mxu0
          %v3020 = vadd.f32 %v2898, %v3019
          %3021 = vmatmul.bf16.gmra.mxu0 %v2877
          %v3022 = vpop.f32.mrf.mxu0
          %v3023 = vadd.f32 %v2898, %v3022
          %v3024 = vpop.f32.mrf.mxu0
          %v3025 = vadd.f32 %v2898, %v3024
          %3026 = vmatmul.bf16.gmra.mxu0 %v2878
          %v3027 = vpop.f32.mrf.mxu0
          %v3028 = vadd.f32 %v2898, %v3027
          %v3029 = vpop.f32.mrf.mxu0
          %v3030 = vadd.f32 %v2898, %v3029
          %3031 = vmatmul.bf16.gmra.mxu0 %v2879
          %v3032 = vpop.f32.mrf.mxu0
          %v3033 = vadd.f32 %v2898, %v3032
          %v3034 = vpop.f32.mrf.mxu0
          %v3035 = vadd.f32 %v2898, %v3034
          %3036 = vdwg.mxu0
          %v3037 = vld [vmem:[#allocation6] sm:$0x1]
          %v3039 = vperm.slane %v3037, 0
          %3040 = vset.pattern.permute.xlu0 0
          %3041 = vperm.xlu0 %3040, %v3039
          %v3042 = vpop.permute.xlu0 %3041
          %v3044 = vmul.f32 %v3042, %v2958
          %v3045 = vmul.f32 %v3042, %v2960
          %v3046 = vmul.f32 %v3042, %v2963
          %v3047 = vmul.f32 %v3042, %v2965
          %v3048 = vmul.f32 %v3042, %v2968
          %v3049 = vmul.f32 %v3042, %v2970
          %v3050 = vmul.f32 %v3042, %v2973
          %v3051 = vmul.f32 %v3042, %v2975
          %v3052 = vmul.f32 %v3042, %v2978
          %v3053 = vmul.f32 %v3042, %v2980
          %v3054 = vmul.f32 %v3042, %v2983
          %v3055 = vmul.f32 %v3042, %v2985
          %v3056 = vmul.f32 %v3042, %v2988
          %v3057 = vmul.f32 %v3042, %v2990
          %v3058 = vmul.f32 %v3042, %v2993
          %v3059 = vmul.f32 %v3042, %v2995
          %v3060 = vmul.f32 %v3042, %v2998
          %v3061 = vmul.f32 %v3042, %v3000
          %v3062 = vmul.f32 %v3042, %v3003
          %v3063 = vmul.f32 %v3042, %v3005
          %v3064 = vmul.f32 %v3042, %v3008
          %v3065 = vmul.f32 %v3042, %v3010
          %v3066 = vmul.f32 %v3042, %v3013
          %v3067 = vmul.f32 %v3042, %v3015
          %v3068 = vmul.f32 %v3042, %v3018
          %v3069 = vmul.f32 %v3042, %v3020
          %v3070 = vmul.f32 %v3042, %v3023
          %v3071 = vmul.f32 %v3042, %v3025
          %v3072 = vmul.f32 %v3042, %v3028
          %v3073 = vmul.f32 %v3042, %v3030
          %v3074 = vmul.f32 %v3042, %v3033
          %v3075 = vmul.f32 %v3042, %v3035
          %v3076 = vld [vmem:[%s348] sm:$0xff]
          %v3077 = vld [vmem:[%s348 + $0x8] sm:$0xff]
          %v3078 = vld [vmem:[%s348 + $0x10] sm:$0xff]
          %v3079 = vld [vmem:[%s348 + $0x18] sm:$0xff]
          %v3080 = vld [vmem:[%s348 + $0x20] sm:$0xff]
          %v3081 = vld [vmem:[%s348 + $0x28] sm:$0xff]
          %v3082 = vld [vmem:[%s348 + $0x30] sm:$0xff]
          %v3083 = vld [vmem:[%s348 + $0x38] sm:$0xff]
          %v3084 = vld [vmem:[%s348 + $0x40] sm:$0xff]
          %v3085 = vld [vmem:[%s348 + $0x48] sm:$0xff]
          %v3086 = vld [vmem:[%s348 + $0x50] sm:$0xff]
          %v3087 = vld [vmem:[%s348 + $0x58] sm:$0xff]
          %v3088 = vld [vmem:[%s348 + $0x60] sm:$0xff]
          %v3089 = vld [vmem:[%s348 + $0x68] sm:$0xff]
          %v3090 = vld [vmem:[%s348 + $0x70] sm:$0xff]
          %v3091 = vld [vmem:[%s348 + $0x78] sm:$0xff]
          %v3092 = vld [vmem:[%s348 + $0x80] sm:$0xff]
          %v3093 = vld [vmem:[%s348 + $0x88] sm:$0xff]
          %v3094 = vld [vmem:[%s348 + $0x90] sm:$0xff]
          %v3095 = vld [vmem:[%s348 + $0x98] sm:$0xff]
          %v3096 = vld [vmem:[%s348 + $0xa0] sm:$0xff]
          %v3097 = vld [vmem:[%s348 + $0xa8] sm:$0xff]
          %v3098 = vld [vmem:[%s348 + $0xb0] sm:$0xff]
          %v3099 = vld [vmem:[%s348 + $0xb8] sm:$0xff]
          %v3100 = vld [vmem:[%s348 + $0xc0] sm:$0xff]
          %v3101 = vld [vmem:[%s348 + $0xc8] sm:$0xff]
          %v3102 = vld [vmem:[%s348 + $0xd0] sm:$0xff]
          %v3103 = vld [vmem:[%s348 + $0xd8] sm:$0xff]
          %v3104 = vld [vmem:[%s348 + $0xe0] sm:$0xff]
          %v3105 = vld [vmem:[%s348 + $0xe8] sm:$0xff]
          %v3106 = vld [vmem:[%s348 + $0xf0] sm:$0xff]
          %v3107 = vld [vmem:[%s348 + $0xf8] sm:$0xff]
          %v3108 = vadd.f32 %v3044, %v3076
          %v3109 = vadd.f32 %v3045, %v3077
          %v3110 = vadd.f32 %v3046, %v3078
          %v3111 = vadd.f32 %v3047, %v3079
          %v3112 = vadd.f32 %v3048, %v3080
          %v3113 = vadd.f32 %v3049, %v3081
          %v3114 = vadd.f32 %v3050, %v3082
          %v3115 = vadd.f32 %v3051, %v3083
          %v3116 = vadd.f32 %v3052, %v3084
          %v3117 = vadd.f32 %v3053, %v3085
          %v3118 = vadd.f32 %v3054, %v3086
          %v3119 = vadd.f32 %v3055, %v3087
          %v3120 = vadd.f32 %v3056, %v3088
          %v3121 = vadd.f32 %v3057, %v3089
          %v3122 = vadd.f32 %v3058, %v3090
          %v3123 = vadd.f32 %v3059, %v3091
          %v3124 = vadd.f32 %v3060, %v3092
          %v3125 = vadd.f32 %v3061, %v3093
          %v3126 = vadd.f32 %v3062, %v3094
          %v3127 = vadd.f32 %v3063, %v3095
          %v3128 = vadd.f32 %v3064, %v3096
          %v3129 = vadd.f32 %v3065, %v3097
          %v3130 = vadd.f32 %v3066, %v3098
          %v3131 = vadd.f32 %v3067, %v3099
          %v3132 = vadd.f32 %v3068, %v3100
          %v3133 = vadd.f32 %v3069, %v3101
          %v3134 = vadd.f32 %v3070, %v3102
          %v3135 = vadd.f32 %v3071, %v3103
          %v3136 = vadd.f32 %v3072, %v3104
          %v3137 = vadd.f32 %v3073, %v3105
          %v3138 = vadd.f32 %v3074, %v3106
          %v3139 = vadd.f32 %v3075, %v3107
          %3140 = vst [vmem:[%s404] sm:$0xff] %v3108
          %3141 = vst [vmem:[%s404 + $0x8] sm:$0xff] %v3109
          %3142 = vst [vmem:[%s404 + $0x10] sm:$0xff] %v3110
          %3143 = vst [vmem:[%s404 + $0x18] sm:$0xff] %v3111
          %3144 = vst [vmem:[%s404 + $0x20] sm:$0xff] %v3112
          %3145 = vst [vmem:[%s404 + $0x28] sm:$0xff] %v3113
          %3146 = vst [vmem:[%s404 + $0x30] sm:$0xff] %v3114
          %3147 = vst [vmem:[%s404 + $0x38] sm:$0xff] %v3115
          %3148 = vst [vmem:[%s404 + $0x40] sm:$0xff] %v3116
          %3149 = vst [vmem:[%s404 + $0x48] sm:$0xff] %v3117
          %3150 = vst [vmem:[%s404 + $0x50] sm:$0xff] %v3118
          %3151 = vst [vmem:[%s404 + $0x58] sm:$0xff] %v3119
          %3152 = vst [vmem:[%s404 + $0x60] sm:$0xff] %v3120
          %3153 = vst [vmem:[%s404 + $0x68] sm:$0xff] %v3121
          %3154 = vst [vmem:[%s404 + $0x70] sm:$0xff] %v3122
          %3155 = vst [vmem:[%s404 + $0x78] sm:$0xff] %v3123
          %3156 = vst [vmem:[%s404 + $0x80] sm:$0xff] %v3124
          %3157 = vst [vmem:[%s404 + $0x88] sm:$0xff] %v3125
          %3158 = vst [vmem:[%s404 + $0x90] sm:$0xff] %v3126
          %3159 = vst [vmem:[%s404 + $0x98] sm:$0xff] %v3127
          %3160 = vst [vmem:[%s404 + $0xa0] sm:$0xff] %v3128
          %3161 = vst [vmem:[%s404 + $0xa8] sm:$0xff] %v3129
          %3162 = vst [vmem:[%s404 + $0xb0] sm:$0xff] %v3130
          %3163 = vst [vmem:[%s404 + $0xb8] sm:$0xff] %v3131
          %3164 = vst [vmem:[%s404 + $0xc0] sm:$0xff] %v3132
          %3165 = vst [vmem:[%s404 + $0xc8] sm:$0xff] %v3133
          %3166 = vst [vmem:[%s404 + $0xd0] sm:$0xff] %v3134
          %3167 = vst [vmem:[%s404 + $0xd8] sm:$0xff] %v3135
          %3168 = vst [vmem:[%s404 + $0xe0] sm:$0xff] %v3136
          %3169 = vst [vmem:[%s404 + $0xe8] sm:$0xff] %v3137
          %3170 = vst [vmem:[%s404 + $0xf0] sm:$0xff] %v3138
          %3171 = vst [vmem:[%s404 + $0xf8] sm:$0xff] %v3139
        $region72: #{tpu_custom_call.1} parent=47 // pred_fallthru
          _
        %s3172 = sand.u32 %s220, 1
        %s3173 = scalar_lea.sflag [#allocation9], %s3172
        %s3174 = sand.u32 %s220, 1
        %s3175 = smul.addr %s3174, 256
        %s3176 = scalar_lea.vmem [#allocation15], %s3175
        // Predicated region
        $region73: #{tpu_custom_call.1} parent=47 // pred_check
          %p3177 = pneg %p230
        $region74: #{tpu_custom_call.1} parent=47 // pred_check_branch
          %3179 = sbr.rel (%p3177) target = $region76
        $region75: #{tpu_custom_call.1} parent=47 // pred_region
          %s3180 = smul.u32 32, %s36
          %3182 = vsyncadd %s3173, 0
          %s3183 = smul.addr %s35, 64
          %s3184 = sadd.s32 %s3180, %s3183
          %s3185 = smul.addr %s3184, 8
          %s3186 = scalar_lea.hbm %s7, %s3185
          %s3187 = sshll.u32 %s3176, 4
          %s3188 = int_to_ptr.vmem [resolvable:$true] %s3187
          %s3189 = sshll.u32 %s3186, 4
          %s3190 = int_to_ptr.hbm [resolvable:$true] %s3189
          %3195 = dma.vmem_to_hbm [thread:$0]  %s3188, 4096, %s3190, %s3173, 128, 128, 8
        $region76: #{tpu_custom_call.1} parent=47 // pred_fallthru
          _
      $region48: #{tpu_custom_call.1} parent=5 // pred_fallthru
        _
      %p3196 = scmp.le.s32.totalorder 2, %s25
      // Predicated region
      $region77: #{tpu_custom_call.1} parent=5 // pred_check
        %p3197 = pneg %p3196
      $region78: #{tpu_custom_call.1} parent=5 // pred_check_branch
        %3199 = sbr.rel (%p3197) target = $region80
      $region79: #{tpu_custom_call.1} parent=5 // pred_region
        %s3200 = ssub.s32 %s25, 2
        // Predicated region
        $region81: #{tpu_custom_call.1} parent=79 // pred_check
          %p3201 = pneg %p236
        $region82: #{tpu_custom_call.1} parent=79 // pred_check_branch
          %3203 = sbr.rel (%p3201) target = $region84
        $region83: #{tpu_custom_call.1} parent=79 // pred_region
          %s3204 = sand.u32 %s221, 1
          %s3205 = scalar_lea.sflag [#allocation9], %s3204
          %s3206 = sand.u32 %s221, 1
          %s3207 = smul.addr %s3206, 256
          %s3208 = scalar_lea.vmem [#allocation15], %s3207
          %3210 = dma.done %s3205, 4096
        $region84: #{tpu_custom_call.1} parent=79 // pred_fallthru
          _
      $region80: #{tpu_custom_call.1} parent=5 // pred_fallthru
        _
    $region6: #{tpu_custom_call.1} parent=1 // loop_footer
      %s29 = sadd.s32 1, %s25
    $region7: #{tpu_custom_call.1} parent=1 // loop_footer_branch
      %24 = sbr.rel target = $region3
    $region8: #{tpu_custom_call.1} parent=1 // loop_exit
      _
    %3211 = vsyncpa [#allocation8], 1
    %s3212 = scalar_lea.sflag [#allocation8], 1
    %3213 = vsyncpa %s3212, 1
    %3214 = vsyncpa [#allocation11], 1
    %s3215 = scalar_lea.sflag [#allocation11], 1
    %3216 = vsyncpa %s3215, 1
    %3217 = vsyncpa [#allocation14], 1
    %3218 = vsyncpa [#allocation9], 1
    %s3219 = scalar_lea.sflag [#allocation9], 1
    %3220 = vsyncpa %s3219, 1

</llo_original>
